<compile_context>
chip_gen: v6e
topology: v6e:2x2x1
jax: 0.10.0
libtpu: 0.0.40
codegen_flags: <defaults>
</compile_context>

<pallas_src>
import jax
import jax.numpy as jnp
from jax.experimental import pallas as pl
from jax.experimental.pallas import tpu as pltpu

Z_DIM = 32        # args.z_dim in the reference script (fixed here)
IN_DIM = 784      # 28*28 flattened MNIST
HID = 500         # logical hidden width of fc1/fc3
HID_PAD = 512     # lane-aligned (multiple of 128) padded hidden width
MAX_TB = 512      # max batch rows per grid step
MIN_TB = 128      # for real workloads keep tiles MXU-friendly (>=128 rows)


def _round_up(n, m):
    return (n + m - 1) // m * m


def _choose_tb(B):
    """Batch tile: small batches get one small tile; large batches get
    >=128-row tiles and at least 2 grid steps (v7x has 2 TensorCores)."""
    if B <= MIN_TB:
        return _round_up(B, 8)
    tb = _round_up((B + 1) // 2, 8)          # aim for >= 2 grid steps
    return min(MAX_TB, max(MIN_TB, tb))


def _vae_kernel(x_ref, eps_ref,
                w1_ref, b1_ref,
                w2_ref, b2_ref,
                w3_ref, b3_ref,
                w4_ref, b4_ref,
                recon_ref, ml_ref):
    f32 = jnp.float32
    # cast f32 input -> bf16 in-kernel (free on the VPU, saves an XLA pre-pass)
    x = x_ref[...].astype(jnp.bfloat16)                         # (TB, 784)

    # ---- encode ----
    h1 = jnp.dot(x, w1_ref[...], preferred_element_type=f32) + b1_ref[...]
    h1 = jnp.maximum(h1, 0.0)                                   # relu, (TB, 512) f32

    # fc21 / fc22 fused into a single matmul of width 2*Z_DIM
    ml = jnp.dot(h1.astype(jnp.bfloat16), w2_ref[...],
                 preferred_element_type=f32) + b2_ref[...]      # (TB, 64) f32
    mu = ml[:, :Z_DIM]
    logvar = ml[:, Z_DIM:]

    # ---- reparameterize (reference uses torch.rand_like -> U[0,1) noise) ----
    std = jnp.exp(0.5 * logvar)
    z = mu + eps_ref[...] * std                                 # (TB, 32) f32

    # ---- decode ----
    h3 = jnp.dot(z.astype(jnp.bfloat16), w3_ref[...],
                 preferred_element_type=f32) + b3_ref[...]
    h3 = jnp.maximum(h3, 0.0)                                   # (TB, 512) f32
    logits = jnp.dot(h3.astype(jnp.bfloat16), w4_ref[...],
                     preferred_element_type=f32) + b4_ref[...]  # (TB, 784) f32

    # overflow-safe sigmoid with a single transcendental (tanh on the EUP)
    recon = 0.5 * jnp.tanh(0.5 * logits) + 0.5
    recon_ref[...] = recon.astype(recon_ref.dtype)              # bf16 store
    ml_ref[...] = ml                                            # fused mu|logvar


def vae_forward(x, packed_params, eps):
    """x: (B,1,28,28) or (B,784) f32; eps: (B, Z_DIM).
    Returns (recon bf16, mu f32, logvar f32)."""
    (w1, b1, w2, b2, w3, b3, w4, b4) = packed_params
    B = x.shape[0]
    x2d = x.reshape(B, IN_DIM)                                  # x.view(-1, 784), stays f32
    eps = eps.astype(jnp.float32)

    TB = _choose_tb(B)
    B_pad = _round_up(B, TB)
    if B_pad != B:
        x2d = jnp.pad(x2d, ((0, B_pad - B), (0, 0)))
        eps = jnp.pad(eps, ((0, B_pad - B), (0, 0)))
    grid = (B_pad // TB,)

    def batch_spec(feat):
        return pl.BlockSpec((TB, feat), lambda i: (i, 0))

    def resident_spec(arr):
        # full-array block with constant index -> stays VMEM-resident across grid
        return pl.BlockSpec(arr.shape, lambda i: (0, 0))

    in_specs = [batch_spec(IN_DIM), batch_spec(Z_DIM)] + [
        resident_spec(a) for a in (w1, b1, w2, b2, w3, b3, w4, b4)
    ]
    out_specs = (batch_spec(IN_DIM), batch_spec(2 * Z_DIM))
    out_shape = (
        jax.ShapeDtypeStruct((B_pad, IN_DIM), jnp.bfloat16),      # recon (bf16 writeback)
        jax.ShapeDtypeStruct((B_pad, 2 * Z_DIM), jnp.float32),    # mu | logvar fused
    )

    fn = pl.pallas_call(
        _vae_kernel,
        grid=grid,
        in_specs=in_specs,
        out_specs=out_specs,
        out_shape=out_shape,
        compiler_params=pltpu.CompilerParams(
            dimension_semantics=("parallel",),
            vmem_limit_bytes=48 * 1024 * 1024),   # TB=512 fits even v5e's scope
    )
    recon, ml = fn(x2d, eps, w1, b1, w2, b2, w3, b3, w4, b4)
    recon = recon[:B]
    mu = ml[:B, :Z_DIM]
    logvar = ml[:B, Z_DIM:]
    return recon, mu, logvar


def init_params(key):
    """nn.Linear-style init (uniform +-1/sqrt(fan_in)); weights pre-transposed (in, out)."""
    def linear(key, fan_in, fan_out):
        kw, kb = jax.random.split(key)
        bound = 1.0 / jnp.sqrt(jnp.float32(fan_in))
        w = jax.random.uniform(kw, (fan_in, fan_out), jnp.float32, -bound, bound)
        b = jax.random.uniform(kb, (1, fan_out), jnp.float32, -bound, bound)
        return w, b

    k1, k21, k22, k3, k4 = jax.random.split(key, 5)
    w1, b1 = linear(k1, IN_DIM, HID)      # fc1
    w21, b21 = linear(k21, HID, Z_DIM)    # fc21
    w22, b22 = linear(k22, HID, Z_DIM)    # fc22
    w3, b3 = linear(k3, Z_DIM, HID)       # fc3
    w4, b4 = linear(k4, HID, IN_DIM)      # fc4
    return (w1, b1, w21, b21, w22, b22, w3, b3, w4, b4)


def pack_params(params):
    """Zero-pad hidden 500->512 (exact), fuse fc21/fc22, cast weights to bf16."""
    (w1, b1, w21, b21, w22, b22, w3, b3, w4, b4) = params
    pad = HID_PAD - HID
    w1p = jnp.pad(w1, ((0, 0), (0, pad))).astype(jnp.bfloat16)          # (784, 512)
    b1p = jnp.pad(b1, ((0, 0), (0, pad)))                               # (1, 512) f32
    w2p = jnp.pad(jnp.concatenate([w21, w22], axis=1),
                  ((0, pad), (0, 0))).astype(jnp.bfloat16)              # (512, 64)
    b2p = jnp.concatenate([b21, b22], axis=1)                           # (1, 64) f32
    w3p = jnp.pad(w3, ((0, 0), (0, pad))).astype(jnp.bfloat16)          # (32, 512)
    b3p = jnp.pad(b3, ((0, 0), (0, pad)))                               # (1, 512) f32
    w4p = jnp.pad(w4, ((0, pad), (0, 0))).astype(jnp.bfloat16)          # (512, 784)
    b4p = b4                                                            # (1, 784) f32
    return (w1p, b1p, w2p, b2p, w3p, b3p, w4p, b4p)


def _vae_reference(x, packed_params, eps):
    """Pure-JAX reference with identical bf16 matmul casting."""
    (w1, b1, w2, b2, w3, b3, w4, b4) = packed_params
    f32 = jnp.float32
    xb = x.reshape(x.shape[0], IN_DIM).astype(jnp.bfloat16)
    h1 = jnp.maximum(jnp.dot(xb, w1, preferred_element_type=f32) + b1, 0.0)
    ml = jnp.dot(h1.astype(jnp.bfloat16), w2, preferred_element_type=f32) + b2
    mu, logvar = ml[:, :Z_DIM], ml[:, Z_DIM:]
    z = mu + eps.astype(f32) * jnp.exp(0.5 * logvar)
    h3 = jnp.maximum(
        jnp.dot(z.astype(jnp.bfloat16), w3, preferred_element_type=f32) + b3, 0.0)
    logits = jnp.dot(h3.astype(jnp.bfloat16), w4, preferred_element_type=f32) + b4
    return jax.nn.sigmoid(logits), mu, logvar


if __name__ == "__main__":
    key = jax.random.PRNGKey(0)
    kparam, kx, keps = jax.random.split(key, 3)

    B = 8
    x = jax.random.uniform(kx, (B, 1, 28, 28), jnp.float32)      # MNIST-like input
    # TODO(synk): torch.rand_like noise is generated outside the kernel (could
    # use pltpu.prng_* in-kernel, but explicit eps keeps RNG reproducible).
    eps = jax.random.uniform(keps, (B, Z_DIM), jnp.float32)      # U[0,1) noise

    params = init_params(kparam)
    packed = pack_params(params)

    recon, mu, logvar = vae_forward(x, packed, eps)
    jax.block_until_ready((recon, mu, logvar))

    assert recon.shape == (B, IN_DIM)
    assert mu.shape == (B, Z_DIM)
    assert logvar.shape == (B, Z_DIM)

    r_recon, r_mu, r_logvar = _vae_reference(x, packed, eps)
    recon_f32 = recon.astype(jnp.float32)
    assert bool(jnp.all(jnp.isfinite(recon_f32)))
    assert bool(jnp.allclose(recon_f32, r_recon, atol=1e-2, rtol=1e-2))
    assert bool(jnp.allclose(mu, r_mu, atol=1e-2, rtol=1e-2))
    assert bool(jnp.allclose(logvar, r_logvar, atol=1e-2, rtol=1e-2))

    print("KERNEL_OK")
</pallas_src>

<mosaic_0001>
module attributes {stable_mosaic.version = 11 : i64} {
  func.func @_vae_kernel(%arg0: i32, %arg1: memref<8x784xf32, #tpu.memory_space<vmem>>, %arg2: memref<8x32xf32, #tpu.memory_space<vmem>>, %arg3: memref<784x512xbf16, #tpu.memory_space<vmem>>, %arg4: memref<1x512xf32, #tpu.memory_space<vmem>>, %arg5: memref<512x64xbf16, #tpu.memory_space<vmem>>, %arg6: memref<1x64xf32, #tpu.memory_space<vmem>>, %arg7: memref<32x512xbf16, #tpu.memory_space<vmem>>, %arg8: memref<1x512xf32, #tpu.memory_space<vmem>>, %arg9: memref<512x784xbf16, #tpu.memory_space<vmem>>, %arg10: memref<1x784xf32, #tpu.memory_space<vmem>>, %arg11: memref<8x784xbf16, #tpu.memory_space<vmem>>, %arg12: memref<8x64xf32, #tpu.memory_space<vmem>>) attributes {dimension_semantics = [#tpu.dimension_semantics<parallel>], iteration_bounds = array<i64: 1>, scalar_prefetch = 0 : i64, scratch_operands = 0 : i64, tpu.core_type = #tpu.core_type<tc>, window_params = [{transform_indices = @transform_0, window_bounds = array<i64: 8, 784>}, {transform_indices = @transform_1, window_bounds = array<i64: 8, 32>}, {pipeline_mode = #tpu.pipeline_mode<synchronous>, transform_indices = @transform_2, window_bounds = array<i64: 784, 512>}, {pipeline_mode = #tpu.pipeline_mode<synchronous>, transform_indices = @transform_3, window_bounds = array<i64: 1, 512>}, {pipeline_mode = #tpu.pipeline_mode<synchronous>, transform_indices = @transform_4, window_bounds = array<i64: 512, 64>}, {pipeline_mode = #tpu.pipeline_mode<synchronous>, transform_indices = @transform_5, window_bounds = array<i64: 1, 64>}, {pipeline_mode = #tpu.pipeline_mode<synchronous>, transform_indices = @transform_6, window_bounds = array<i64: 32, 512>}, {pipeline_mode = #tpu.pipeline_mode<synchronous>, transform_indices = @transform_7, window_bounds = array<i64: 1, 512>}, {pipeline_mode = #tpu.pipeline_mode<synchronous>, transform_indices = @transform_8, window_bounds = array<i64: 512, 784>}, {pipeline_mode = #tpu.pipeline_mode<synchronous>, transform_indices = @transform_9, window_bounds = array<i64: 1, 784>}, {transform_indices = @transform_10, window_bounds = array<i64: 8, 784>}, {transform_indices = @transform_11, window_bounds = array<i64: 8, 64>}]} {
    %c0 = arith.constant 0 : index
    %c0_0 = arith.constant 0 : index
    %0 = vector.load %arg1[%c0, %c0_0] : memref<8x784xf32, #tpu.memory_space<vmem>>, vector<8x784xf32>
    %1 = arith.truncf %0 : vector<8x784xf32> to vector<8x784xbf16>
    %c0_1 = arith.constant 0 : index
    %c0_2 = arith.constant 0 : index
    %2 = vector.load %arg3[%c0_1, %c0_2] : memref<784x512xbf16, #tpu.memory_space<vmem>>, vector<784x512xbf16>
    %cst = arith.constant dense<0.000000e+00> : vector<8x512xf32>
    %3 = tpu.matmul %1, %2, %cst {dimension_numbers = #tpu.dot_dimension_numbers<[1], [0], [0], [1], [0, 0, 1, 1], [], []>} : vector<8x784xbf16>, vector<784x512xbf16>, vector<8x512xf32> -> vector<8x512xf32>
    %c0_3 = arith.constant 0 : index
    %c0_4 = arith.constant 0 : index
    %4 = vector.load %arg4[%c0_3, %c0_4] : memref<1x512xf32, #tpu.memory_space<vmem>>, vector<1x512xf32>
    %5 = vector.broadcast %4 : vector<1x512xf32> to vector<8x512xf32>
    %6 = arith.addf %3, %5 : vector<8x512xf32>
    %cst_5 = arith.constant 0.000000e+00 : f32
    %7 = vector.broadcast %cst_5 : f32 to vector<8x512xf32>
    %8 = arith.maximumf %6, %7 : vector<8x512xf32>
    %9 = arith.truncf %8 : vector<8x512xf32> to vector<8x512xbf16>
    %c0_6 = arith.constant 0 : index
    %c0_7 = arith.constant 0 : index
    %10 = vector.load %arg5[%c0_6, %c0_7] : memref<512x64xbf16, #tpu.memory_space<vmem>>, vector<512x64xbf16>
    %cst_8 = arith.constant dense<0.000000e+00> : vector<8x64xf32>
    %11 = tpu.matmul %9, %10, %cst_8 {dimension_numbers = #tpu.dot_dimension_numbers<[1], [0], [0], [1], [0, 0, 1, 1], [], []>} : vector<8x512xbf16>, vector<512x64xbf16>, vector<8x64xf32> -> vector<8x64xf32>
    %c0_9 = arith.constant 0 : index
    %c0_10 = arith.constant 0 : index
    %12 = vector.load %arg6[%c0_9, %c0_10] : memref<1x64xf32, #tpu.memory_space<vmem>>, vector<1x64xf32>
    %13 = vector.broadcast %12 : vector<1x64xf32> to vector<8x64xf32>
    %14 = arith.addf %11, %13 : vector<8x64xf32>
    %15 = vector.extract_strided_slice %14 {offsets = [0, 0], sizes = [8, 32], strides = [1, 1]} : vector<8x64xf32> to vector<8x32xf32>
    %16 = vector.extract_strided_slice %14 {offsets = [0, 32], sizes = [8, 32], strides = [1, 1]} : vector<8x64xf32> to vector<8x32xf32>
    %cst_11 = arith.constant 5.000000e-01 : f32
    %17 = vector.broadcast %cst_11 : f32 to vector<8x32xf32>
    %18 = arith.mulf %17, %16 : vector<8x32xf32>
    %19 = math.exp %18 : vector<8x32xf32>
    %c0_12 = arith.constant 0 : index
    %c0_13 = arith.constant 0 : index
    %20 = vector.load %arg2[%c0_12, %c0_13] : memref<8x32xf32, #tpu.memory_space<vmem>>, vector<8x32xf32>
    %21 = arith.mulf %20, %19 : vector<8x32xf32>
    %22 = arith.addf %15, %21 : vector<8x32xf32>
    %23 = arith.truncf %22 : vector<8x32xf32> to vector<8x32xbf16>
    %c0_14 = arith.constant 0 : index
    %c0_15 = arith.constant 0 : index
    %24 = vector.load %arg7[%c0_14, %c0_15] : memref<32x512xbf16, #tpu.memory_space<vmem>>, vector<32x512xbf16>
    %cst_16 = arith.constant dense<0.000000e+00> : vector<8x512xf32>
    %25 = tpu.matmul %23, %24, %cst_16 {dimension_numbers = #tpu.dot_dimension_numbers<[1], [0], [0], [1], [0, 0, 1, 1], [], []>} : vector<8x32xbf16>, vector<32x512xbf16>, vector<8x512xf32> -> vector<8x512xf32>
    %c0_17 = arith.constant 0 : index
    %c0_18 = arith.constant 0 : index
    %26 = vector.load %arg8[%c0_17, %c0_18] : memref<1x512xf32, #tpu.memory_space<vmem>>, vector<1x512xf32>
    %27 = vector.broadcast %26 : vector<1x512xf32> to vector<8x512xf32>
    %28 = arith.addf %25, %27 : vector<8x512xf32>
    %cst_19 = arith.constant 0.000000e+00 : f32
    %29 = vector.broadcast %cst_19 : f32 to vector<8x512xf32>
    %30 = arith.maximumf %28, %29 : vector<8x512xf32>
    %31 = arith.truncf %30 : vector<8x512xf32> to vector<8x512xbf16>
    %c0_20 = arith.constant 0 : index
    %c0_21 = arith.constant 0 : index
    %32 = vector.load %arg9[%c0_20, %c0_21] : memref<512x784xbf16, #tpu.memory_space<vmem>>, vector<512x784xbf16>
    %cst_22 = arith.constant dense<0.000000e+00> : vector<8x784xf32>
    %33 = tpu.matmul %31, %32, %cst_22 {dimension_numbers = #tpu.dot_dimension_numbers<[1], [0], [0], [1], [0, 0, 1, 1], [], []>} : vector<8x512xbf16>, vector<512x784xbf16>, vector<8x784xf32> -> vector<8x784xf32>
    %c0_23 = arith.constant 0 : index
    %c0_24 = arith.constant 0 : index
    %34 = vector.load %arg10[%c0_23, %c0_24] : memref<1x784xf32, #tpu.memory_space<vmem>>, vector<1x784xf32>
    %35 = vector.broadcast %34 : vector<1x784xf32> to vector<8x784xf32>
    %36 = arith.addf %33, %35 : vector<8x784xf32>
    %cst_25 = arith.constant 5.000000e-01 : f32
    %37 = vector.broadcast %cst_25 : f32 to vector<8x784xf32>
    %38 = arith.mulf %37, %36 : vector<8x784xf32>
    %39 = math.tanh %38 : vector<8x784xf32>
    %cst_26 = arith.constant 5.000000e-01 : f32
    %40 = vector.broadcast %cst_26 : f32 to vector<8x784xf32>
    %41 = arith.mulf %40, %39 : vector<8x784xf32>
    %cst_27 = arith.constant 5.000000e-01 : f32
    %42 = vector.broadcast %cst_27 : f32 to vector<8x784xf32>
    %43 = arith.addf %41, %42 : vector<8x784xf32>
    %44 = arith.truncf %43 : vector<8x784xf32> to vector<8x784xbf16>
    %c0_28 = arith.constant 0 : index
    %c0_29 = arith.constant 0 : index
    %45 = vector.load %arg11[%c0_28, %c0_29] : memref<8x784xbf16, #tpu.memory_space<vmem>>, vector<8x784xbf16>
    tpu.vector_store %arg11[%c0_28, %c0_29], %44 {strides = array<i32>} : memref<8x784xbf16, #tpu.memory_space<vmem>>, vector<8x784xbf16>,
    %c0_30 = arith.constant 0 : index
    %c0_31 = arith.constant 0 : index
    %46 = vector.load %arg12[%c0_30, %c0_31] : memref<8x64xf32, #tpu.memory_space<vmem>>, vector<8x64xf32>
    tpu.vector_store %arg12[%c0_30, %c0_31], %14 {strides = array<i32>} : memref<8x64xf32, #tpu.memory_space<vmem>>, vector<8x64xf32>,
    return
  }
  func.func @transform_0(%arg0: i32) -> (i32, i32) {
    %c0_i32 = arith.constant 0 : i32
    %c0_i32_0 = arith.constant 0 : i32
    return %arg0, %c0_i32 : i32, i32
  }
  func.func @transform_1(%arg0: i32) -> (i32, i32) {
    %c0_i32 = arith.constant 0 : i32
    %c0_i32_0 = arith.constant 0 : i32
    return %arg0, %c0_i32 : i32, i32
  }
  func.func @transform_2(%arg0: i32) -> (i32, i32) {
    %c0_i32 = arith.constant 0 : i32
    %c0_i32_0 = arith.constant 0 : i32
    %c0_i32_1 = arith.constant 0 : i32
    return %c0_i32, %c0_i32_0 : i32, i32
  }
  func.func @transform_3(%arg0: i32) -> (i32, i32) {
    %c0_i32 = arith.constant 0 : i32
    %c0_i32_0 = arith.constant 0 : i32
    %c0_i32_1 = arith.constant 0 : i32
    return %c0_i32, %c0_i32_0 : i32, i32
  }
  func.func @transform_4(%arg0: i32) -> (i32, i32) {
    %c0_i32 = arith.constant 0 : i32
    %c0_i32_0 = arith.constant 0 : i32
    %c0_i32_1 = arith.constant 0 : i32
    return %c0_i32, %c0_i32_0 : i32, i32
  }
  func.func @transform_5(%arg0: i32) -> (i32, i32) {
    %c0_i32 = arith.constant 0 : i32
    %c0_i32_0 = arith.constant 0 : i32
    %c0_i32_1 = arith.constant 0 : i32
    return %c0_i32, %c0_i32_0 : i32, i32
  }
  func.func @transform_6(%arg0: i32) -> (i32, i32) {
    %c0_i32 = arith.constant 0 : i32
    %c0_i32_0 = arith.constant 0 : i32
    %c0_i32_1 = arith.constant 0 : i32
    return %c0_i32, %c0_i32_0 : i32, i32
  }
  func.func @transform_7(%arg0: i32) -> (i32, i32) {
    %c0_i32 = arith.constant 0 : i32
    %c0_i32_0 = arith.constant 0 : i32
    %c0_i32_1 = arith.constant 0 : i32
    return %c0_i32, %c0_i32_0 : i32, i32
  }
  func.func @transform_8(%arg0: i32) -> (i32, i32) {
    %c0_i32 = arith.constant 0 : i32
    %c0_i32_0 = arith.constant 0 : i32
    %c0_i32_1 = arith.constant 0 : i32
    return %c0_i32, %c0_i32_0 : i32, i32
  }
  func.func @transform_9(%arg0: i32) -> (i32, i32) {
    %c0_i32 = arith.constant 0 : i32
    %c0_i32_0 = arith.constant 0 : i32
    %c0_i32_1 = arith.constant 0 : i32
    return %c0_i32, %c0_i32_0 : i32, i32
  }
  func.func @transform_10(%arg0: i32) -> (i32, i32) {
    %c0_i32 = arith.constant 0 : i32
    %c0_i32_0 = arith.constant 0 : i32
    return %arg0, %c0_i32 : i32, i32
  }
  func.func @transform_11(%arg0: i32) -> (i32, i32) {
    %c0_i32 = arith.constant 0 : i32
    %c0_i32_0 = arith.constant 0 : i32
    return %arg0, %c0_i32 : i32, i32
  }
}

</mosaic_0001>

<llo_original>
// kernel: tpu_custom_call.1
$region0: #{tpu_custom_call.1}
  #allocation0 [shape = 'u32[]', space=smem, size = 0x4, offset = 0x4, fixed_abs, tag = 'smem constant byte address 0x4 - core index']
  #allocation1 [shape = 'u32[144,128]{1,0:T(1,128)}', space=vmem, size = 0x12000, scoped, tag = 'internal scratch']
  %s0 = inlined_call_operand.vmem [shape: f32[8,784], index: 0, kind: input, shape index: {}]
  %s1 = inlined_call_operand.vmem [shape: f32[8,32], index: 1, kind: input, shape index: {}]
  %s2 = inlined_call_operand.vmem [shape: bf16[784,512], index: 2, kind: input, shape index: {}]
  %s3 = inlined_call_operand.vmem [shape: f32[1,512], index: 3, kind: input, shape index: {}]
  %s4 = inlined_call_operand.vmem [shape: bf16[512,64], index: 4, kind: input, shape index: {}]
  %s5 = inlined_call_operand.vmem [shape: f32[1,64], index: 5, kind: input, shape index: {}]
  %s6 = inlined_call_operand.vmem [shape: bf16[32,512], index: 6, kind: input, shape index: {}]
  %s7 = inlined_call_operand.vmem [shape: f32[1,512], index: 7, kind: input, shape index: {}]
  %s8 = inlined_call_operand.vmem [shape: bf16[512,784], index: 8, kind: input, shape index: {}]
  %s9 = inlined_call_operand.vmem [shape: f32[1,784], index: 9, kind: input, shape index: {}]
  %s10 = inlined_call_operand.hbm [shape: bf16[8,784], index: 10, kind: output, shape index: {0}]
  %s11 = inlined_call_operand.hbm [shape: f32[8,64], index: 11, kind: output, shape index: {1}]
  %12 = xla_tuple %s10, %s11
  %s13 = sld [smem:[#allocation0]]
  $region58: #{tpu_custom_call.1} parent=0
    _
  %s15 = ssub.s32 1, %s13
  %s16 = scalar_select 0, %s15, %s13
  $region1: #{tpu_custom_call.1} parent=0
    #allocation2 [shape = 'u8[14336]{0}', space=vmem, size = 0x3800, scoped, tag = 'output window, operand 0, single buffered']
    #allocation3 [shape = 's32[1]{0}', space=sflag, size = 0x4, scoped, tag = 'scoped memory for tpu_custom_call.1']
    #allocation4 [shape = 'u8[4096]{0}', space=vmem, size = 0x1000, scoped, tag = 'output window, operand 1, single buffered']
    #allocation5 [shape = 's32[1]{0}', space=sflag, size = 0x4, scoped, tag = 'scoped memory for tpu_custom_call.1']
    %17 = vsyncpa [#allocation3], 0
    %18 = vsyncpa [#allocation5], 0
    // Predicated region
    $region2: #{tpu_custom_call.1} parent=1 // pred_check
      _
    $region3: #{tpu_custom_call.1} parent=1 // pred_check_branch
      %20 = sbr.rel (0) target = $region5
    $region4: #{tpu_custom_call.1} parent=1 // pred_region
      _
    $region5: #{tpu_custom_call.1} parent=1 // pred_fallthru
      _
    // Predicated region
    $region6: #{tpu_custom_call.1} parent=1 // pred_check
      _
    $region7: #{tpu_custom_call.1} parent=1 // pred_check_branch
      %22 = sbr.rel (0) target = $region9
    $region8: #{tpu_custom_call.1} parent=1 // pred_region
      _
    $region9: #{tpu_custom_call.1} parent=1 // pred_fallthru
      _
    // Predicated region
    $region10: #{tpu_custom_call.1} parent=1 // pred_check
      _
    $region11: #{tpu_custom_call.1} parent=1 // pred_check_branch
      %24 = sbr.rel (0) target = $region13
    $region12: #{tpu_custom_call.1} parent=1 // pred_region
      _
    $region13: #{tpu_custom_call.1} parent=1 // pred_fallthru
      _
    // Predicated region
    $region14: #{tpu_custom_call.1} parent=1 // pred_check
      _
    $region15: #{tpu_custom_call.1} parent=1 // pred_check_branch
      %26 = sbr.rel (0) target = $region17
    $region16: #{tpu_custom_call.1} parent=1 // pred_region
      _
    $region17: #{tpu_custom_call.1} parent=1 // pred_fallthru
      _
    // Predicated region
    $region18: #{tpu_custom_call.1} parent=1 // pred_check
      _
    $region19: #{tpu_custom_call.1} parent=1 // pred_check_branch
      %28 = sbr.rel (0) target = $region21
    $region20: #{tpu_custom_call.1} parent=1 // pred_region
      _
    $region21: #{tpu_custom_call.1} parent=1 // pred_fallthru
      _
    // Predicated region
    $region22: #{tpu_custom_call.1} parent=1 // pred_check
      _
    $region23: #{tpu_custom_call.1} parent=1 // pred_check_branch
      %30 = sbr.rel (0) target = $region25
    $region24: #{tpu_custom_call.1} parent=1 // pred_region
      _
    $region25: #{tpu_custom_call.1} parent=1 // pred_fallthru
      _
    // Predicated region
    $region26: #{tpu_custom_call.1} parent=1 // pred_check
      _
    $region27: #{tpu_custom_call.1} parent=1 // pred_check_branch
      %32 = sbr.rel (0) target = $region29
    $region28: #{tpu_custom_call.1} parent=1 // pred_region
      _
    $region29: #{tpu_custom_call.1} parent=1 // pred_fallthru
      _
    // Predicated region
    $region30: #{tpu_custom_call.1} parent=1 // pred_check
      _
    $region31: #{tpu_custom_call.1} parent=1 // pred_check_branch
      %34 = sbr.rel (0) target = $region33
    $region32: #{tpu_custom_call.1} parent=1 // pred_region
      _
    $region33: #{tpu_custom_call.1} parent=1 // pred_fallthru
      _
    // Predicated region
    $region34: #{tpu_custom_call.1} parent=1 // pred_check
      _
    $region35: #{tpu_custom_call.1} parent=1 // pred_check_branch
      %36 = sbr.rel (0) target = $region37
    $region36: #{tpu_custom_call.1} parent=1 // pred_region
      _
    $region37: #{tpu_custom_call.1} parent=1 // pred_fallthru
      _
    // Predicated region
    $region38: #{tpu_custom_call.1} parent=1 // pred_check
      _
    $region39: #{tpu_custom_call.1} parent=1 // pred_check_branch
      %38 = sbr.rel (0) target = $region41
    $region40: #{tpu_custom_call.1} parent=1 // pred_region
      _
    $region41: #{tpu_custom_call.1} parent=1 // pred_fallthru
      _
    %v40 = vld [vmem:[%s0] sm:$0xff]
    %v41 = vld [vmem:[%s0 + $0x8] sm:$0xff]
    %v42 = vld [vmem:[%s0 + $0x10] sm:$0xff]
    %v43 = vld [vmem:[%s0 + $0x18] sm:$0xff]
    %v44 = vld [vmem:[%s0 + $0x20] sm:$0xff]
    %v45 = vld [vmem:[%s0 + $0x28] sm:$0xff]
    %v46 = vld [vmem:[%s0 + $0x30] sm:$0xff]
    %v47 = vpack.c.bf16 %v40, %v40
    %v48 = vpack.c.bf16 %v41, %v41
    %v49 = vpack.c.bf16 %v42, %v42
    %v50 = vpack.c.bf16 %v43, %v43
    %v51 = vpack.c.bf16 %v44, %v44
    %v52 = vpack.c.bf16 %v45, %v45
    %v53 = vpack.c.bf16 %v46, %v46
    %v54 = vld [vmem:[%s2] sm:$0xff]
    %v55 = vld [vmem:[%s2 + $0x8] sm:$0xff]
    %v56 = vld [vmem:[%s2 + $0x10] sm:$0xff]
    %v57 = vld [vmem:[%s2 + $0x18] sm:$0xff]
    %v58 = vld [vmem:[%s2 + $0x20] sm:$0xff]
    %v59 = vld [vmem:[%s2 + $0x28] sm:$0xff]
    %v60 = vld [vmem:[%s2 + $0x30] sm:$0xff]
    %v61 = vld [vmem:[%s2 + $0x38] sm:$0xff]
    %v62 = vld [vmem:[%s2 + $0x40] sm:$0xff]
    %v63 = vld [vmem:[%s2 + $0x48] sm:$0xff]
    %v64 = vld [vmem:[%s2 + $0x50] sm:$0xff]
    %v65 = vld [vmem:[%s2 + $0x58] sm:$0xff]
    %v66 = vld [vmem:[%s2 + $0x60] sm:$0xff]
    %v67 = vld [vmem:[%s2 + $0x68] sm:$0xff]
    %v68 = vld [vmem:[%s2 + $0x70] sm:$0xff]
    %v69 = vld [vmem:[%s2 + $0x78] sm:$0xff]
    %v70 = vld [vmem:[%s2 + $0x80] sm:$0xff]
    %v71 = vld [vmem:[%s2 + $0x88] sm:$0xff]
    %v72 = vld [vmem:[%s2 + $0x90] sm:$0xff]
    %v73 = vld [vmem:[%s2 + $0x98] sm:$0xff]
    %v74 = vld [vmem:[%s2 + $0xa0] sm:$0xff]
    %v75 = vld [vmem:[%s2 + $0xa8] sm:$0xff]
    %v76 = vld [vmem:[%s2 + $0xb0] sm:$0xff]
    %v77 = vld [vmem:[%s2 + $0xb8] sm:$0xff]
    %v78 = vld [vmem:[%s2 + $0xc0] sm:$0xff]
    %v79 = vld [vmem:[%s2 + $0xc8] sm:$0xff]
    %v80 = vld [vmem:[%s2 + $0xd0] sm:$0xff]
    %v81 = vld [vmem:[%s2 + $0xd8] sm:$0xff]
    %v82 = vld [vmem:[%s2 + $0xe0] sm:$0xff]
    %v83 = vld [vmem:[%s2 + $0xe8] sm:$0xff]
    %v84 = vld [vmem:[%s2 + $0xf0] sm:$0xff]
    %v85 = vld [vmem:[%s2 + $0xf8] sm:$0xff]
    %v86 = vld [vmem:[%s2 + $0x100] sm:$0xff]
    %v87 = vld [vmem:[%s2 + $0x108] sm:$0xff]
    %v88 = vld [vmem:[%s2 + $0x110] sm:$0xff]
    %v89 = vld [vmem:[%s2 + $0x118] sm:$0xff]
    %v90 = vld [vmem:[%s2 + $0x120] sm:$0xff]
    %v91 = vld [vmem:[%s2 + $0x128] sm:$0xff]
    %v92 = vld [vmem:[%s2 + $0x130] sm:$0xff]
    %v93 = vld [vmem:[%s2 + $0x138] sm:$0xff]
    %v94 = vld [vmem:[%s2 + $0x140] sm:$0xff]
    %v95 = vld [vmem:[%s2 + $0x148] sm:$0xff]
    %v96 = vld [vmem:[%s2 + $0x150] sm:$0xff]
    %v97 = vld [vmem:[%s2 + $0x158] sm:$0xff]
    %v98 = vld [vmem:[%s2 + $0x160] sm:$0xff]
    %v99 = vld [vmem:[%s2 + $0x168] sm:$0xff]
    %v100 = vld [vmem:[%s2 + $0x170] sm:$0xff]
    %v101 = vld [vmem:[%s2 + $0x178] sm:$0xff]
    %v102 = vld [vmem:[%s2 + $0x180] sm:$0xff]
    %v103 = vld [vmem:[%s2 + $0x188] sm:$0xff]
    %v104 = vld [vmem:[%s2 + $0x190] sm:$0xff]
    %v105 = vld [vmem:[%s2 + $0x198] sm:$0xff]
    %v106 = vld [vmem:[%s2 + $0x1a0] sm:$0xff]
    %v107 = vld [vmem:[%s2 + $0x1a8] sm:$0xff]
    %v108 = vld [vmem:[%s2 + $0x1b0] sm:$0xff]
    %v109 = vld [vmem:[%s2 + $0x1b8] sm:$0xff]
    %v110 = vld [vmem:[%s2 + $0x1c0] sm:$0xff]
    %v111 = vld [vmem:[%s2 + $0x1c8] sm:$0xff]
    %v112 = vld [vmem:[%s2 + $0x1d0] sm:$0xff]
    %v113 = vld [vmem:[%s2 + $0x1d8] sm:$0xff]
    %v114 = vld [vmem:[%s2 + $0x1e0] sm:$0xff]
    %v115 = vld [vmem:[%s2 + $0x1e8] sm:$0xff]
    %v116 = vld [vmem:[%s2 + $0x1f0] sm:$0xff]
    %v117 = vld [vmem:[%s2 + $0x1f8] sm:$0xff]
    %v118 = vld [vmem:[%s2 + $0x200] sm:$0xff]
    %v119 = vld [vmem:[%s2 + $0x208] sm:$0xff]
    %v120 = vld [vmem:[%s2 + $0x210] sm:$0xff]
    %v121 = vld [vmem:[%s2 + $0x218] sm:$0xff]
    %v122 = vld [vmem:[%s2 + $0x220] sm:$0xff]
    %v123 = vld [vmem:[%s2 + $0x228] sm:$0xff]
    %v124 = vld [vmem:[%s2 + $0x230] sm:$0xff]
    %v125 = vld [vmem:[%s2 + $0x238] sm:$0xff]
    %v126 = vld [vmem:[%s2 + $0x240] sm:$0xff]
    %v127 = vld [vmem:[%s2 + $0x248] sm:$0xff]
    %v128 = vld [vmem:[%s2 + $0x250] sm:$0xff]
    %v129 = vld [vmem:[%s2 + $0x258] sm:$0xff]
    %v130 = vld [vmem:[%s2 + $0x260] sm:$0xff]
    %v131 = vld [vmem:[%s2 + $0x268] sm:$0xff]
    %v132 = vld [vmem:[%s2 + $0x270] sm:$0xff]
    %v133 = vld [vmem:[%s2 + $0x278] sm:$0xff]
    %v134 = vld [vmem:[%s2 + $0x280] sm:$0xff]
    %v135 = vld [vmem:[%s2 + $0x288] sm:$0xff]
    %v136 = vld [vmem:[%s2 + $0x290] sm:$0xff]
    %v137 = vld [vmem:[%s2 + $0x298] sm:$0xff]
    %v138 = vld [vmem:[%s2 + $0x2a0] sm:$0xff]
    %v139 = vld [vmem:[%s2 + $0x2a8] sm:$0xff]
    %v140 = vld [vmem:[%s2 + $0x2b0] sm:$0xff]
    %v141 = vld [vmem:[%s2 + $0x2b8] sm:$0xff]
    %v142 = vld [vmem:[%s2 + $0x2c0] sm:$0xff]
    %v143 = vld [vmem:[%s2 + $0x2c8] sm:$0xff]
    %v144 = vld [vmem:[%s2 + $0x2d0] sm:$0xff]
    %v145 = vld [vmem:[%s2 + $0x2d8] sm:$0xff]
    %v146 = vld [vmem:[%s2 + $0x2e0] sm:$0xff]
    %v147 = vld [vmem:[%s2 + $0x2e8] sm:$0xff]
    %v148 = vld [vmem:[%s2 + $0x2f0] sm:$0xff]
    %v149 = vld [vmem:[%s2 + $0x2f8] sm:$0xff]
    %v150 = vld [vmem:[%s2 + $0x300] sm:$0xff]
    %v151 = vld [vmem:[%s2 + $0x308] sm:$0xff]
    %v152 = vld [vmem:[%s2 + $0x310] sm:$0xff]
    %v153 = vld [vmem:[%s2 + $0x318] sm:$0xff]
    %v154 = vld [vmem:[%s2 + $0x320] sm:$0xff]
    %v155 = vld [vmem:[%s2 + $0x328] sm:$0xff]
    %v156 = vld [vmem:[%s2 + $0x330] sm:$0xff]
    %v157 = vld [vmem:[%s2 + $0x338] sm:$0xff]
    %v158 = vld [vmem:[%s2 + $0x340] sm:$0xff]
    %v159 = vld [vmem:[%s2 + $0x348] sm:$0xff]
    %v160 = vld [vmem:[%s2 + $0x350] sm:$0xff]
    %v161 = vld [vmem:[%s2 + $0x358] sm:$0xff]
    %v162 = vld [vmem:[%s2 + $0x360] sm:$0xff]
    %v163 = vld [vmem:[%s2 + $0x368] sm:$0xff]
    %v164 = vld [vmem:[%s2 + $0x370] sm:$0xff]
    %v165 = vld [vmem:[%s2 + $0x378] sm:$0xff]
    %v166 = vld [vmem:[%s2 + $0x380] sm:$0xff]
    %v167 = vld [vmem:[%s2 + $0x388] sm:$0xff]
    %v168 = vld [vmem:[%s2 + $0x390] sm:$0xff]
    %v169 = vld [vmem:[%s2 + $0x398] sm:$0xff]
    %v170 = vld [vmem:[%s2 + $0x3a0] sm:$0xff]
    %v171 = vld [vmem:[%s2 + $0x3a8] sm:$0xff]
    %v172 = vld [vmem:[%s2 + $0x3b0] sm:$0xff]
    %v173 = vld [vmem:[%s2 + $0x3b8] sm:$0xff]
    %v174 = vld [vmem:[%s2 + $0x3c0] sm:$0xff]
    %v175 = vld [vmem:[%s2 + $0x3c8] sm:$0xff]
    %v176 = vld [vmem:[%s2 + $0x3d0] sm:$0xff]
    %v177 = vld [vmem:[%s2 + $0x3d8] sm:$0xff]
    %v178 = vld [vmem:[%s2 + $0x3e0] sm:$0xff]
    %v179 = vld [vmem:[%s2 + $0x3e8] sm:$0xff]
    %v180 = vld [vmem:[%s2 + $0x3f0] sm:$0xff]
    %v181 = vld [vmem:[%s2 + $0x3f8] sm:$0xff]
    %v182 = vld [vmem:[%s2 + $0x400] sm:$0xff]
    %v183 = vld [vmem:[%s2 + $0x408] sm:$0xff]
    %v184 = vld [vmem:[%s2 + $0x410] sm:$0xff]
    %v185 = vld [vmem:[%s2 + $0x418] sm:$0xff]
    %v186 = vld [vmem:[%s2 + $0x420] sm:$0xff]
    %v187 = vld [vmem:[%s2 + $0x428] sm:$0xff]
    %v188 = vld [vmem:[%s2 + $0x430] sm:$0xff]
    %v189 = vld [vmem:[%s2 + $0x438] sm:$0xff]
    %v190 = vld [vmem:[%s2 + $0x440] sm:$0xff]
    %v191 = vld [vmem:[%s2 + $0x448] sm:$0xff]
    %v192 = vld [vmem:[%s2 + $0x450] sm:$0xff]
    %v193 = vld [vmem:[%s2 + $0x458] sm:$0xff]
    %v194 = vld [vmem:[%s2 + $0x460] sm:$0xff]
    %v195 = vld [vmem:[%s2 + $0x468] sm:$0xff]
    %v196 = vld [vmem:[%s2 + $0x470] sm:$0xff]
    %v197 = vld [vmem:[%s2 + $0x478] sm:$0xff]
    %v198 = vld [vmem:[%s2 + $0x480] sm:$0xff]
    %v199 = vld [vmem:[%s2 + $0x488] sm:$0xff]
    %v200 = vld [vmem:[%s2 + $0x490] sm:$0xff]
    %v201 = vld [vmem:[%s2 + $0x498] sm:$0xff]
    %v202 = vld [vmem:[%s2 + $0x4a0] sm:$0xff]
    %v203 = vld [vmem:[%s2 + $0x4a8] sm:$0xff]
    %v204 = vld [vmem:[%s2 + $0x4b0] sm:$0xff]
    %v205 = vld [vmem:[%s2 + $0x4b8] sm:$0xff]
    %v206 = vld [vmem:[%s2 + $0x4c0] sm:$0xff]
    %v207 = vld [vmem:[%s2 + $0x4c8] sm:$0xff]
    %v208 = vld [vmem:[%s2 + $0x4d0] sm:$0xff]
    %v209 = vld [vmem:[%s2 + $0x4d8] sm:$0xff]
    %v210 = vld [vmem:[%s2 + $0x4e0] sm:$0xff]
    %v211 = vld [vmem:[%s2 + $0x4e8] sm:$0xff]
    %v212 = vld [vmem:[%s2 + $0x4f0] sm:$0xff]
    %v213 = vld [vmem:[%s2 + $0x4f8] sm:$0xff]
    %v214 = vld [vmem:[%s2 + $0x500] sm:$0xff]
    %v215 = vld [vmem:[%s2 + $0x508] sm:$0xff]
    %v216 = vld [vmem:[%s2 + $0x510] sm:$0xff]
    %v217 = vld [vmem:[%s2 + $0x518] sm:$0xff]
    %v218 = vld [vmem:[%s2 + $0x520] sm:$0xff]
    %v219 = vld [vmem:[%s2 + $0x528] sm:$0xff]
    %v220 = vld [vmem:[%s2 + $0x530] sm:$0xff]
    %v221 = vld [vmem:[%s2 + $0x538] sm:$0xff]
    %v222 = vld [vmem:[%s2 + $0x540] sm:$0xff]
    %v223 = vld [vmem:[%s2 + $0x548] sm:$0xff]
    %v224 = vld [vmem:[%s2 + $0x550] sm:$0xff]
    %v225 = vld [vmem:[%s2 + $0x558] sm:$0xff]
    %v226 = vld [vmem:[%s2 + $0x560] sm:$0xff]
    %v227 = vld [vmem:[%s2 + $0x568] sm:$0xff]
    %v228 = vld [vmem:[%s2 + $0x570] sm:$0xff]
    %v229 = vld [vmem:[%s2 + $0x578] sm:$0xff]
    %v230 = vld [vmem:[%s2 + $0x580] sm:$0xff]
    %v231 = vld [vmem:[%s2 + $0x588] sm:$0xff]
    %v232 = vld [vmem:[%s2 + $0x590] sm:$0xff]
    %v233 = vld [vmem:[%s2 + $0x598] sm:$0xff]
    %v234 = vld [vmem:[%s2 + $0x5a0] sm:$0xff]
    %v235 = vld [vmem:[%s2 + $0x5a8] sm:$0xff]
    %v236 = vld [vmem:[%s2 + $0x5b0] sm:$0xff]
    %v237 = vld [vmem:[%s2 + $0x5b8] sm:$0xff]
    %v238 = vld [vmem:[%s2 + $0x5c0] sm:$0xff]
    %v239 = vld [vmem:[%s2 + $0x5c8] sm:$0xff]
    %v240 = vld [vmem:[%s2 + $0x5d0] sm:$0xff]
    %v241 = vld [vmem:[%s2 + $0x5d8] sm:$0xff]
    %v242 = vld [vmem:[%s2 + $0x5e0] sm:$0xff]
    %v243 = vld [vmem:[%s2 + $0x5e8] sm:$0xff]
    %v244 = vld [vmem:[%s2 + $0x5f0] sm:$0xff]
    %v245 = vld [vmem:[%s2 + $0x5f8] sm:$0xff]
    %v246 = vld [vmem:[%s2 + $0x600] sm:$0xff]
    %v247 = vld [vmem:[%s2 + $0x608] sm:$0xff]
    %v248 = vld [vmem:[%s2 + $0x610] sm:$0xff]
    %v249 = vld [vmem:[%s2 + $0x618] sm:$0xff]
    %v250 = vld [vmem:[%s3] sm:$0xf]
    %v252 = vlaneseq
    %v253 = vshrl.u32 %v252, 7
    %v254 = vsub.s32 0, %v253
    %v255 = vrot.slane %v250, %v254
    %v256 = vlaneseq
    %v257 = vshrl.u32 %v256, 7
    %v258 = vsub.s32 1, %v257
    %v259 = vrot.slane %v250, %v258
    %v260 = vlaneseq
    %v261 = vshrl.u32 %v260, 7
    %v262 = vsub.s32 2, %v261
    %v263 = vrot.slane %v250, %v262
    %v264 = vlaneseq
    %v265 = vshrl.u32 %v264, 7
    %v266 = vsub.s32 3, %v265
    %v267 = vrot.slane %v250, %v266
    %v468 = vunpack.c.l.b16 %v54
    %v469 = vunpack.c.h.b16 %v54
    %v470 = vunpack.c.l.b16 %v55
    %v471 = vunpack.c.h.b16 %v55
    %v472 = vunpack.c.l.b16 %v56
    %v473 = vunpack.c.h.b16 %v56
    %v474 = vunpack.c.l.b16 %v57
    %v475 = vunpack.c.h.b16 %v57
    %v476 = vunpack.c.l.b16 %v58
    %v477 = vunpack.c.h.b16 %v58
    %v478 = vunpack.c.l.b16 %v59
    %v479 = vunpack.c.h.b16 %v59
    %v480 = vunpack.c.l.b16 %v60
    %v481 = vunpack.c.h.b16 %v60
    %v482 = vunpack.c.l.b16 %v61
    %v483 = vunpack.c.h.b16 %v61
    %v484 = vunpack.c.l.b16 %v62
    %v485 = vunpack.c.h.b16 %v62
    %v486 = vunpack.c.l.b16 %v63
    %v487 = vunpack.c.h.b16 %v63
    %v488 = vunpack.c.l.b16 %v64
    %v489 = vunpack.c.h.b16 %v64
    %v490 = vunpack.c.l.b16 %v65
    %v491 = vunpack.c.h.b16 %v65
    %v492 = vunpack.c.l.b16 %v66
    %v493 = vunpack.c.h.b16 %v66
    %v494 = vunpack.c.l.b16 %v67
    %v495 = vunpack.c.h.b16 %v67
    %v496 = vunpack.c.l.b16 %v68
    %v497 = vunpack.c.h.b16 %v68
    %v498 = vunpack.c.l.b16 %v69
    %v499 = vunpack.c.h.b16 %v69
    %v500 = vunpack.c.l.b16 %v70
    %v501 = vunpack.c.h.b16 %v70
    %v502 = vunpack.c.l.b16 %v71
    %v503 = vunpack.c.h.b16 %v71
    %v504 = vunpack.c.l.b16 %v72
    %v505 = vunpack.c.h.b16 %v72
    %v506 = vunpack.c.l.b16 %v73
    %v507 = vunpack.c.h.b16 %v73
    %v508 = vunpack.c.l.b16 %v74
    %v509 = vunpack.c.h.b16 %v74
    %v510 = vunpack.c.l.b16 %v75
    %v511 = vunpack.c.h.b16 %v75
    %v512 = vunpack.c.l.b16 %v76
    %v513 = vunpack.c.h.b16 %v76
    %v514 = vunpack.c.l.b16 %v77
    %v515 = vunpack.c.h.b16 %v77
    %v516 = vunpack.c.l.b16 %v78
    %v517 = vunpack.c.h.b16 %v78
    %v518 = vunpack.c.l.b16 %v79
    %v519 = vunpack.c.h.b16 %v79
    %v520 = vunpack.c.l.b16 %v80
    %v521 = vunpack.c.h.b16 %v80
    %v522 = vunpack.c.l.b16 %v81
    %v523 = vunpack.c.h.b16 %v81
    %v524 = vunpack.c.l.b16 %v82
    %v525 = vunpack.c.h.b16 %v82
    %v526 = vunpack.c.l.b16 %v83
    %v527 = vunpack.c.h.b16 %v83
    %v528 = vunpack.c.l.b16 %v84
    %v529 = vunpack.c.h.b16 %v84
    %v530 = vunpack.c.l.b16 %v85
    %v531 = vunpack.c.h.b16 %v85
    %v532 = vunpack.c.l.b16 %v86
    %v533 = vunpack.c.h.b16 %v86
    %v534 = vunpack.c.l.b16 %v87
    %v535 = vunpack.c.h.b16 %v87
    %v536 = vunpack.c.l.b16 %v88
    %v537 = vunpack.c.h.b16 %v88
    %v538 = vunpack.c.l.b16 %v89
    %v539 = vunpack.c.h.b16 %v89
    %v540 = vunpack.c.l.b16 %v90
    %v541 = vunpack.c.h.b16 %v90
    %v542 = vunpack.c.l.b16 %v91
    %v543 = vunpack.c.h.b16 %v91
    %v544 = vunpack.c.l.b16 %v92
    %v545 = vunpack.c.h.b16 %v92
    %v546 = vunpack.c.l.b16 %v93
    %v547 = vunpack.c.h.b16 %v93
    %v548 = vunpack.c.l.b16 %v94
    %v549 = vunpack.c.h.b16 %v94
    %v550 = vunpack.c.l.b16 %v95
    %v551 = vunpack.c.h.b16 %v95
    %v552 = vunpack.c.l.b16 %v96
    %v553 = vunpack.c.h.b16 %v96
    %v554 = vunpack.c.l.b16 %v97
    %v555 = vunpack.c.h.b16 %v97
    %v556 = vunpack.c.l.b16 %v98
    %v557 = vunpack.c.h.b16 %v98
    %v558 = vunpack.c.l.b16 %v99
    %v559 = vunpack.c.h.b16 %v99
    %v560 = vunpack.c.l.b16 %v100
    %v561 = vunpack.c.h.b16 %v100
    %v562 = vunpack.c.l.b16 %v101
    %v563 = vunpack.c.h.b16 %v101
    %v564 = vunpack.c.l.b16 %v102
    %v565 = vunpack.c.h.b16 %v102
    %v566 = vunpack.c.l.b16 %v103
    %v567 = vunpack.c.h.b16 %v103
    %v568 = vunpack.c.l.b16 %v104
    %v569 = vunpack.c.h.b16 %v104
    %v570 = vunpack.c.l.b16 %v105
    %v571 = vunpack.c.h.b16 %v105
    %v572 = vunpack.c.l.b16 %v106
    %v573 = vunpack.c.h.b16 %v106
    %v574 = vunpack.c.l.b16 %v107
    %v575 = vunpack.c.h.b16 %v107
    %v576 = vunpack.c.l.b16 %v108
    %v577 = vunpack.c.h.b16 %v108
    %v578 = vunpack.c.l.b16 %v109
    %v579 = vunpack.c.h.b16 %v109
    %v580 = vunpack.c.l.b16 %v110
    %v581 = vunpack.c.h.b16 %v110
    %v582 = vunpack.c.l.b16 %v111
    %v583 = vunpack.c.h.b16 %v111
    %v584 = vunpack.c.l.b16 %v112
    %v585 = vunpack.c.h.b16 %v112
    %v586 = vunpack.c.l.b16 %v113
    %v587 = vunpack.c.h.b16 %v113
    %v588 = vunpack.c.l.b16 %v114
    %v589 = vunpack.c.h.b16 %v114
    %v590 = vunpack.c.l.b16 %v115
    %v591 = vunpack.c.h.b16 %v115
    %v592 = vunpack.c.l.b16 %v116
    %v593 = vunpack.c.h.b16 %v116
    %v594 = vunpack.c.l.b16 %v117
    %v595 = vunpack.c.h.b16 %v117
    %v596 = vunpack.c.l.b16 %v118
    %v597 = vunpack.c.h.b16 %v118
    %v598 = vunpack.c.l.b16 %v119
    %v599 = vunpack.c.h.b16 %v119
    %v600 = vunpack.c.l.b16 %v120
    %v601 = vunpack.c.h.b16 %v120
    %v602 = vunpack.c.l.b16 %v121
    %v603 = vunpack.c.h.b16 %v121
    %v604 = vunpack.c.l.b16 %v122
    %v605 = vunpack.c.h.b16 %v122
    %v606 = vunpack.c.l.b16 %v123
    %v607 = vunpack.c.h.b16 %v123
    %v608 = vunpack.c.l.b16 %v124
    %v609 = vunpack.c.h.b16 %v124
    %v610 = vunpack.c.l.b16 %v125
    %v611 = vunpack.c.h.b16 %v125
    %v612 = vunpack.c.l.b16 %v126
    %v613 = vunpack.c.h.b16 %v126
    %v614 = vunpack.c.l.b16 %v127
    %v615 = vunpack.c.h.b16 %v127
    %v616 = vunpack.c.l.b16 %v128
    %v617 = vunpack.c.h.b16 %v128
    %v618 = vunpack.c.l.b16 %v129
    %v619 = vunpack.c.h.b16 %v129
    %v620 = vunpack.c.l.b16 %v130
    %v621 = vunpack.c.h.b16 %v130
    %v622 = vunpack.c.l.b16 %v131
    %v623 = vunpack.c.h.b16 %v131
    %v624 = vunpack.c.l.b16 %v132
    %v625 = vunpack.c.h.b16 %v132
    %v626 = vunpack.c.l.b16 %v133
    %v627 = vunpack.c.h.b16 %v133
    %v628 = vunpack.c.l.b16 %v134
    %v629 = vunpack.c.h.b16 %v134
    %v630 = vunpack.c.l.b16 %v135
    %v631 = vunpack.c.h.b16 %v135
    %v632 = vunpack.c.l.b16 %v136
    %v633 = vunpack.c.h.b16 %v136
    %v634 = vunpack.c.l.b16 %v137
    %v635 = vunpack.c.h.b16 %v137
    %v636 = vunpack.c.l.b16 %v138
    %v637 = vunpack.c.h.b16 %v138
    %v638 = vunpack.c.l.b16 %v139
    %v639 = vunpack.c.h.b16 %v139
    %v640 = vunpack.c.l.b16 %v140
    %v641 = vunpack.c.h.b16 %v140
    %v642 = vunpack.c.l.b16 %v141
    %v643 = vunpack.c.h.b16 %v141
    %v644 = vunpack.c.l.b16 %v142
    %v645 = vunpack.c.h.b16 %v142
    %v646 = vunpack.c.l.b16 %v143
    %v647 = vunpack.c.h.b16 %v143
    %v648 = vunpack.c.l.b16 %v144
    %v649 = vunpack.c.h.b16 %v144
    %v650 = vunpack.c.l.b16 %v145
    %v651 = vunpack.c.h.b16 %v145
    %v652 = vunpack.c.l.b16 %v146
    %v653 = vunpack.c.h.b16 %v146
    %v654 = vunpack.c.l.b16 %v147
    %v655 = vunpack.c.h.b16 %v147
    %v656 = vunpack.c.l.b16 %v148
    %v657 = vunpack.c.h.b16 %v148
    %v658 = vunpack.c.l.b16 %v149
    %v659 = vunpack.c.h.b16 %v149
    %v660 = vunpack.c.l.b16 %v150
    %v661 = vunpack.c.h.b16 %v150
    %v662 = vunpack.c.l.b16 %v151
    %v663 = vunpack.c.h.b16 %v151
    %v664 = vunpack.c.l.b16 %v152
    %v665 = vunpack.c.h.b16 %v152
    %v666 = vunpack.c.l.b16 %v153
    %v667 = vunpack.c.h.b16 %v153
    %v668 = vunpack.c.l.b16 %v154
    %v669 = vunpack.c.h.b16 %v154
    %v670 = vunpack.c.l.b16 %v155
    %v671 = vunpack.c.h.b16 %v155
    %v672 = vunpack.c.l.b16 %v156
    %v673 = vunpack.c.h.b16 %v156
    %v674 = vunpack.c.l.b16 %v157
    %v675 = vunpack.c.h.b16 %v157
    %v676 = vunpack.c.l.b16 %v158
    %v677 = vunpack.c.h.b16 %v158
    %v678 = vunpack.c.l.b16 %v159
    %v679 = vunpack.c.h.b16 %v159
    %v680 = vunpack.c.l.b16 %v160
    %v681 = vunpack.c.h.b16 %v160
    %v682 = vunpack.c.l.b16 %v161
    %v683 = vunpack.c.h.b16 %v161
    %v684 = vunpack.c.l.b16 %v162
    %v685 = vunpack.c.h.b16 %v162
    %v686 = vunpack.c.l.b16 %v163
    %v687 = vunpack.c.h.b16 %v163
    %v688 = vunpack.c.l.b16 %v164
    %v689 = vunpack.c.h.b16 %v164
    %v690 = vunpack.c.l.b16 %v165
    %v691 = vunpack.c.h.b16 %v165
    %v692 = vunpack.c.l.b16 %v166
    %v693 = vunpack.c.h.b16 %v166
    %v694 = vunpack.c.l.b16 %v167
    %v695 = vunpack.c.h.b16 %v167
    %v696 = vunpack.c.l.b16 %v168
    %v697 = vunpack.c.h.b16 %v168
    %v698 = vunpack.c.l.b16 %v169
    %v699 = vunpack.c.h.b16 %v169
    %v700 = vunpack.c.l.b16 %v170
    %v701 = vunpack.c.h.b16 %v170
    %v702 = vunpack.c.l.b16 %v171
    %v703 = vunpack.c.h.b16 %v171
    %v704 = vunpack.c.l.b16 %v172
    %v705 = vunpack.c.h.b16 %v172
    %v706 = vunpack.c.l.b16 %v173
    %v707 = vunpack.c.h.b16 %v173
    %v708 = vunpack.c.l.b16 %v174
    %v709 = vunpack.c.h.b16 %v174
    %v710 = vunpack.c.l.b16 %v175
    %v711 = vunpack.c.h.b16 %v175
    %v712 = vunpack.c.l.b16 %v176
    %v713 = vunpack.c.h.b16 %v176
    %v714 = vunpack.c.l.b16 %v177
    %v715 = vunpack.c.h.b16 %v177
    %v716 = vunpack.c.l.b16 %v178
    %v717 = vunpack.c.h.b16 %v178
    %v718 = vunpack.c.l.b16 %v179
    %v719 = vunpack.c.h.b16 %v179
    %v720 = vunpack.c.l.b16 %v180
    %v721 = vunpack.c.h.b16 %v180
    %v722 = vunpack.c.l.b16 %v181
    %v723 = vunpack.c.h.b16 %v181
    %v724 = vunpack.c.l.b16 %v182
    %v725 = vunpack.c.h.b16 %v182
    %v726 = vunpack.c.l.b16 %v183
    %v727 = vunpack.c.h.b16 %v183
    %v728 = vunpack.c.l.b16 %v184
    %v729 = vunpack.c.h.b16 %v184
    %v730 = vunpack.c.l.b16 %v185
    %v731 = vunpack.c.h.b16 %v185
    %v732 = vunpack.c.l.b16 %v186
    %v733 = vunpack.c.h.b16 %v186
    %v734 = vunpack.c.l.b16 %v187
    %v735 = vunpack.c.h.b16 %v187
    %v736 = vunpack.c.l.b16 %v188
    %v737 = vunpack.c.h.b16 %v188
    %v738 = vunpack.c.l.b16 %v189
    %v739 = vunpack.c.h.b16 %v189
    %v740 = vunpack.c.l.b16 %v190
    %v741 = vunpack.c.h.b16 %v190
    %v742 = vunpack.c.l.b16 %v191
    %v743 = vunpack.c.h.b16 %v191
    %v744 = vunpack.c.l.b16 %v192
    %v745 = vunpack.c.h.b16 %v192
    %v746 = vunpack.c.l.b16 %v193
    %v747 = vunpack.c.h.b16 %v193
    %v748 = vunpack.c.l.b16 %v194
    %v749 = vunpack.c.h.b16 %v194
    %v750 = vunpack.c.l.b16 %v195
    %v751 = vunpack.c.h.b16 %v195
    %v752 = vunpack.c.l.b16 %v196
    %v753 = vunpack.c.h.b16 %v196
    %v754 = vunpack.c.l.b16 %v197
    %v755 = vunpack.c.h.b16 %v197
    %v756 = vunpack.c.l.b16 %v198
    %v757 = vunpack.c.h.b16 %v198
    %v758 = vunpack.c.l.b16 %v199
    %v759 = vunpack.c.h.b16 %v199
    %v760 = vunpack.c.l.b16 %v200
    %v761 = vunpack.c.h.b16 %v200
    %v762 = vunpack.c.l.b16 %v201
    %v763 = vunpack.c.h.b16 %v201
    %v764 = vunpack.c.l.b16 %v202
    %v765 = vunpack.c.h.b16 %v202
    %v766 = vunpack.c.l.b16 %v203
    %v767 = vunpack.c.h.b16 %v203
    %v768 = vunpack.c.l.b16 %v204
    %v769 = vunpack.c.h.b16 %v204
    %v770 = vunpack.c.l.b16 %v205
    %v771 = vunpack.c.h.b16 %v205
    %v772 = vunpack.c.l.b16 %v206
    %v773 = vunpack.c.h.b16 %v206
    %v774 = vunpack.c.l.b16 %v207
    %v775 = vunpack.c.h.b16 %v207
    %v776 = vunpack.c.l.b16 %v208
    %v777 = vunpack.c.h.b16 %v208
    %v778 = vunpack.c.l.b16 %v209
    %v779 = vunpack.c.h.b16 %v209
    %v780 = vunpack.c.l.b16 %v210
    %v781 = vunpack.c.h.b16 %v210
    %v782 = vunpack.c.l.b16 %v211
    %v783 = vunpack.c.h.b16 %v211
    %v784 = vunpack.c.l.b16 %v212
    %v785 = vunpack.c.h.b16 %v212
    %v786 = vunpack.c.l.b16 %v213
    %v787 = vunpack.c.h.b16 %v213
    %v788 = vunpack.c.l.b16 %v214
    %v789 = vunpack.c.h.b16 %v214
    %v790 = vunpack.c.l.b16 %v215
    %v791 = vunpack.c.h.b16 %v215
    %v792 = vunpack.c.l.b16 %v216
    %v793 = vunpack.c.h.b16 %v216
    %v794 = vunpack.c.l.b16 %v217
    %v795 = vunpack.c.h.b16 %v217
    %v796 = vunpack.c.l.b16 %v218
    %v797 = vunpack.c.h.b16 %v218
    %v798 = vunpack.c.l.b16 %v219
    %v799 = vunpack.c.h.b16 %v219
    %v800 = vunpack.c.l.b16 %v220
    %v801 = vunpack.c.h.b16 %v220
    %v802 = vunpack.c.l.b16 %v221
    %v803 = vunpack.c.h.b16 %v221
    %v804 = vunpack.c.l.b16 %v222
    %v805 = vunpack.c.h.b16 %v222
    %v806 = vunpack.c.l.b16 %v223
    %v807 = vunpack.c.h.b16 %v223
    %v808 = vunpack.c.l.b16 %v224
    %v809 = vunpack.c.h.b16 %v224
    %v810 = vunpack.c.l.b16 %v225
    %v811 = vunpack.c.h.b16 %v225
    %v812 = vunpack.c.l.b16 %v226
    %v813 = vunpack.c.h.b16 %v226
    %v814 = vunpack.c.l.b16 %v227
    %v815 = vunpack.c.h.b16 %v227
    %v816 = vunpack.c.l.b16 %v228
    %v817 = vunpack.c.h.b16 %v228
    %v818 = vunpack.c.l.b16 %v229
    %v819 = vunpack.c.h.b16 %v229
    %v820 = vunpack.c.l.b16 %v230
    %v821 = vunpack.c.h.b16 %v230
    %v822 = vunpack.c.l.b16 %v231
    %v823 = vunpack.c.h.b16 %v231
    %v824 = vunpack.c.l.b16 %v232
    %v825 = vunpack.c.h.b16 %v232
    %v826 = vunpack.c.l.b16 %v233
    %v827 = vunpack.c.h.b16 %v233
    %v828 = vunpack.c.l.b16 %v234
    %v829 = vunpack.c.h.b16 %v234
    %v830 = vunpack.c.l.b16 %v235
    %v831 = vunpack.c.h.b16 %v235
    %v832 = vunpack.c.l.b16 %v236
    %v833 = vunpack.c.h.b16 %v236
    %v834 = vunpack.c.l.b16 %v237
    %v835 = vunpack.c.h.b16 %v237
    %v836 = vunpack.c.l.b16 %v238
    %v837 = vunpack.c.h.b16 %v238
    %v838 = vunpack.c.l.b16 %v239
    %v839 = vunpack.c.h.b16 %v239
    %v840 = vunpack.c.l.b16 %v240
    %v841 = vunpack.c.h.b16 %v240
    %v842 = vunpack.c.l.b16 %v241
    %v843 = vunpack.c.h.b16 %v241
    %v844 = vunpack.c.l.b16 %v242
    %v845 = vunpack.c.h.b16 %v242
    %v846 = vunpack.c.l.b16 %v243
    %v847 = vunpack.c.h.b16 %v243
    %v848 = vunpack.c.l.b16 %v244
    %v849 = vunpack.c.h.b16 %v244
    %v850 = vunpack.c.l.b16 %v245
    %v851 = vunpack.c.h.b16 %v245
    %v852 = vunpack.c.l.b16 %v246
    %v853 = vunpack.c.h.b16 %v246
    %v854 = vunpack.c.l.b16 %v247
    %v855 = vunpack.c.h.b16 %v247
    %v856 = vunpack.c.l.b16 %v248
    %v857 = vunpack.c.h.b16 %v248
    %v858 = vunpack.c.l.b16 %v249
    %v859 = vunpack.c.h.b16 %v249
    %v860 = vpack.c.b16 %v472, %v468
    %v861 = vpack.c.b16 %v473, %v469
    %v862 = vpack.c.b16 %v474, %v470
    %v863 = vpack.c.b16 %v475, %v471
    %v864 = vpack.c.b16 %v480, %v476
    %v865 = vpack.c.b16 %v481, %v477
    %v866 = vpack.c.b16 %v482, %v478
    %v867 = vpack.c.b16 %v483, %v479
    %v868 = vpack.c.b16 %v488, %v484
    %v869 = vpack.c.b16 %v489, %v485
    %v870 = vpack.c.b16 %v490, %v486
    %v871 = vpack.c.b16 %v491, %v487
    %v872 = vpack.c.b16 %v496, %v492
    %v873 = vpack.c.b16 %v497, %v493
    %v874 = vpack.c.b16 %v498, %v494
    %v875 = vpack.c.b16 %v499, %v495
    %v876 = vpack.c.b16 %v504, %v500
    %v877 = vpack.c.b16 %v505, %v501
    %v878 = vpack.c.b16 %v506, %v502
    %v879 = vpack.c.b16 %v507, %v503
    %v880 = vpack.c.b16 %v512, %v508
    %v881 = vpack.c.b16 %v513, %v509
    %v882 = vpack.c.b16 %v514, %v510
    %v883 = vpack.c.b16 %v515, %v511
    %v884 = vpack.c.b16 %v520, %v516
    %v885 = vpack.c.b16 %v521, %v517
    %v886 = vpack.c.b16 %v522, %v518
    %v887 = vpack.c.b16 %v523, %v519
    %v888 = vpack.c.b16 %v528, %v524
    %v889 = vpack.c.b16 %v529, %v525
    %v890 = vpack.c.b16 %v530, %v526
    %v891 = vpack.c.b16 %v531, %v527
    %v892 = vpack.c.b16 %v536, %v532
    %v893 = vpack.c.b16 %v537, %v533
    %v894 = vpack.c.b16 %v538, %v534
    %v895 = vpack.c.b16 %v539, %v535
    %v896 = vpack.c.b16 %v544, %v540
    %v897 = vpack.c.b16 %v545, %v541
    %v898 = vpack.c.b16 %v546, %v542
    %v899 = vpack.c.b16 %v547, %v543
    %v900 = vpack.c.b16 %v552, %v548
    %v901 = vpack.c.b16 %v553, %v549
    %v902 = vpack.c.b16 %v554, %v550
    %v903 = vpack.c.b16 %v555, %v551
    %v904 = vpack.c.b16 %v560, %v556
    %v905 = vpack.c.b16 %v561, %v557
    %v906 = vpack.c.b16 %v562, %v558
    %v907 = vpack.c.b16 %v563, %v559
    %v908 = vpack.c.b16 %v568, %v564
    %v909 = vpack.c.b16 %v569, %v565
    %v910 = vpack.c.b16 %v570, %v566
    %v911 = vpack.c.b16 %v571, %v567
    %v912 = vpack.c.b16 %v576, %v572
    %v913 = vpack.c.b16 %v577, %v573
    %v914 = vpack.c.b16 %v578, %v574
    %v915 = vpack.c.b16 %v579, %v575
    %v916 = vpack.c.b16 %v584, %v580
    %v917 = vpack.c.b16 %v585, %v581
    %v918 = vpack.c.b16 %v586, %v582
    %v919 = vpack.c.b16 %v587, %v583
    %v920 = vpack.c.b16 %v592, %v588
    %v921 = vpack.c.b16 %v593, %v589
    %v922 = vpack.c.b16 %v594, %v590
    %v923 = vpack.c.b16 %v595, %v591
    %v924 = vpack.c.b16 %v600, %v596
    %v925 = vpack.c.b16 %v601, %v597
    %v926 = vpack.c.b16 %v602, %v598
    %v927 = vpack.c.b16 %v603, %v599
    %v928 = vpack.c.b16 %v608, %v604
    %v929 = vpack.c.b16 %v609, %v605
    %v930 = vpack.c.b16 %v610, %v606
    %v931 = vpack.c.b16 %v611, %v607
    %v932 = vpack.c.b16 %v616, %v612
    %v933 = vpack.c.b16 %v617, %v613
    %v934 = vpack.c.b16 %v618, %v614
    %v935 = vpack.c.b16 %v619, %v615
    %v936 = vpack.c.b16 %v624, %v620
    %v937 = vpack.c.b16 %v625, %v621
    %v938 = vpack.c.b16 %v626, %v622
    %v939 = vpack.c.b16 %v627, %v623
    %v940 = vpack.c.b16 %v632, %v628
    %v941 = vpack.c.b16 %v633, %v629
    %v942 = vpack.c.b16 %v634, %v630
    %v943 = vpack.c.b16 %v635, %v631
    %v944 = vpack.c.b16 %v640, %v636
    %v945 = vpack.c.b16 %v641, %v637
    %v946 = vpack.c.b16 %v642, %v638
    %v947 = vpack.c.b16 %v643, %v639
    %v948 = vpack.c.b16 %v648, %v644
    %v949 = vpack.c.b16 %v649, %v645
    %v950 = vpack.c.b16 %v650, %v646
    %v951 = vpack.c.b16 %v651, %v647
    %v952 = vpack.c.b16 %v656, %v652
    %v953 = vpack.c.b16 %v657, %v653
    %v954 = vpack.c.b16 %v658, %v654
    %v955 = vpack.c.b16 %v659, %v655
    %v956 = vpack.c.b16 %v664, %v660
    %v957 = vpack.c.b16 %v665, %v661
    %v958 = vpack.c.b16 %v666, %v662
    %v959 = vpack.c.b16 %v667, %v663
    %v960 = vpack.c.b16 %v672, %v668
    %v961 = vpack.c.b16 %v673, %v669
    %v962 = vpack.c.b16 %v674, %v670
    %v963 = vpack.c.b16 %v675, %v671
    %v964 = vpack.c.b16 %v680, %v676
    %v965 = vpack.c.b16 %v681, %v677
    %v966 = vpack.c.b16 %v682, %v678
    %v967 = vpack.c.b16 %v683, %v679
    %v968 = vpack.c.b16 %v688, %v684
    %v969 = vpack.c.b16 %v689, %v685
    %v970 = vpack.c.b16 %v690, %v686
    %v971 = vpack.c.b16 %v691, %v687
    %v972 = vpack.c.b16 %v696, %v692
    %v973 = vpack.c.b16 %v697, %v693
    %v974 = vpack.c.b16 %v698, %v694
    %v975 = vpack.c.b16 %v699, %v695
    %v976 = vpack.c.b16 %v704, %v700
    %v977 = vpack.c.b16 %v705, %v701
    %v978 = vpack.c.b16 %v706, %v702
    %v979 = vpack.c.b16 %v707, %v703
    %v980 = vpack.c.b16 %v712, %v708
    %v981 = vpack.c.b16 %v713, %v709
    %v982 = vpack.c.b16 %v714, %v710
    %v983 = vpack.c.b16 %v715, %v711
    %v984 = vpack.c.b16 %v720, %v716
    %v985 = vpack.c.b16 %v721, %v717
    %v986 = vpack.c.b16 %v722, %v718
    %v987 = vpack.c.b16 %v723, %v719
    %v988 = vpack.c.b16 %v728, %v724
    %v989 = vpack.c.b16 %v729, %v725
    %v990 = vpack.c.b16 %v730, %v726
    %v991 = vpack.c.b16 %v731, %v727
    %v992 = vpack.c.b16 %v736, %v732
    %v993 = vpack.c.b16 %v737, %v733
    %v994 = vpack.c.b16 %v738, %v734
    %v995 = vpack.c.b16 %v739, %v735
    %v996 = vpack.c.b16 %v744, %v740
    %v997 = vpack.c.b16 %v745, %v741
    %v998 = vpack.c.b16 %v746, %v742
    %v999 = vpack.c.b16 %v747, %v743
    %v1000 = vpack.c.b16 %v752, %v748
    %v1001 = vpack.c.b16 %v753, %v749
    %v1002 = vpack.c.b16 %v754, %v750
    %v1003 = vpack.c.b16 %v755, %v751
    %v1004 = vpack.c.b16 %v760, %v756
    %v1005 = vpack.c.b16 %v761, %v757
    %v1006 = vpack.c.b16 %v762, %v758
    %v1007 = vpack.c.b16 %v763, %v759
    %v1008 = vpack.c.b16 %v768, %v764
    %v1009 = vpack.c.b16 %v769, %v765
    %v1010 = vpack.c.b16 %v770, %v766
    %v1011 = vpack.c.b16 %v771, %v767
    %v1012 = vpack.c.b16 %v776, %v772
    %v1013 = vpack.c.b16 %v777, %v773
    %v1014 = vpack.c.b16 %v778, %v774
    %v1015 = vpack.c.b16 %v779, %v775
    %v1016 = vpack.c.b16 %v784, %v780
    %v1017 = vpack.c.b16 %v785, %v781
    %v1018 = vpack.c.b16 %v786, %v782
    %v1019 = vpack.c.b16 %v787, %v783
    %v1020 = vpack.c.b16 %v792, %v788
    %v1021 = vpack.c.b16 %v793, %v789
    %v1022 = vpack.c.b16 %v794, %v790
    %v1023 = vpack.c.b16 %v795, %v791
    %v1024 = vpack.c.b16 %v800, %v796
    %v1025 = vpack.c.b16 %v801, %v797
    %v1026 = vpack.c.b16 %v802, %v798
    %v1027 = vpack.c.b16 %v803, %v799
    %v1028 = vpack.c.b16 %v808, %v804
    %v1029 = vpack.c.b16 %v809, %v805
    %v1030 = vpack.c.b16 %v810, %v806
    %v1031 = vpack.c.b16 %v811, %v807
    %v1032 = vpack.c.b16 %v816, %v812
    %v1033 = vpack.c.b16 %v817, %v813
    %v1034 = vpack.c.b16 %v818, %v814
    %v1035 = vpack.c.b16 %v819, %v815
    %v1036 = vpack.c.b16 %v824, %v820
    %v1037 = vpack.c.b16 %v825, %v821
    %v1038 = vpack.c.b16 %v826, %v822
    %v1039 = vpack.c.b16 %v827, %v823
    %v1040 = vpack.c.b16 %v832, %v828
    %v1041 = vpack.c.b16 %v833, %v829
    %v1042 = vpack.c.b16 %v834, %v830
    %v1043 = vpack.c.b16 %v835, %v831
    %v1044 = vpack.c.b16 %v840, %v836
    %v1045 = vpack.c.b16 %v841, %v837
    %v1046 = vpack.c.b16 %v842, %v838
    %v1047 = vpack.c.b16 %v843, %v839
    %v1048 = vpack.c.b16 %v848, %v844
    %v1049 = vpack.c.b16 %v849, %v845
    %v1050 = vpack.c.b16 %v850, %v846
    %v1051 = vpack.c.b16 %v851, %v847
    %v1052 = vpack.c.b16 %v856, %v852
    %v1053 = vpack.c.b16 %v857, %v853
    %v1054 = vpack.c.b16 %v858, %v854
    %v1055 = vpack.c.b16 %v859, %v855
    %vm1252 = vcmask 130048
    %v1254 = vsel %vm1252, %v53, 0
    %1256 = vmatprep.subr.bf16.mxu0 %v889
    %1257 = vmatpush1.bf16.msra.mxu0 %v888
    %1258 = vmatprep.subr.bf16.mxu0 %v885
    %1259 = vmatpush1.bf16.msra.mxu0 %v884
    %1260 = vmatprep.subr.bf16.mxu0 %v881
    %1261 = vmatpush1.bf16.msra.mxu0 %v880
    %1262 = vmatprep.subr.bf16.mxu0 %v877
    %1263 = vmatpush1.bf16.msra.mxu0 %v876
    %1264 = vmatprep.subr.bf16.mxu0 %v873
    %1265 = vmatpush1.bf16.msra.mxu0 %v872
    %1266 = vmatprep.subr.bf16.mxu0 %v869
    %1267 = vmatpush1.bf16.msra.mxu0 %v868
    %1268 = vmatprep.subr.bf16.mxu0 %v865
    %1269 = vmatpush1.bf16.msra.mxu0 %v864
    %1270 = vmatprep.subr.bf16.mxu0 %v861
    %1271 = vmatpush1.bf16.msra.mxu0 %v860
    %1272 = vmatprep.subr.bf16.mxu0 %v921
    %1273 = vmatpush2.bf16.msra.mxu0 %v920
    %1274 = vmatprep.subr.bf16.mxu0 %v917
    %1275 = vmatpush2.bf16.msra.mxu0 %v916
    %1276 = vmatprep.subr.bf16.mxu0 %v913
    %1277 = vmatpush2.bf16.msra.mxu0 %v912
    %1278 = vmatprep.subr.bf16.mxu0 %v909
    %1279 = vmatpush2.bf16.msra.mxu0 %v908
    %1280 = vmatprep.subr.bf16.mxu0 %v905
    %1281 = vmatpush2.bf16.msra.mxu0 %v904
    %1282 = vmatprep.subr.bf16.mxu0 %v901
    %1283 = vmatpush2.bf16.msra.mxu0 %v900
    %1284 = vmatprep.subr.bf16.mxu0 %v897
    %1285 = vmatpush2.bf16.msra.mxu0 %v896
    %1286 = vmatprep.subr.bf16.mxu0 %v893
    %1287 = vmatpush2.bf16.msra.mxu0 %v892
    %1288 = vmatprep.mubr.bf16.mxu0 %v48
    %1289 = vmatmul.mubr.bf16.gmra.mxu0 %v47
    %v1290 = vpop.f32.mrf.mxu0
    %v1291 = vadd.f32 %v255, %v1290
    %v1292 = vpop.f32.mrf.mxu0
    %v1293 = vadd.f32 %v259, %v1292
    %v1294 = vpop.f32.mrf.mxu0
    %v1295 = vpop.f32.mrf.mxu0
    %1296 = vdwg.mxu0
    %1297 = vmatprep.subr.bf16.mxu0 %v953
    %1298 = vmatpush1.bf16.msra.mxu0 %v952
    %1299 = vmatprep.subr.bf16.mxu0 %v949
    %1300 = vmatpush1.bf16.msra.mxu0 %v948
    %1301 = vmatprep.subr.bf16.mxu0 %v945
    %1302 = vmatpush1.bf16.msra.mxu0 %v944
    %1303 = vmatprep.subr.bf16.mxu0 %v941
    %1304 = vmatpush1.bf16.msra.mxu0 %v940
    %1305 = vmatprep.subr.bf16.mxu0 %v937
    %1306 = vmatpush1.bf16.msra.mxu0 %v936
    %1307 = vmatprep.subr.bf16.mxu0 %v933
    %1308 = vmatpush1.bf16.msra.mxu0 %v932
    %1309 = vmatprep.subr.bf16.mxu0 %v929
    %1310 = vmatpush1.bf16.msra.mxu0 %v928
    %1311 = vmatprep.subr.bf16.mxu0 %v925
    %1312 = vmatpush1.bf16.msra.mxu0 %v924
    %1313 = vmatprep.subr.bf16.mxu0 %v985
    %1314 = vmatpush2.bf16.msra.mxu0 %v984
    %1315 = vmatprep.subr.bf16.mxu0 %v981
    %1316 = vmatpush2.bf16.msra.mxu0 %v980
    %1317 = vmatprep.subr.bf16.mxu0 %v977
    %1318 = vmatpush2.bf16.msra.mxu0 %v976
    %1319 = vmatprep.subr.bf16.mxu0 %v973
    %1320 = vmatpush2.bf16.msra.mxu0 %v972
    %1321 = vmatprep.subr.bf16.mxu0 %v969
    %1322 = vmatpush2.bf16.msra.mxu0 %v968
    %1323 = vmatprep.subr.bf16.mxu0 %v965
    %1324 = vmatpush2.bf16.msra.mxu0 %v964
    %1325 = vmatprep.subr.bf16.mxu0 %v961
    %1326 = vmatpush2.bf16.msra.mxu0 %v960
    %1327 = vmatprep.subr.bf16.mxu0 %v957
    %1328 = vmatpush2.bf16.msra.mxu0 %v956
    %1329 = vmatprep.mubr.bf16.mxu0 %v50
    %1330 = vmatmul.mubr.bf16.gmra.mxu0 %v49
    %v1331 = vpop.f32.mrf.mxu0
    %v1332 = vadd.f32 %v1291, %v1331
    %v1333 = vpop.f32.mrf.mxu0
    %v1334 = vadd.f32 %v1293, %v1333
    %v1335 = vpop.f32.mrf.mxu0
    %v1336 = vpop.f32.mrf.mxu0
    %1337 = vdwg.mxu0
    %1338 = vmatprep.subr.bf16.mxu0 %v1017
    %1339 = vmatpush1.bf16.msra.mxu0 %v1016
    %1340 = vmatprep.subr.bf16.mxu0 %v1013
    %1341 = vmatpush1.bf16.msra.mxu0 %v1012
    %1342 = vmatprep.subr.bf16.mxu0 %v1009
    %1343 = vmatpush1.bf16.msra.mxu0 %v1008
    %1344 = vmatprep.subr.bf16.mxu0 %v1005
    %1345 = vmatpush1.bf16.msra.mxu0 %v1004
    %1346 = vmatprep.subr.bf16.mxu0 %v1001
    %1347 = vmatpush1.bf16.msra.mxu0 %v1000
    %1348 = vmatprep.subr.bf16.mxu0 %v997
    %1349 = vmatpush1.bf16.msra.mxu0 %v996
    %1350 = vmatprep.subr.bf16.mxu0 %v993
    %1351 = vmatpush1.bf16.msra.mxu0 %v992
    %1352 = vmatprep.subr.bf16.mxu0 %v989
    %1353 = vmatpush1.bf16.msra.mxu0 %v988
    %1354 = vmatprep.subr.bf16.mxu0 %v1049
    %1355 = vmatpush2.bf16.msra.mxu0 %v1048
    %1356 = vmatprep.subr.bf16.mxu0 %v1045
    %1357 = vmatpush2.bf16.msra.mxu0 %v1044
    %1358 = vmatprep.subr.bf16.mxu0 %v1041
    %1359 = vmatpush2.bf16.msra.mxu0 %v1040
    %1360 = vmatprep.subr.bf16.mxu0 %v1037
    %1361 = vmatpush2.bf16.msra.mxu0 %v1036
    %1362 = vmatprep.subr.bf16.mxu0 %v1033
    %1363 = vmatpush2.bf16.msra.mxu0 %v1032
    %1364 = vmatprep.subr.bf16.mxu0 %v1029
    %1365 = vmatpush2.bf16.msra.mxu0 %v1028
    %1366 = vmatprep.subr.bf16.mxu0 %v1025
    %1367 = vmatpush2.bf16.msra.mxu0 %v1024
    %1368 = vmatprep.subr.bf16.mxu0 %v1021
    %1369 = vmatpush2.bf16.msra.mxu0 %v1020
    %1370 = vmatprep.mubr.bf16.mxu0 %v52
    %1371 = vmatmul.mubr.bf16.gmra.mxu0 %v51
    %v1372 = vpop.f32.mrf.mxu0
    %v1373 = vadd.f32 %v1332, %v1372
    %v1374 = vpop.f32.mrf.mxu0
    %v1375 = vadd.f32 %v1334, %v1374
    %v1376 = vpop.f32.mrf.mxu0
    %v1377 = vpop.f32.mrf.mxu0
    %1378 = vdwg.mxu0
    %1379 = vmatprep.subr.bf16.mxu0 0
    %1380 = vmatpush1.bf16.msra.mxu0 0
    %1381 = vmatprep.subr.bf16.mxu0 0
    %1382 = vmatpush1.bf16.msra.mxu0 0
    %1383 = vmatprep.subr.bf16.mxu0 0
    %1384 = vmatpush1.bf16.msra.mxu0 0
    %1385 = vmatprep.subr.bf16.mxu0 0
    %1386 = vmatpush1.bf16.msra.mxu0 0
    %1387 = vmatprep.subr.bf16.mxu0 0
    %1388 = vmatpush1.bf16.msra.mxu0 0
    %1389 = vmatprep.subr.bf16.mxu0 0
    %1390 = vmatpush1.bf16.msra.mxu0 0
    %1391 = vmatprep.subr.bf16.mxu0 0
    %1392 = vmatpush1.bf16.msra.mxu0 0
    %1393 = vmatprep.subr.bf16.mxu0 %v1053
    %1394 = vmatpush1.bf16.msra.mxu0 %v1052
    %1395 = vmatprep.subr.bf16.mxu0 0
    %1396 = vmatpush2.bf16.msra.mxu0 0
    %1397 = vmatprep.subr.bf16.mxu0 0
    %1398 = vmatpush2.bf16.msra.mxu0 0
    %1399 = vmatprep.subr.bf16.mxu0 0
    %1400 = vmatpush2.bf16.msra.mxu0 0
    %1401 = vmatprep.subr.bf16.mxu0 0
    %1402 = vmatpush2.bf16.msra.mxu0 0
    %1403 = vmatprep.subr.bf16.mxu0 0
    %1404 = vmatpush2.bf16.msra.mxu0 0
    %1405 = vmatprep.subr.bf16.mxu0 0
    %1406 = vmatpush2.bf16.msra.mxu0 0
    %1407 = vmatprep.subr.bf16.mxu0 0
    %1408 = vmatpush2.bf16.msra.mxu0 0
    %1409 = vmatprep.subr.bf16.mxu0 0
    %1410 = vmatpush2.bf16.msra.mxu0 0
    %1411 = vmatprep.mubr.bf16.mxu0 0
    %1412 = vmatmul.mubr.bf16.gmra.mxu0 %v1254
    %v1413 = vpop.f32.mrf.mxu0
    %v1414 = vadd.f32 %v1373, %v1413
    %v1415 = vpop.f32.mrf.mxu0
    %v1416 = vadd.f32 %v1375, %v1415
    %v1417 = vpop.f32.mrf.mxu0
    %v1418 = vpop.f32.mrf.mxu0
    %1419 = vdwg.mxu0
    %1420 = vmatprep.subr.bf16.mxu0 %v891
    %1421 = vmatpush1.bf16.msra.mxu0 %v890
    %1422 = vmatprep.subr.bf16.mxu0 %v887
    %1423 = vmatpush1.bf16.msra.mxu0 %v886
    %1424 = vmatprep.subr.bf16.mxu0 %v883
    %1425 = vmatpush1.bf16.msra.mxu0 %v882
    %1426 = vmatprep.subr.bf16.mxu0 %v879
    %1427 = vmatpush1.bf16.msra.mxu0 %v878
    %1428 = vmatprep.subr.bf16.mxu0 %v875
    %1429 = vmatpush1.bf16.msra.mxu0 %v874
    %1430 = vmatprep.subr.bf16.mxu0 %v871
    %1431 = vmatpush1.bf16.msra.mxu0 %v870
    %1432 = vmatprep.subr.bf16.mxu0 %v867
    %1433 = vmatpush1.bf16.msra.mxu0 %v866
    %1434 = vmatprep.subr.bf16.mxu0 %v863
    %1435 = vmatpush1.bf16.msra.mxu0 %v862
    %1436 = vmatprep.subr.bf16.mxu0 %v923
    %1437 = vmatpush2.bf16.msra.mxu0 %v922
    %1438 = vmatprep.subr.bf16.mxu0 %v919
    %1439 = vmatpush2.bf16.msra.mxu0 %v918
    %1440 = vmatprep.subr.bf16.mxu0 %v915
    %1441 = vmatpush2.bf16.msra.mxu0 %v914
    %1442 = vmatprep.subr.bf16.mxu0 %v911
    %1443 = vmatpush2.bf16.msra.mxu0 %v910
    %1444 = vmatprep.subr.bf16.mxu0 %v907
    %1445 = vmatpush2.bf16.msra.mxu0 %v906
    %1446 = vmatprep.subr.bf16.mxu0 %v903
    %1447 = vmatpush2.bf16.msra.mxu0 %v902
    %1448 = vmatprep.subr.bf16.mxu0 %v899
    %1449 = vmatpush2.bf16.msra.mxu0 %v898
    %1450 = vmatprep.subr.bf16.mxu0 %v895
    %1451 = vmatpush2.bf16.msra.mxu0 %v894
    %1452 = vmatprep.mubr.bf16.mxu0 %v48
    %1453 = vmatmul.mubr.bf16.gmra.mxu0 %v47
    %v1454 = vpop.f32.mrf.mxu0
    %v1455 = vadd.f32 %v263, %v1454
    %v1456 = vpop.f32.mrf.mxu0
    %v1457 = vadd.f32 %v267, %v1456
    %v1458 = vpop.f32.mrf.mxu0
    %v1459 = vpop.f32.mrf.mxu0
    %1460 = vdwg.mxu0
    %1461 = vmatprep.subr.bf16.mxu0 %v955
    %1462 = vmatpush1.bf16.msra.mxu0 %v954
    %1463 = vmatprep.subr.bf16.mxu0 %v951
    %1464 = vmatpush1.bf16.msra.mxu0 %v950
    %1465 = vmatprep.subr.bf16.mxu0 %v947
    %1466 = vmatpush1.bf16.msra.mxu0 %v946
    %1467 = vmatprep.subr.bf16.mxu0 %v943
    %1468 = vmatpush1.bf16.msra.mxu0 %v942
    %1469 = vmatprep.subr.bf16.mxu0 %v939
    %1470 = vmatpush1.bf16.msra.mxu0 %v938
    %1471 = vmatprep.subr.bf16.mxu0 %v935
    %1472 = vmatpush1.bf16.msra.mxu0 %v934
    %1473 = vmatprep.subr.bf16.mxu0 %v931
    %1474 = vmatpush1.bf16.msra.mxu0 %v930
    %1475 = vmatprep.subr.bf16.mxu0 %v927
    %1476 = vmatpush1.bf16.msra.mxu0 %v926
    %1477 = vmatprep.subr.bf16.mxu0 %v987
    %1478 = vmatpush2.bf16.msra.mxu0 %v986
    %1479 = vmatprep.subr.bf16.mxu0 %v983
    %1480 = vmatpush2.bf16.msra.mxu0 %v982
    %1481 = vmatprep.subr.bf16.mxu0 %v979
    %1482 = vmatpush2.bf16.msra.mxu0 %v978
    %1483 = vmatprep.subr.bf16.mxu0 %v975
    %1484 = vmatpush2.bf16.msra.mxu0 %v974
    %1485 = vmatprep.subr.bf16.mxu0 %v971
    %1486 = vmatpush2.bf16.msra.mxu0 %v970
    %1487 = vmatprep.subr.bf16.mxu0 %v967
    %1488 = vmatpush2.bf16.msra.mxu0 %v966
    %1489 = vmatprep.subr.bf16.mxu0 %v963
    %1490 = vmatpush2.bf16.msra.mxu0 %v962
    %1491 = vmatprep.subr.bf16.mxu0 %v959
    %1492 = vmatpush2.bf16.msra.mxu0 %v958
    %1493 = vmatprep.mubr.bf16.mxu0 %v50
    %1494 = vmatmul.mubr.bf16.gmra.mxu0 %v49
    %v1495 = vpop.f32.mrf.mxu0
    %v1496 = vadd.f32 %v1455, %v1495
    %v1497 = vpop.f32.mrf.mxu0
    %v1498 = vadd.f32 %v1457, %v1497
    %v1499 = vpop.f32.mrf.mxu0
    %v1500 = vpop.f32.mrf.mxu0
    %1501 = vdwg.mxu0
    %1502 = vmatprep.subr.bf16.mxu0 %v1019
    %1503 = vmatpush1.bf16.msra.mxu0 %v1018
    %1504 = vmatprep.subr.bf16.mxu0 %v1015
    %1505 = vmatpush1.bf16.msra.mxu0 %v1014
    %1506 = vmatprep.subr.bf16.mxu0 %v1011
    %1507 = vmatpush1.bf16.msra.mxu0 %v1010
    %1508 = vmatprep.subr.bf16.mxu0 %v1007
    %1509 = vmatpush1.bf16.msra.mxu0 %v1006
    %1510 = vmatprep.subr.bf16.mxu0 %v1003
    %1511 = vmatpush1.bf16.msra.mxu0 %v1002
    %1512 = vmatprep.subr.bf16.mxu0 %v999
    %1513 = vmatpush1.bf16.msra.mxu0 %v998
    %1514 = vmatprep.subr.bf16.mxu0 %v995
    %1515 = vmatpush1.bf16.msra.mxu0 %v994
    %1516 = vmatprep.subr.bf16.mxu0 %v991
    %1517 = vmatpush1.bf16.msra.mxu0 %v990
    %1518 = vmatprep.subr.bf16.mxu0 %v1051
    %1519 = vmatpush2.bf16.msra.mxu0 %v1050
    %1520 = vmatprep.subr.bf16.mxu0 %v1047
    %1521 = vmatpush2.bf16.msra.mxu0 %v1046
    %1522 = vmatprep.subr.bf16.mxu0 %v1043
    %1523 = vmatpush2.bf16.msra.mxu0 %v1042
    %1524 = vmatprep.subr.bf16.mxu0 %v1039
    %1525 = vmatpush2.bf16.msra.mxu0 %v1038
    %1526 = vmatprep.subr.bf16.mxu0 %v1035
    %1527 = vmatpush2.bf16.msra.mxu0 %v1034
    %1528 = vmatprep.subr.bf16.mxu0 %v1031
    %1529 = vmatpush2.bf16.msra.mxu0 %v1030
    %1530 = vmatprep.subr.bf16.mxu0 %v1027
    %1531 = vmatpush2.bf16.msra.mxu0 %v1026
    %1532 = vmatprep.subr.bf16.mxu0 %v1023
    %1533 = vmatpush2.bf16.msra.mxu0 %v1022
    %1534 = vmatprep.mubr.bf16.mxu0 %v52
    %1535 = vmatmul.mubr.bf16.gmra.mxu0 %v51
    %v1536 = vpop.f32.mrf.mxu0
    %v1537 = vadd.f32 %v1496, %v1536
    %v1538 = vpop.f32.mrf.mxu0
    %v1539 = vadd.f32 %v1498, %v1538
    %v1540 = vpop.f32.mrf.mxu0
    %v1541 = vpop.f32.mrf.mxu0
    %1542 = vdwg.mxu0
    %1543 = vmatprep.subr.bf16.mxu0 0
    %1544 = vmatpush1.bf16.msra.mxu0 0
    %1545 = vmatprep.subr.bf16.mxu0 0
    %1546 = vmatpush1.bf16.msra.mxu0 0
    %1547 = vmatprep.subr.bf16.mxu0 0
    %1548 = vmatpush1.bf16.msra.mxu0 0
    %1549 = vmatprep.subr.bf16.mxu0 0
    %1550 = vmatpush1.bf16.msra.mxu0 0
    %1551 = vmatprep.subr.bf16.mxu0 0
    %1552 = vmatpush1.bf16.msra.mxu0 0
    %1553 = vmatprep.subr.bf16.mxu0 0
    %1554 = vmatpush1.bf16.msra.mxu0 0
    %1555 = vmatprep.subr.bf16.mxu0 0
    %1556 = vmatpush1.bf16.msra.mxu0 0
    %1557 = vmatprep.subr.bf16.mxu0 %v1055
    %1558 = vmatpush1.bf16.msra.mxu0 %v1054
    %1559 = vmatprep.subr.bf16.mxu0 0
    %1560 = vmatpush2.bf16.msra.mxu0 0
    %1561 = vmatprep.subr.bf16.mxu0 0
    %1562 = vmatpush2.bf16.msra.mxu0 0
    %1563 = vmatprep.subr.bf16.mxu0 0
    %1564 = vmatpush2.bf16.msra.mxu0 0
    %1565 = vmatprep.subr.bf16.mxu0 0
    %1566 = vmatpush2.bf16.msra.mxu0 0
    %1567 = vmatprep.subr.bf16.mxu0 0
    %1568 = vmatpush2.bf16.msra.mxu0 0
    %1569 = vmatprep.subr.bf16.mxu0 0
    %1570 = vmatpush2.bf16.msra.mxu0 0
    %1571 = vmatprep.subr.bf16.mxu0 0
    %1572 = vmatpush2.bf16.msra.mxu0 0
    %1573 = vmatprep.subr.bf16.mxu0 0
    %1574 = vmatpush2.bf16.msra.mxu0 0
    %1575 = vmatprep.mubr.bf16.mxu0 0
    %1576 = vmatmul.mubr.bf16.gmra.mxu0 %v1254
    %v1577 = vpop.f32.mrf.mxu0
    %v1578 = vadd.f32 %v1537, %v1577
    %v1579 = vpop.f32.mrf.mxu0
    %v1580 = vadd.f32 %v1539, %v1579
    %v1581 = vpop.f32.mrf.mxu0
    %v1582 = vpop.f32.mrf.mxu0
    %1583 = vdwg.mxu0
    %v1584 = vmax.f32 %v1414, 0.0
    %v1585 = vmax.f32 %v1416, 0.0
    %v1586 = vmax.f32 %v1578, 0.0
    %v1587 = vmax.f32 %v1580, 0.0
    %v1588 = vpack.c.bf16 %v1584, %v1584
    %v1589 = vpack.c.bf16 %v1585, %v1585
    %v1590 = vpack.c.bf16 %v1586, %v1586
    %v1591 = vpack.c.bf16 %v1587, %v1587
    %v1592 = vld [vmem:[%s4] sm:$0xf]
    %v1593 = vld [vmem:[%s4 + $0x4] sm:$0xf]
    %v1594 = vld [vmem:[%s4 + $0x8] sm:$0xf]
    %v1595 = vld [vmem:[%s4 + $0xc] sm:$0xf]
    %v1596 = vld [vmem:[%s4 + $0x10] sm:$0xf]
    %v1597 = vld [vmem:[%s4 + $0x14] sm:$0xf]
    %v1598 = vld [vmem:[%s4 + $0x18] sm:$0xf]
    %v1599 = vld [vmem:[%s4 + $0x1c] sm:$0xf]
    %v1600 = vld [vmem:[%s4 + $0x20] sm:$0xf]
    %v1601 = vld [vmem:[%s4 + $0x24] sm:$0xf]
    %v1602 = vld [vmem:[%s4 + $0x28] sm:$0xf]
    %v1603 = vld [vmem:[%s4 + $0x2c] sm:$0xf]
    %v1604 = vld [vmem:[%s4 + $0x30] sm:$0xf]
    %v1605 = vld [vmem:[%s4 + $0x34] sm:$0xf]
    %v1606 = vld [vmem:[%s4 + $0x38] sm:$0xf]
    %v1607 = vld [vmem:[%s4 + $0x3c] sm:$0xf]
    %v1608 = vld [vmem:[%s4 + $0x40] sm:$0xf]
    %v1609 = vld [vmem:[%s4 + $0x44] sm:$0xf]
    %v1610 = vld [vmem:[%s4 + $0x48] sm:$0xf]
    %v1611 = vld [vmem:[%s4 + $0x4c] sm:$0xf]
    %v1612 = vld [vmem:[%s4 + $0x50] sm:$0xf]
    %v1613 = vld [vmem:[%s4 + $0x54] sm:$0xf]
    %v1614 = vld [vmem:[%s4 + $0x58] sm:$0xf]
    %v1615 = vld [vmem:[%s4 + $0x5c] sm:$0xf]
    %v1616 = vld [vmem:[%s4 + $0x60] sm:$0xf]
    %v1617 = vld [vmem:[%s4 + $0x64] sm:$0xf]
    %v1618 = vld [vmem:[%s4 + $0x68] sm:$0xf]
    %v1619 = vld [vmem:[%s4 + $0x6c] sm:$0xf]
    %v1620 = vld [vmem:[%s4 + $0x70] sm:$0xf]
    %v1621 = vld [vmem:[%s4 + $0x74] sm:$0xf]
    %v1622 = vld [vmem:[%s4 + $0x78] sm:$0xf]
    %v1623 = vld [vmem:[%s4 + $0x7c] sm:$0xf]
    %v1624 = vld [vmem:[%s4 + $0x80] sm:$0xf]
    %v1625 = vld [vmem:[%s4 + $0x84] sm:$0xf]
    %v1626 = vld [vmem:[%s4 + $0x88] sm:$0xf]
    %v1627 = vld [vmem:[%s4 + $0x8c] sm:$0xf]
    %v1628 = vld [vmem:[%s4 + $0x90] sm:$0xf]
    %v1629 = vld [vmem:[%s4 + $0x94] sm:$0xf]
    %v1630 = vld [vmem:[%s4 + $0x98] sm:$0xf]
    %v1631 = vld [vmem:[%s4 + $0x9c] sm:$0xf]
    %v1632 = vld [vmem:[%s4 + $0xa0] sm:$0xf]
    %v1633 = vld [vmem:[%s4 + $0xa4] sm:$0xf]
    %v1634 = vld [vmem:[%s4 + $0xa8] sm:$0xf]
    %v1635 = vld [vmem:[%s4 + $0xac] sm:$0xf]
    %v1636 = vld [vmem:[%s4 + $0xb0] sm:$0xf]
    %v1637 = vld [vmem:[%s4 + $0xb4] sm:$0xf]
    %v1638 = vld [vmem:[%s4 + $0xb8] sm:$0xf]
    %v1639 = vld [vmem:[%s4 + $0xbc] sm:$0xf]
    %v1640 = vld [vmem:[%s4 + $0xc0] sm:$0xf]
    %v1641 = vld [vmem:[%s4 + $0xc4] sm:$0xf]
    %v1642 = vld [vmem:[%s4 + $0xc8] sm:$0xf]
    %v1643 = vld [vmem:[%s4 + $0xcc] sm:$0xf]
    %v1644 = vld [vmem:[%s4 + $0xd0] sm:$0xf]
    %v1645 = vld [vmem:[%s4 + $0xd4] sm:$0xf]
    %v1646 = vld [vmem:[%s4 + $0xd8] sm:$0xf]
    %v1647 = vld [vmem:[%s4 + $0xdc] sm:$0xf]
    %v1648 = vld [vmem:[%s4 + $0xe0] sm:$0xf]
    %v1649 = vld [vmem:[%s4 + $0xe4] sm:$0xf]
    %v1650 = vld [vmem:[%s4 + $0xe8] sm:$0xf]
    %v1651 = vld [vmem:[%s4 + $0xec] sm:$0xf]
    %v1652 = vld [vmem:[%s4 + $0xf0] sm:$0xf]
    %v1653 = vld [vmem:[%s4 + $0xf4] sm:$0xf]
    %v1654 = vld [vmem:[%s4 + $0xf8] sm:$0xf]
    %v1655 = vld [vmem:[%s4 + $0xfc] sm:$0xf]
    %v1656 = vld [vmem:[%s5] sm:$0x1]
    %v1658 = vlaneseq
    %v1659 = vshrl.u32 %v1658, 7
    %v1660 = vsub.s32 0, %v1659
    %v1661 = vrot.slane %v1656, %v1660
    %v1727 = vunpack.c.l.b16 %v1592
    %v1728 = vunpack.c.l.b16 %v1593
    %v1729 = vunpack.c.l.b16 %v1594
    %v1730 = vunpack.c.l.b16 %v1595
    %v1731 = vunpack.c.l.b16 %v1596
    %v1732 = vunpack.c.l.b16 %v1597
    %v1733 = vunpack.c.l.b16 %v1598
    %v1734 = vunpack.c.l.b16 %v1599
    %v1735 = vunpack.c.l.b16 %v1600
    %v1736 = vunpack.c.l.b16 %v1601
    %v1737 = vunpack.c.l.b16 %v1602
    %v1738 = vunpack.c.l.b16 %v1603
    %v1739 = vunpack.c.l.b16 %v1604
    %v1740 = vunpack.c.l.b16 %v1605
    %v1741 = vunpack.c.l.b16 %v1606
    %v1742 = vunpack.c.l.b16 %v1607
    %v1743 = vunpack.c.l.b16 %v1608
    %v1744 = vunpack.c.l.b16 %v1609
    %v1745 = vunpack.c.l.b16 %v1610
    %v1746 = vunpack.c.l.b16 %v1611
    %v1747 = vunpack.c.l.b16 %v1612
    %v1748 = vunpack.c.l.b16 %v1613
    %v1749 = vunpack.c.l.b16 %v1614
    %v1750 = vunpack.c.l.b16 %v1615
    %v1751 = vunpack.c.l.b16 %v1616
    %v1752 = vunpack.c.l.b16 %v1617
    %v1753 = vunpack.c.l.b16 %v1618
    %v1754 = vunpack.c.l.b16 %v1619
    %v1755 = vunpack.c.l.b16 %v1620
    %v1756 = vunpack.c.l.b16 %v1621
    %v1757 = vunpack.c.l.b16 %v1622
    %v1758 = vunpack.c.l.b16 %v1623
    %v1759 = vunpack.c.l.b16 %v1624
    %v1760 = vunpack.c.l.b16 %v1625
    %v1761 = vunpack.c.l.b16 %v1626
    %v1762 = vunpack.c.l.b16 %v1627
    %v1763 = vunpack.c.l.b16 %v1628
    %v1764 = vunpack.c.l.b16 %v1629
    %v1765 = vunpack.c.l.b16 %v1630
    %v1766 = vunpack.c.l.b16 %v1631
    %v1767 = vunpack.c.l.b16 %v1632
    %v1768 = vunpack.c.l.b16 %v1633
    %v1769 = vunpack.c.l.b16 %v1634
    %v1770 = vunpack.c.l.b16 %v1635
    %v1771 = vunpack.c.l.b16 %v1636
    %v1772 = vunpack.c.l.b16 %v1637
    %v1773 = vunpack.c.l.b16 %v1638
    %v1774 = vunpack.c.l.b16 %v1639
    %v1775 = vunpack.c.l.b16 %v1640
    %v1776 = vunpack.c.l.b16 %v1641
    %v1777 = vunpack.c.l.b16 %v1642
    %v1778 = vunpack.c.l.b16 %v1643
    %v1779 = vunpack.c.l.b16 %v1644
    %v1780 = vunpack.c.l.b16 %v1645
    %v1781 = vunpack.c.l.b16 %v1646
    %v1782 = vunpack.c.l.b16 %v1647
    %v1783 = vunpack.c.l.b16 %v1648
    %v1784 = vunpack.c.l.b16 %v1649
    %v1785 = vunpack.c.l.b16 %v1650
    %v1786 = vunpack.c.l.b16 %v1651
    %v1787 = vunpack.c.l.b16 %v1652
    %v1788 = vunpack.c.l.b16 %v1653
    %v1789 = vunpack.c.l.b16 %v1654
    %v1790 = vunpack.c.l.b16 %v1655
    %v1791 = vpack.c.b16 %v1728, %v1727
    %v1792 = vpack.c.b16 %v1730, %v1729
    %v1793 = vpack.c.b16 %v1732, %v1731
    %v1794 = vpack.c.b16 %v1734, %v1733
    %v1795 = vpack.c.b16 %v1736, %v1735
    %v1796 = vpack.c.b16 %v1738, %v1737
    %v1797 = vpack.c.b16 %v1740, %v1739
    %v1798 = vpack.c.b16 %v1742, %v1741
    %v1799 = vpack.c.b16 %v1744, %v1743
    %v1800 = vpack.c.b16 %v1746, %v1745
    %v1801 = vpack.c.b16 %v1748, %v1747
    %v1802 = vpack.c.b16 %v1750, %v1749
    %v1803 = vpack.c.b16 %v1752, %v1751
    %v1804 = vpack.c.b16 %v1754, %v1753
    %v1805 = vpack.c.b16 %v1756, %v1755
    %v1806 = vpack.c.b16 %v1758, %v1757
    %v1807 = vpack.c.b16 %v1760, %v1759
    %v1808 = vpack.c.b16 %v1762, %v1761
    %v1809 = vpack.c.b16 %v1764, %v1763
    %v1810 = vpack.c.b16 %v1766, %v1765
    %v1811 = vpack.c.b16 %v1768, %v1767
    %v1812 = vpack.c.b16 %v1770, %v1769
    %v1813 = vpack.c.b16 %v1772, %v1771
    %v1814 = vpack.c.b16 %v1774, %v1773
    %v1815 = vpack.c.b16 %v1776, %v1775
    %v1816 = vpack.c.b16 %v1778, %v1777
    %v1817 = vpack.c.b16 %v1780, %v1779
    %v1818 = vpack.c.b16 %v1782, %v1781
    %v1819 = vpack.c.b16 %v1784, %v1783
    %v1820 = vpack.c.b16 %v1786, %v1785
    %v1821 = vpack.c.b16 %v1788, %v1787
    %v1822 = vpack.c.b16 %v1790, %v1789
    %1855 = vmatprep.subr.bf16.mxu0 0
    %1856 = vmatpush1.bf16.msra.mxu0 %v1798
    %1857 = vmatprep.subr.bf16.mxu0 0
    %1858 = vmatpush1.bf16.msra.mxu0 %v1797
    %1859 = vmatprep.subr.bf16.mxu0 0
    %1860 = vmatpush1.bf16.msra.mxu0 %v1796
    %1861 = vmatprep.subr.bf16.mxu0 0
    %1862 = vmatpush1.bf16.msra.mxu0 %v1795
    %1863 = vmatprep.subr.bf16.mxu0 0
    %1864 = vmatpush1.bf16.msra.mxu0 %v1794
    %1865 = vmatprep.subr.bf16.mxu0 0
    %1866 = vmatpush1.bf16.msra.mxu0 %v1793
    %1867 = vmatprep.subr.bf16.mxu0 0
    %1868 = vmatpush1.bf16.msra.mxu0 %v1792
    %1869 = vmatprep.subr.bf16.mxu0 0
    %1870 = vmatpush1.bf16.msra.mxu0 %v1791
    %1871 = vmatprep.subr.bf16.mxu0 0
    %1872 = vmatpush2.bf16.msra.mxu0 %v1806
    %1873 = vmatprep.subr.bf16.mxu0 0
    %1874 = vmatpush2.bf16.msra.mxu0 %v1805
    %1875 = vmatprep.subr.bf16.mxu0 0
    %1876 = vmatpush2.bf16.msra.mxu0 %v1804
    %1877 = vmatprep.subr.bf16.mxu0 0
    %1878 = vmatpush2.bf16.msra.mxu0 %v1803
    %1879 = vmatprep.subr.bf16.mxu0 0
    %1880 = vmatpush2.bf16.msra.mxu0 %v1802
    %1881 = vmatprep.subr.bf16.mxu0 0
    %1882 = vmatpush2.bf16.msra.mxu0 %v1801
    %1883 = vmatprep.subr.bf16.mxu0 0
    %1884 = vmatpush2.bf16.msra.mxu0 %v1800
    %1885 = vmatprep.subr.bf16.mxu0 0
    %1886 = vmatpush2.bf16.msra.mxu0 %v1799
    %1887 = vmatprep.mubr.bf16.mxu0 %v1589
    %1888 = vmatmul.mubr.bf16.gmra.mxu0 %v1588
    %v1889 = vpop.f32.mrf.mxu0
    %v1890 = vadd.f32 %v1661, %v1889
    %v1891 = vpop.f32.mrf.mxu0
    %v1892 = vpop.f32.mrf.mxu0
    %v1893 = vpop.f32.mrf.mxu0
    %1894 = vdwg.mxu0
    %1895 = vmatprep.subr.bf16.mxu0 0
    %1896 = vmatpush1.bf16.msra.mxu0 %v1814
    %1897 = vmatprep.subr.bf16.mxu0 0
    %1898 = vmatpush1.bf16.msra.mxu0 %v1813
    %1899 = vmatprep.subr.bf16.mxu0 0
    %1900 = vmatpush1.bf16.msra.mxu0 %v1812
    %1901 = vmatprep.subr.bf16.mxu0 0
    %1902 = vmatpush1.bf16.msra.mxu0 %v1811
    %1903 = vmatprep.subr.bf16.mxu0 0
    %1904 = vmatpush1.bf16.msra.mxu0 %v1810
    %1905 = vmatprep.subr.bf16.mxu0 0
    %1906 = vmatpush1.bf16.msra.mxu0 %v1809
    %1907 = vmatprep.subr.bf16.mxu0 0
    %1908 = vmatpush1.bf16.msra.mxu0 %v1808
    %1909 = vmatprep.subr.bf16.mxu0 0
    %1910 = vmatpush1.bf16.msra.mxu0 %v1807
    %1911 = vmatprep.subr.bf16.mxu0 0
    %1912 = vmatpush2.bf16.msra.mxu0 %v1822
    %1913 = vmatprep.subr.bf16.mxu0 0
    %1914 = vmatpush2.bf16.msra.mxu0 %v1821
    %1915 = vmatprep.subr.bf16.mxu0 0
    %1916 = vmatpush2.bf16.msra.mxu0 %v1820
    %1917 = vmatprep.subr.bf16.mxu0 0
    %1918 = vmatpush2.bf16.msra.mxu0 %v1819
    %1919 = vmatprep.subr.bf16.mxu0 0
    %1920 = vmatpush2.bf16.msra.mxu0 %v1818
    %1921 = vmatprep.subr.bf16.mxu0 0
    %1922 = vmatpush2.bf16.msra.mxu0 %v1817
    %1923 = vmatprep.subr.bf16.mxu0 0
    %1924 = vmatpush2.bf16.msra.mxu0 %v1816
    %1925 = vmatprep.subr.bf16.mxu0 0
    %1926 = vmatpush2.bf16.msra.mxu0 %v1815
    %1927 = vmatprep.mubr.bf16.mxu0 %v1591
    %1928 = vmatmul.mubr.bf16.gmra.mxu0 %v1590
    %v1929 = vpop.f32.mrf.mxu0
    %v1930 = vadd.f32 %v1890, %v1929
    %v1931 = vpop.f32.mrf.mxu0
    %v1932 = vpop.f32.mrf.mxu0
    %v1933 = vpop.f32.mrf.mxu0
    %1934 = vdwg.mxu0
    %v1935 = vmul.f32 %v1930, 0.5
    %v1936 = vmul.f32 %v1935, 1.442695
    %v1937 = vpow.pop %v1936
    %v1938 = vld [vmem:[%s1] sm:$0xff]
    %1940 = vrot.lane.b32.xlu0 %v1937, 96
    %v1941 = vpop.permute.xlu0 %1940
    %v1943 = vmul.f32 %v1938, %v1941
    %v1944 = vadd.f32 %v1930, %v1943
    %v1945 = vpack.c.bf16 %v1944, %v1944
    %v1946 = vld [vmem:[%s6] sm:$0xff]
    %v1947 = vld [vmem:[%s6 + $0x8] sm:$0xff]
    %v1948 = vld [vmem:[%s6 + $0x10] sm:$0xff]
    %v1949 = vld [vmem:[%s6 + $0x18] sm:$0xff]
    %v1950 = vld [vmem:[%s6 + $0x20] sm:$0xff]
    %v1951 = vld [vmem:[%s6 + $0x28] sm:$0xff]
    %v1952 = vld [vmem:[%s6 + $0x30] sm:$0xff]
    %v1953 = vld [vmem:[%s6 + $0x38] sm:$0xff]
    %v1954 = vld [vmem:[%s7] sm:$0xf]
    %v1956 = vlaneseq
    %v1957 = vshrl.u32 %v1956, 7
    %v1958 = vsub.s32 0, %v1957
    %v1959 = vrot.slane %v1954, %v1958
    %v1960 = vlaneseq
    %v1961 = vshrl.u32 %v1960, 7
    %v1962 = vsub.s32 1, %v1961
    %v1963 = vrot.slane %v1954, %v1962
    %v1964 = vlaneseq
    %v1965 = vshrl.u32 %v1964, 7
    %v1966 = vsub.s32 2, %v1965
    %v1967 = vrot.slane %v1954, %v1966
    %v1968 = vlaneseq
    %v1969 = vshrl.u32 %v1968, 7
    %v1970 = vsub.s32 3, %v1969
    %v1971 = vrot.slane %v1954, %v1970
    %v1984 = vunpack.c.l.b16 %v1946
    %v1985 = vunpack.c.h.b16 %v1946
    %v1986 = vunpack.c.l.b16 %v1947
    %v1987 = vunpack.c.h.b16 %v1947
    %v1988 = vunpack.c.l.b16 %v1948
    %v1989 = vunpack.c.h.b16 %v1948
    %v1990 = vunpack.c.l.b16 %v1949
    %v1991 = vunpack.c.h.b16 %v1949
    %v1992 = vunpack.c.l.b16 %v1950
    %v1993 = vunpack.c.h.b16 %v1950
    %v1994 = vunpack.c.l.b16 %v1951
    %v1995 = vunpack.c.h.b16 %v1951
    %v1996 = vunpack.c.l.b16 %v1952
    %v1997 = vunpack.c.h.b16 %v1952
    %v1998 = vunpack.c.l.b16 %v1953
    %v1999 = vunpack.c.h.b16 %v1953
    %v2000 = vpack.c.b16 %v1988, %v1984
    %v2001 = vpack.c.b16 %v1989, %v1985
    %v2002 = vpack.c.b16 %v1990, %v1986
    %v2003 = vpack.c.b16 %v1991, %v1987
    %v2004 = vpack.c.b16 %v1996, %v1992
    %v2005 = vpack.c.b16 %v1997, %v1993
    %v2006 = vpack.c.b16 %v1998, %v1994
    %v2007 = vpack.c.b16 %v1999, %v1995
    %vm2016 = vcmask 261120
    %v2018 = vsel %vm2016, %v1945, 0
    %2020 = vmatprep.subr.bf16.mxu0 0
    %2021 = vmatpush1.bf16.msra.mxu0 0
    %2022 = vmatprep.subr.bf16.mxu0 0
    %2023 = vmatpush1.bf16.msra.mxu0 0
    %2024 = vmatprep.subr.bf16.mxu0 0
    %2025 = vmatpush1.bf16.msra.mxu0 0
    %2026 = vmatprep.subr.bf16.mxu0 0
    %2027 = vmatpush1.bf16.msra.mxu0 0
    %2028 = vmatprep.subr.bf16.mxu0 0
    %2029 = vmatpush1.bf16.msra.mxu0 0
    %2030 = vmatprep.subr.bf16.mxu0 0
    %2031 = vmatpush1.bf16.msra.mxu0 0
    %2032 = vmatprep.subr.bf16.mxu0 %v2005
    %2033 = vmatpush1.bf16.msra.mxu0 %v2004
    %2034 = vmatprep.subr.bf16.mxu0 %v2001
    %2035 = vmatpush1.bf16.msra.mxu0 %v2000
    %2036 = vmatprep.subr.bf16.mxu0 0
    %2037 = vmatpush2.bf16.msra.mxu0 0
    %2038 = vmatprep.subr.bf16.mxu0 0
    %2039 = vmatpush2.bf16.msra.mxu0 0
    %2040 = vmatprep.subr.bf16.mxu0 0
    %2041 = vmatpush2.bf16.msra.mxu0 0
    %2042 = vmatprep.subr.bf16.mxu0 0
    %2043 = vmatpush2.bf16.msra.mxu0 0
    %2044 = vmatprep.subr.bf16.mxu0 0
    %2045 = vmatpush2.bf16.msra.mxu0 0
    %2046 = vmatprep.subr.bf16.mxu0 0
    %2047 = vmatpush2.bf16.msra.mxu0 0
    %2048 = vmatprep.subr.bf16.mxu0 0
    %2049 = vmatpush2.bf16.msra.mxu0 0
    %2050 = vmatprep.subr.bf16.mxu0 0
    %2051 = vmatpush2.bf16.msra.mxu0 0
    %2052 = vmatprep.mubr.bf16.mxu0 0
    %2053 = vmatmul.mubr.bf16.gmra.mxu0 %v2018
    %v2054 = vpop.f32.mrf.mxu0
    %v2055 = vadd.f32 %v1959, %v2054
    %v2056 = vpop.f32.mrf.mxu0
    %v2057 = vadd.f32 %v1963, %v2056
    %v2058 = vpop.f32.mrf.mxu0
    %v2059 = vpop.f32.mrf.mxu0
    %2060 = vdwg.mxu0
    %2061 = vmatprep.subr.bf16.mxu0 0
    %2062 = vmatpush1.bf16.msra.mxu0 0
    %2063 = vmatprep.subr.bf16.mxu0 0
    %2064 = vmatpush1.bf16.msra.mxu0 0
    %2065 = vmatprep.subr.bf16.mxu0 0
    %2066 = vmatpush1.bf16.msra.mxu0 0
    %2067 = vmatprep.subr.bf16.mxu0 0
    %2068 = vmatpush1.bf16.msra.mxu0 0
    %2069 = vmatprep.subr.bf16.mxu0 0
    %2070 = vmatpush1.bf16.msra.mxu0 0
    %2071 = vmatprep.subr.bf16.mxu0 0
    %2072 = vmatpush1.bf16.msra.mxu0 0
    %2073 = vmatprep.subr.bf16.mxu0 %v2007
    %2074 = vmatpush1.bf16.msra.mxu0 %v2006
    %2075 = vmatprep.subr.bf16.mxu0 %v2003
    %2076 = vmatpush1.bf16.msra.mxu0 %v2002
    %2077 = vmatprep.subr.bf16.mxu0 0
    %2078 = vmatpush2.bf16.msra.mxu0 0
    %2079 = vmatprep.subr.bf16.mxu0 0
    %2080 = vmatpush2.bf16.msra.mxu0 0
    %2081 = vmatprep.subr.bf16.mxu0 0
    %2082 = vmatpush2.bf16.msra.mxu0 0
    %2083 = vmatprep.subr.bf16.mxu0 0
    %2084 = vmatpush2.bf16.msra.mxu0 0
    %2085 = vmatprep.subr.bf16.mxu0 0
    %2086 = vmatpush2.bf16.msra.mxu0 0
    %2087 = vmatprep.subr.bf16.mxu0 0
    %2088 = vmatpush2.bf16.msra.mxu0 0
    %2089 = vmatprep.subr.bf16.mxu0 0
    %2090 = vmatpush2.bf16.msra.mxu0 0
    %2091 = vmatprep.subr.bf16.mxu0 0
    %2092 = vmatpush2.bf16.msra.mxu0 0
    %2093 = vmatprep.mubr.bf16.mxu0 0
    %2094 = vmatmul.mubr.bf16.gmra.mxu0 %v2018
    %v2095 = vpop.f32.mrf.mxu0
    %v2096 = vadd.f32 %v1967, %v2095
    %v2097 = vpop.f32.mrf.mxu0
    %v2098 = vadd.f32 %v1971, %v2097
    %v2099 = vpop.f32.mrf.mxu0
    %v2100 = vpop.f32.mrf.mxu0
    %2101 = vdwg.mxu0
    %v2102 = vmax.f32 %v2055, 0.0
    %v2103 = vmax.f32 %v2057, 0.0
    %v2104 = vmax.f32 %v2096, 0.0
    %v2105 = vmax.f32 %v2098, 0.0
    %v2106 = vpack.c.bf16 %v2102, %v2102
    %v2107 = vpack.c.bf16 %v2103, %v2103
    %v2108 = vpack.c.bf16 %v2104, %v2104
    %v2109 = vpack.c.bf16 %v2105, %v2105
    %v2110 = vld [vmem:[%s8] sm:$0xff]
    %v2111 = vld [vmem:[%s8 + $0x8] sm:$0xff]
    %v2112 = vld [vmem:[%s8 + $0x10] sm:$0xff]
    %v2113 = vld [vmem:[%s8 + $0x18] sm:$0xf]
    %v2114 = vld [vmem:[%s8 + $0x1c] sm:$0xff]
    %v2115 = vld [vmem:[%s8 + $0x24] sm:$0xff]
    %v2116 = vld [vmem:[%s8 + $0x2c] sm:$0xff]
    %v2117 = vld [vmem:[%s8 + $0x34] sm:$0xf]
    %v2118 = vld [vmem:[%s8 + $0x38] sm:$0xff]
    %v2119 = vld [vmem:[%s8 + $0x40] sm:$0xff]
    %v2120 = vld [vmem:[%s8 + $0x48] sm:$0xff]
    %v2121 = vld [vmem:[%s8 + $0x50] sm:$0xf]
    %v2122 = vld [vmem:[%s8 + $0x54] sm:$0xff]
    %v2123 = vld [vmem:[%s8 + $0x5c] sm:$0xff]
    %v2124 = vld [vmem:[%s8 + $0x64] sm:$0xff]
    %v2125 = vld [vmem:[%s8 + $0x6c] sm:$0xf]
    %v2126 = vld [vmem:[%s8 + $0x70] sm:$0xff]
    %v2127 = vld [vmem:[%s8 + $0x78] sm:$0xff]
    %v2128 = vld [vmem:[%s8 + $0x80] sm:$0xff]
    %v2129 = vld [vmem:[%s8 + $0x88] sm:$0xf]
    %v2130 = vld [vmem:[%s8 + $0x8c] sm:$0xff]
    %v2131 = vld [vmem:[%s8 + $0x94] sm:$0xff]
    %v2132 = vld [vmem:[%s8 + $0x9c] sm:$0xff]
    %v2133 = vld [vmem:[%s8 + $0xa4] sm:$0xf]
    %v2134 = vld [vmem:[%s8 + $0xa8] sm:$0xff]
    %v2135 = vld [vmem:[%s8 + $0xb0] sm:$0xff]
    %v2136 = vld [vmem:[%s8 + $0xb8] sm:$0xff]
    %v2137 = vld [vmem:[%s8 + $0xc0] sm:$0xf]
    %v2138 = vld [vmem:[%s8 + $0xc4] sm:$0xff]
    %v2139 = vld [vmem:[%s8 + $0xcc] sm:$0xff]
    %v2140 = vld [vmem:[%s8 + $0xd4] sm:$0xff]
    %v2141 = vld [vmem:[%s8 + $0xdc] sm:$0xf]
    %v2142 = vld [vmem:[%s8 + $0xe0] sm:$0xff]
    %v2143 = vld [vmem:[%s8 + $0xe8] sm:$0xff]
    %v2144 = vld [vmem:[%s8 + $0xf0] sm:$0xff]
    %v2145 = vld [vmem:[%s8 + $0xf8] sm:$0xf]
    %v2146 = vld [vmem:[%s8 + $0xfc] sm:$0xff]
    %v2147 = vld [vmem:[%s8 + $0x104] sm:$0xff]
    %v2148 = vld [vmem:[%s8 + $0x10c] sm:$0xff]
    %v2149 = vld [vmem:[%s8 + $0x114] sm:$0xf]
    %v2150 = vld [vmem:[%s8 + $0x118] sm:$0xff]
    %v2151 = vld [vmem:[%s8 + $0x120] sm:$0xff]
    %v2152 = vld [vmem:[%s8 + $0x128] sm:$0xff]
    %v2153 = vld [vmem:[%s8 + $0x130] sm:$0xf]
    %v2154 = vld [vmem:[%s8 + $0x134] sm:$0xff]
    %v2155 = vld [vmem:[%s8 + $0x13c] sm:$0xff]
    %v2156 = vld [vmem:[%s8 + $0x144] sm:$0xff]
    %v2157 = vld [vmem:[%s8 + $0x14c] sm:$0xf]
    %v2158 = vld [vmem:[%s8 + $0x150] sm:$0xff]
    %v2159 = vld [vmem:[%s8 + $0x158] sm:$0xff]
    %v2160 = vld [vmem:[%s8 + $0x160] sm:$0xff]
    %v2161 = vld [vmem:[%s8 + $0x168] sm:$0xf]
    %v2162 = vld [vmem:[%s8 + $0x16c] sm:$0xff]
    %v2163 = vld [vmem:[%s8 + $0x174] sm:$0xff]
    %v2164 = vld [vmem:[%s8 + $0x17c] sm:$0xff]
    %v2165 = vld [vmem:[%s8 + $0x184] sm:$0xf]
    %v2166 = vld [vmem:[%s8 + $0x188] sm:$0xff]
    %v2167 = vld [vmem:[%s8 + $0x190] sm:$0xff]
    %v2168 = vld [vmem:[%s8 + $0x198] sm:$0xff]
    %v2169 = vld [vmem:[%s8 + $0x1a0] sm:$0xf]
    %v2170 = vld [vmem:[%s8 + $0x1a4] sm:$0xff]
    %v2171 = vld [vmem:[%s8 + $0x1ac] sm:$0xff]
    %v2172 = vld [vmem:[%s8 + $0x1b4] sm:$0xff]
    %v2173 = vld [vmem:[%s8 + $0x1bc] sm:$0xf]
    %v2174 = vld [vmem:[%s8 + $0x1c0] sm:$0xff]
    %v2175 = vld [vmem:[%s8 + $0x1c8] sm:$0xff]
    %v2176 = vld [vmem:[%s8 + $0x1d0] sm:$0xff]
    %v2177 = vld [vmem:[%s8 + $0x1d8] sm:$0xf]
    %v2178 = vld [vmem:[%s8 + $0x1dc] sm:$0xff]
    %v2179 = vld [vmem:[%s8 + $0x1e4] sm:$0xff]
    %v2180 = vld [vmem:[%s8 + $0x1ec] sm:$0xff]
    %v2181 = vld [vmem:[%s8 + $0x1f4] sm:$0xf]
    %v2182 = vld [vmem:[%s8 + $0x1f8] sm:$0xff]
    %v2183 = vld [vmem:[%s8 + $0x200] sm:$0xff]
    %v2184 = vld [vmem:[%s8 + $0x208] sm:$0xff]
    %v2185 = vld [vmem:[%s8 + $0x210] sm:$0xf]
    %v2186 = vld [vmem:[%s8 + $0x214] sm:$0xff]
    %v2187 = vld [vmem:[%s8 + $0x21c] sm:$0xff]
    %v2188 = vld [vmem:[%s8 + $0x224] sm:$0xff]
    %v2189 = vld [vmem:[%s8 + $0x22c] sm:$0xf]
    %v2190 = vld [vmem:[%s8 + $0x230] sm:$0xff]
    %v2191 = vld [vmem:[%s8 + $0x238] sm:$0xff]
    %v2192 = vld [vmem:[%s8 + $0x240] sm:$0xff]
    %v2193 = vld [vmem:[%s8 + $0x248] sm:$0xf]
    %v2194 = vld [vmem:[%s8 + $0x24c] sm:$0xff]
    %v2195 = vld [vmem:[%s8 + $0x254] sm:$0xff]
    %v2196 = vld [vmem:[%s8 + $0x25c] sm:$0xff]
    %v2197 = vld [vmem:[%s8 + $0x264] sm:$0xf]
    %v2198 = vld [vmem:[%s8 + $0x268] sm:$0xff]
    %v2199 = vld [vmem:[%s8 + $0x270] sm:$0xff]
    %v2200 = vld [vmem:[%s8 + $0x278] sm:$0xff]
    %v2201 = vld [vmem:[%s8 + $0x280] sm:$0xf]
    %v2202 = vld [vmem:[%s8 + $0x284] sm:$0xff]
    %v2203 = vld [vmem:[%s8 + $0x28c] sm:$0xff]
    %v2204 = vld [vmem:[%s8 + $0x294] sm:$0xff]
    %v2205 = vld [vmem:[%s8 + $0x29c] sm:$0xf]
    %v2206 = vld [vmem:[%s8 + $0x2a0] sm:$0xff]
    %v2207 = vld [vmem:[%s8 + $0x2a8] sm:$0xff]
    %v2208 = vld [vmem:[%s8 + $0x2b0] sm:$0xff]
    %v2209 = vld [vmem:[%s8 + $0x2b8] sm:$0xf]
    %v2210 = vld [vmem:[%s8 + $0x2bc] sm:$0xff]
    %v2211 = vld [vmem:[%s8 + $0x2c4] sm:$0xff]
    %v2212 = vld [vmem:[%s8 + $0x2cc] sm:$0xff]
    %v2213 = vld [vmem:[%s8 + $0x2d4] sm:$0xf]
    %v2214 = vld [vmem:[%s8 + $0x2d8] sm:$0xff]
    %v2215 = vld [vmem:[%s8 + $0x2e0] sm:$0xff]
    %v2216 = vld [vmem:[%s8 + $0x2e8] sm:$0xff]
    %v2217 = vld [vmem:[%s8 + $0x2f0] sm:$0xf]
    %v2218 = vld [vmem:[%s8 + $0x2f4] sm:$0xff]
    %v2219 = vld [vmem:[%s8 + $0x2fc] sm:$0xff]
    %v2220 = vld [vmem:[%s8 + $0x304] sm:$0xff]
    %v2221 = vld [vmem:[%s8 + $0x30c] sm:$0xf]
    %v2222 = vld [vmem:[%s8 + $0x310] sm:$0xff]
    %v2223 = vld [vmem:[%s8 + $0x318] sm:$0xff]
    %v2224 = vld [vmem:[%s8 + $0x320] sm:$0xff]
    %v2225 = vld [vmem:[%s8 + $0x328] sm:$0xf]
    %v2226 = vld [vmem:[%s8 + $0x32c] sm:$0xff]
    %v2227 = vld [vmem:[%s8 + $0x334] sm:$0xff]
    %v2228 = vld [vmem:[%s8 + $0x33c] sm:$0xff]
    %v2229 = vld [vmem:[%s8 + $0x344] sm:$0xf]
    %v2230 = vld [vmem:[%s8 + $0x348] sm:$0xff]
    %v2231 = vld [vmem:[%s8 + $0x350] sm:$0xff]
    %v2232 = vld [vmem:[%s8 + $0x358] sm:$0xff]
    %v2233 = vld [vmem:[%s8 + $0x360] sm:$0xf]
    %v2234 = vld [vmem:[%s8 + $0x364] sm:$0xff]
    %v2235 = vld [vmem:[%s8 + $0x36c] sm:$0xff]
    %v2236 = vld [vmem:[%s8 + $0x374] sm:$0xff]
    %v2237 = vld [vmem:[%s8 + $0x37c] sm:$0xf]
    %v2238 = vld [vmem:[%s8 + $0x380] sm:$0xff]
    %v2239 = vld [vmem:[%s8 + $0x388] sm:$0xff]
    %v2240 = vld [vmem:[%s8 + $0x390] sm:$0xff]
    %v2241 = vld [vmem:[%s8 + $0x398] sm:$0xf]
    %v2242 = vld [vmem:[%s8 + $0x39c] sm:$0xff]
    %v2243 = vld [vmem:[%s8 + $0x3a4] sm:$0xff]
    %v2244 = vld [vmem:[%s8 + $0x3ac] sm:$0xff]
    %v2245 = vld [vmem:[%s8 + $0x3b4] sm:$0xf]
    %v2246 = vld [vmem:[%s8 + $0x3b8] sm:$0xff]
    %v2247 = vld [vmem:[%s8 + $0x3c0] sm:$0xff]
    %v2248 = vld [vmem:[%s8 + $0x3c8] sm:$0xff]
    %v2249 = vld [vmem:[%s8 + $0x3d0] sm:$0xf]
    %v2250 = vld [vmem:[%s8 + $0x3d4] sm:$0xff]
    %v2251 = vld [vmem:[%s8 + $0x3dc] sm:$0xff]
    %v2252 = vld [vmem:[%s8 + $0x3e4] sm:$0xff]
    %v2253 = vld [vmem:[%s8 + $0x3ec] sm:$0xf]
    %v2254 = vld [vmem:[%s8 + $0x3f0] sm:$0xff]
    %v2255 = vld [vmem:[%s8 + $0x3f8] sm:$0xff]
    %v2256 = vld [vmem:[%s8 + $0x400] sm:$0xff]
    %v2257 = vld [vmem:[%s8 + $0x408] sm:$0xf]
    %v2258 = vld [vmem:[%s8 + $0x40c] sm:$0xff]
    %v2259 = vld [vmem:[%s8 + $0x414] sm:$0xff]
    %v2260 = vld [vmem:[%s8 + $0x41c] sm:$0xff]
    %v2261 = vld [vmem:[%s8 + $0x424] sm:$0xf]
    %v2262 = vld [vmem:[%s8 + $0x428] sm:$0xff]
    %v2263 = vld [vmem:[%s8 + $0x430] sm:$0xff]
    %v2264 = vld [vmem:[%s8 + $0x438] sm:$0xff]
    %v2265 = vld [vmem:[%s8 + $0x440] sm:$0xf]
    %v2266 = vld [vmem:[%s8 + $0x444] sm:$0xff]
    %v2267 = vld [vmem:[%s8 + $0x44c] sm:$0xff]
    %v2268 = vld [vmem:[%s8 + $0x454] sm:$0xff]
    %v2269 = vld [vmem:[%s8 + $0x45c] sm:$0xf]
    %v2270 = vld [vmem:[%s8 + $0x460] sm:$0xff]
    %v2271 = vld [vmem:[%s8 + $0x468] sm:$0xff]
    %v2272 = vld [vmem:[%s8 + $0x470] sm:$0xff]
    %v2273 = vld [vmem:[%s8 + $0x478] sm:$0xf]
    %v2274 = vld [vmem:[%s8 + $0x47c] sm:$0xff]
    %v2275 = vld [vmem:[%s8 + $0x484] sm:$0xff]
    %v2276 = vld [vmem:[%s8 + $0x48c] sm:$0xff]
    %v2277 = vld [vmem:[%s8 + $0x494] sm:$0xf]
    %v2278 = vld [vmem:[%s8 + $0x498] sm:$0xff]
    %v2279 = vld [vmem:[%s8 + $0x4a0] sm:$0xff]
    %v2280 = vld [vmem:[%s8 + $0x4a8] sm:$0xff]
    %v2281 = vld [vmem:[%s8 + $0x4b0] sm:$0xf]
    %v2282 = vld [vmem:[%s8 + $0x4b4] sm:$0xff]
    %v2283 = vld [vmem:[%s8 + $0x4bc] sm:$0xff]
    %v2284 = vld [vmem:[%s8 + $0x4c4] sm:$0xff]
    %v2285 = vld [vmem:[%s8 + $0x4cc] sm:$0xf]
    %v2286 = vld [vmem:[%s8 + $0x4d0] sm:$0xff]
    %v2287 = vld [vmem:[%s8 + $0x4d8] sm:$0xff]
    %v2288 = vld [vmem:[%s8 + $0x4e0] sm:$0xff]
    %v2289 = vld [vmem:[%s8 + $0x4e8] sm:$0xf]
    %v2290 = vld [vmem:[%s8 + $0x4ec] sm:$0xff]
    %v2291 = vld [vmem:[%s8 + $0x4f4] sm:$0xff]
    %v2292 = vld [vmem:[%s8 + $0x4fc] sm:$0xff]
    %v2293 = vld [vmem:[%s8 + $0x504] sm:$0xf]
    %v2294 = vld [vmem:[%s8 + $0x508] sm:$0xff]
    %v2295 = vld [vmem:[%s8 + $0x510] sm:$0xff]
    %v2296 = vld [vmem:[%s8 + $0x518] sm:$0xff]
    %v2297 = vld [vmem:[%s8 + $0x520] sm:$0xf]
    %v2298 = vld [vmem:[%s8 + $0x524] sm:$0xff]
    %v2299 = vld [vmem:[%s8 + $0x52c] sm:$0xff]
    %v2300 = vld [vmem:[%s8 + $0x534] sm:$0xff]
    %v2301 = vld [vmem:[%s8 + $0x53c] sm:$0xf]
    %v2302 = vld [vmem:[%s8 + $0x540] sm:$0xff]
    %v2303 = vld [vmem:[%s8 + $0x548] sm:$0xff]
    %v2304 = vld [vmem:[%s8 + $0x550] sm:$0xff]
    %v2305 = vld [vmem:[%s8 + $0x558] sm:$0xf]
    %v2306 = vld [vmem:[%s8 + $0x55c] sm:$0xff]
    %v2307 = vld [vmem:[%s8 + $0x564] sm:$0xff]
    %v2308 = vld [vmem:[%s8 + $0x56c] sm:$0xff]
    %v2309 = vld [vmem:[%s8 + $0x574] sm:$0xf]
    %v2310 = vld [vmem:[%s8 + $0x578] sm:$0xff]
    %v2311 = vld [vmem:[%s8 + $0x580] sm:$0xff]
    %v2312 = vld [vmem:[%s8 + $0x588] sm:$0xff]
    %v2313 = vld [vmem:[%s8 + $0x590] sm:$0xf]
    %v2314 = vld [vmem:[%s8 + $0x594] sm:$0xff]
    %v2315 = vld [vmem:[%s8 + $0x59c] sm:$0xff]
    %v2316 = vld [vmem:[%s8 + $0x5a4] sm:$0xff]
    %v2317 = vld [vmem:[%s8 + $0x5ac] sm:$0xf]
    %v2318 = vld [vmem:[%s8 + $0x5b0] sm:$0xff]
    %v2319 = vld [vmem:[%s8 + $0x5b8] sm:$0xff]
    %v2320 = vld [vmem:[%s8 + $0x5c0] sm:$0xff]
    %v2321 = vld [vmem:[%s8 + $0x5c8] sm:$0xf]
    %v2322 = vld [vmem:[%s8 + $0x5cc] sm:$0xff]
    %v2323 = vld [vmem:[%s8 + $0x5d4] sm:$0xff]
    %v2324 = vld [vmem:[%s8 + $0x5dc] sm:$0xff]
    %v2325 = vld [vmem:[%s8 + $0x5e4] sm:$0xf]
    %v2326 = vld [vmem:[%s8 + $0x5e8] sm:$0xff]
    %v2327 = vld [vmem:[%s8 + $0x5f0] sm:$0xff]
    %v2328 = vld [vmem:[%s8 + $0x5f8] sm:$0xff]
    %v2329 = vld [vmem:[%s8 + $0x600] sm:$0xf]
    %v2330 = vld [vmem:[%s8 + $0x604] sm:$0xff]
    %v2331 = vld [vmem:[%s8 + $0x60c] sm:$0xff]
    %v2332 = vld [vmem:[%s8 + $0x614] sm:$0xff]
    %v2333 = vld [vmem:[%s8 + $0x61c] sm:$0xf]
    %v2334 = vld [vmem:[%s8 + $0x620] sm:$0xff]
    %v2335 = vld [vmem:[%s8 + $0x628] sm:$0xff]
    %v2336 = vld [vmem:[%s8 + $0x630] sm:$0xff]
    %v2337 = vld [vmem:[%s8 + $0x638] sm:$0xf]
    %v2338 = vld [vmem:[%s8 + $0x63c] sm:$0xff]
    %v2339 = vld [vmem:[%s8 + $0x644] sm:$0xff]
    %v2340 = vld [vmem:[%s8 + $0x64c] sm:$0xff]
    %v2341 = vld [vmem:[%s8 + $0x654] sm:$0xf]
    %v2342 = vld [vmem:[%s8 + $0x658] sm:$0xff]
    %v2343 = vld [vmem:[%s8 + $0x660] sm:$0xff]
    %v2344 = vld [vmem:[%s8 + $0x668] sm:$0xff]
    %v2345 = vld [vmem:[%s8 + $0x670] sm:$0xf]
    %v2346 = vld [vmem:[%s8 + $0x674] sm:$0xff]
    %v2347 = vld [vmem:[%s8 + $0x67c] sm:$0xff]
    %v2348 = vld [vmem:[%s8 + $0x684] sm:$0xff]
    %v2349 = vld [vmem:[%s8 + $0x68c] sm:$0xf]
    %v2350 = vld [vmem:[%s8 + $0x690] sm:$0xff]
    %v2351 = vld [vmem:[%s8 + $0x698] sm:$0xff]
    %v2352 = vld [vmem:[%s8 + $0x6a0] sm:$0xff]
    %v2353 = vld [vmem:[%s8 + $0x6a8] sm:$0xf]
    %v2354 = vld [vmem:[%s8 + $0x6ac] sm:$0xff]
    %v2355 = vld [vmem:[%s8 + $0x6b4] sm:$0xff]
    %v2356 = vld [vmem:[%s8 + $0x6bc] sm:$0xff]
    %v2357 = vld [vmem:[%s8 + $0x6c4] sm:$0xf]
    %v2358 = vld [vmem:[%s8 + $0x6c8] sm:$0xff]
    %v2359 = vld [vmem:[%s8 + $0x6d0] sm:$0xff]
    %v2360 = vld [vmem:[%s8 + $0x6d8] sm:$0xff]
    %v2361 = vld [vmem:[%s8 + $0x6e0] sm:$0xf]
    %v2362 = vld [vmem:[%s8 + $0x6e4] sm:$0xff]
    %v2363 = vld [vmem:[%s8 + $0x6ec] sm:$0xff]
    %v2364 = vld [vmem:[%s8 + $0x6f4] sm:$0xff]
    %v2365 = vld [vmem:[%s8 + $0x6fc] sm:$0xf]
    %v2366 = vld [vmem:[%s9] sm:$0x7f]
    %v2368 = vlaneseq
    %v2369 = vshrl.u32 %v2368, 7
    %v2370 = vsub.s32 0, %v2369
    %v2371 = vrot.slane %v2366, %v2370
    %v2372 = vlaneseq
    %v2373 = vshrl.u32 %v2372, 7
    %v2374 = vsub.s32 1, %v2373
    %v2375 = vrot.slane %v2366, %v2374
    %v2376 = vlaneseq
    %v2377 = vshrl.u32 %v2376, 7
    %v2378 = vsub.s32 2, %v2377
    %v2379 = vrot.slane %v2366, %v2378
    %v2380 = vlaneseq
    %v2381 = vshrl.u32 %v2380, 7
    %v2382 = vsub.s32 3, %v2381
    %v2383 = vrot.slane %v2366, %v2382
    %v2384 = vlaneseq
    %v2385 = vshrl.u32 %v2384, 7
    %v2386 = vsub.s32 4, %v2385
    %v2387 = vrot.slane %v2366, %v2386
    %v2388 = vlaneseq
    %v2389 = vshrl.u32 %v2388, 7
    %v2390 = vsub.s32 5, %v2389
    %v2391 = vrot.slane %v2366, %v2390
    %v2392 = vlaneseq
    %v2393 = vshrl.u32 %v2392, 7
    %v2394 = vsub.s32 6, %v2393
    %v2395 = vrot.slane %v2366, %v2394
    %v2659 = vunpack.c.l.b16 %v2110
    %v2660 = vunpack.c.h.b16 %v2110
    %v2661 = vunpack.c.l.b16 %v2111
    %v2662 = vunpack.c.h.b16 %v2111
    %v2663 = vunpack.c.l.b16 %v2112
    %v2664 = vunpack.c.h.b16 %v2112
    %v2665 = vunpack.c.l.b16 %v2113
    %v2666 = vunpack.c.l.b16 %v2114
    %v2667 = vunpack.c.h.b16 %v2114
    %v2668 = vunpack.c.l.b16 %v2115
    %v2669 = vunpack.c.h.b16 %v2115
    %v2670 = vunpack.c.l.b16 %v2116
    %v2671 = vunpack.c.h.b16 %v2116
    %v2672 = vunpack.c.l.b16 %v2117
    %v2673 = vunpack.c.l.b16 %v2118
    %v2674 = vunpack.c.h.b16 %v2118
    %v2675 = vunpack.c.l.b16 %v2119
    %v2676 = vunpack.c.h.b16 %v2119
    %v2677 = vunpack.c.l.b16 %v2120
    %v2678 = vunpack.c.h.b16 %v2120
    %v2679 = vunpack.c.l.b16 %v2121
    %v2680 = vunpack.c.l.b16 %v2122
    %v2681 = vunpack.c.h.b16 %v2122
    %v2682 = vunpack.c.l.b16 %v2123
    %v2683 = vunpack.c.h.b16 %v2123
    %v2684 = vunpack.c.l.b16 %v2124
    %v2685 = vunpack.c.h.b16 %v2124
    %v2686 = vunpack.c.l.b16 %v2125
    %v2687 = vunpack.c.l.b16 %v2126
    %v2688 = vunpack.c.h.b16 %v2126
    %v2689 = vunpack.c.l.b16 %v2127
    %v2690 = vunpack.c.h.b16 %v2127
    %v2691 = vunpack.c.l.b16 %v2128
    %v2692 = vunpack.c.h.b16 %v2128
    %v2693 = vunpack.c.l.b16 %v2129
    %v2694 = vunpack.c.l.b16 %v2130
    %v2695 = vunpack.c.h.b16 %v2130
    %v2696 = vunpack.c.l.b16 %v2131
    %v2697 = vunpack.c.h.b16 %v2131
    %v2698 = vunpack.c.l.b16 %v2132
    %v2699 = vunpack.c.h.b16 %v2132
    %v2700 = vunpack.c.l.b16 %v2133
    %v2701 = vunpack.c.l.b16 %v2134
    %v2702 = vunpack.c.h.b16 %v2134
    %v2703 = vunpack.c.l.b16 %v2135
    %v2704 = vunpack.c.h.b16 %v2135
    %v2705 = vunpack.c.l.b16 %v2136
    %v2706 = vunpack.c.h.b16 %v2136
    %v2707 = vunpack.c.l.b16 %v2137
    %v2708 = vunpack.c.l.b16 %v2138
    %v2709 = vunpack.c.h.b16 %v2138
    %v2710 = vunpack.c.l.b16 %v2139
    %v2711 = vunpack.c.h.b16 %v2139
    %v2712 = vunpack.c.l.b16 %v2140
    %v2713 = vunpack.c.h.b16 %v2140
    %v2714 = vunpack.c.l.b16 %v2141
    %v2715 = vunpack.c.l.b16 %v2142
    %v2716 = vunpack.c.h.b16 %v2142
    %v2717 = vunpack.c.l.b16 %v2143
    %v2718 = vunpack.c.h.b16 %v2143
    %v2719 = vunpack.c.l.b16 %v2144
    %v2720 = vunpack.c.h.b16 %v2144
    %v2721 = vunpack.c.l.b16 %v2145
    %v2722 = vunpack.c.l.b16 %v2146
    %v2723 = vunpack.c.h.b16 %v2146
    %v2724 = vunpack.c.l.b16 %v2147
    %v2725 = vunpack.c.h.b16 %v2147
    %v2726 = vunpack.c.l.b16 %v2148
    %v2727 = vunpack.c.h.b16 %v2148
    %v2728 = vunpack.c.l.b16 %v2149
    %v2729 = vunpack.c.l.b16 %v2150
    %v2730 = vunpack.c.h.b16 %v2150
    %v2731 = vunpack.c.l.b16 %v2151
    %v2732 = vunpack.c.h.b16 %v2151
    %v2733 = vunpack.c.l.b16 %v2152
    %v2734 = vunpack.c.h.b16 %v2152
    %v2735 = vunpack.c.l.b16 %v2153
    %v2736 = vunpack.c.l.b16 %v2154
    %v2737 = vunpack.c.h.b16 %v2154
    %v2738 = vunpack.c.l.b16 %v2155
    %v2739 = vunpack.c.h.b16 %v2155
    %v2740 = vunpack.c.l.b16 %v2156
    %v2741 = vunpack.c.h.b16 %v2156
    %v2742 = vunpack.c.l.b16 %v2157
    %v2743 = vunpack.c.l.b16 %v2158
    %v2744 = vunpack.c.h.b16 %v2158
    %v2745 = vunpack.c.l.b16 %v2159
    %v2746 = vunpack.c.h.b16 %v2159
    %v2747 = vunpack.c.l.b16 %v2160
    %v2748 = vunpack.c.h.b16 %v2160
    %v2749 = vunpack.c.l.b16 %v2161
    %v2750 = vunpack.c.l.b16 %v2162
    %v2751 = vunpack.c.h.b16 %v2162
    %v2752 = vunpack.c.l.b16 %v2163
    %v2753 = vunpack.c.h.b16 %v2163
    %v2754 = vunpack.c.l.b16 %v2164
    %v2755 = vunpack.c.h.b16 %v2164
    %v2756 = vunpack.c.l.b16 %v2165
    %v2757 = vunpack.c.l.b16 %v2166
    %v2758 = vunpack.c.h.b16 %v2166
    %v2759 = vunpack.c.l.b16 %v2167
    %v2760 = vunpack.c.h.b16 %v2167
    %v2761 = vunpack.c.l.b16 %v2168
    %v2762 = vunpack.c.h.b16 %v2168
    %v2763 = vunpack.c.l.b16 %v2169
    %v2764 = vunpack.c.l.b16 %v2170
    %v2765 = vunpack.c.h.b16 %v2170
    %v2766 = vunpack.c.l.b16 %v2171
    %v2767 = vunpack.c.h.b16 %v2171
    %v2768 = vunpack.c.l.b16 %v2172
    %v2769 = vunpack.c.h.b16 %v2172
    %v2770 = vunpack.c.l.b16 %v2173
    %v2771 = vunpack.c.l.b16 %v2174
    %v2772 = vunpack.c.h.b16 %v2174
    %v2773 = vunpack.c.l.b16 %v2175
    %v2774 = vunpack.c.h.b16 %v2175
    %v2775 = vunpack.c.l.b16 %v2176
    %v2776 = vunpack.c.h.b16 %v2176
    %v2777 = vunpack.c.l.b16 %v2177
    %v2778 = vunpack.c.l.b16 %v2178
    %v2779 = vunpack.c.h.b16 %v2178
    %v2780 = vunpack.c.l.b16 %v2179
    %v2781 = vunpack.c.h.b16 %v2179
    %v2782 = vunpack.c.l.b16 %v2180
    %v2783 = vunpack.c.h.b16 %v2180
    %v2784 = vunpack.c.l.b16 %v2181
    %v2785 = vunpack.c.l.b16 %v2182
    %v2786 = vunpack.c.h.b16 %v2182
    %v2787 = vunpack.c.l.b16 %v2183
    %v2788 = vunpack.c.h.b16 %v2183
    %v2789 = vunpack.c.l.b16 %v2184
    %v2790 = vunpack.c.h.b16 %v2184
    %v2791 = vunpack.c.l.b16 %v2185
    %v2792 = vunpack.c.l.b16 %v2186
    %v2793 = vunpack.c.h.b16 %v2186
    %v2794 = vunpack.c.l.b16 %v2187
    %v2795 = vunpack.c.h.b16 %v2187
    %v2796 = vunpack.c.l.b16 %v2188
    %v2797 = vunpack.c.h.b16 %v2188
    %v2798 = vunpack.c.l.b16 %v2189
    %v2799 = vunpack.c.l.b16 %v2190
    %v2800 = vunpack.c.h.b16 %v2190
    %v2801 = vunpack.c.l.b16 %v2191
    %v2802 = vunpack.c.h.b16 %v2191
    %v2803 = vunpack.c.l.b16 %v2192
    %v2804 = vunpack.c.h.b16 %v2192
    %v2805 = vunpack.c.l.b16 %v2193
    %v2806 = vunpack.c.l.b16 %v2194
    %v2807 = vunpack.c.h.b16 %v2194
    %v2808 = vunpack.c.l.b16 %v2195
    %v2809 = vunpack.c.h.b16 %v2195
    %v2810 = vunpack.c.l.b16 %v2196
    %v2811 = vunpack.c.h.b16 %v2196
    %v2812 = vunpack.c.l.b16 %v2197
    %v2813 = vunpack.c.l.b16 %v2198
    %v2814 = vunpack.c.h.b16 %v2198
    %v2815 = vunpack.c.l.b16 %v2199
    %v2816 = vunpack.c.h.b16 %v2199
    %v2817 = vunpack.c.l.b16 %v2200
    %v2818 = vunpack.c.h.b16 %v2200
    %v2819 = vunpack.c.l.b16 %v2201
    %v2820 = vunpack.c.l.b16 %v2202
    %v2821 = vunpack.c.h.b16 %v2202
    %v2822 = vunpack.c.l.b16 %v2203
    %v2823 = vunpack.c.h.b16 %v2203
    %v2824 = vunpack.c.l.b16 %v2204
    %v2825 = vunpack.c.h.b16 %v2204
    %v2826 = vunpack.c.l.b16 %v2205
    %v2827 = vunpack.c.l.b16 %v2206
    %v2828 = vunpack.c.h.b16 %v2206
    %v2829 = vunpack.c.l.b16 %v2207
    %v2830 = vunpack.c.h.b16 %v2207
    %v2831 = vunpack.c.l.b16 %v2208
    %v2832 = vunpack.c.h.b16 %v2208
    %v2833 = vunpack.c.l.b16 %v2209
    %v2834 = vunpack.c.l.b16 %v2210
    %v2835 = vunpack.c.h.b16 %v2210
    %v2836 = vunpack.c.l.b16 %v2211
    %v2837 = vunpack.c.h.b16 %v2211
    %v2838 = vunpack.c.l.b16 %v2212
    %v2839 = vunpack.c.h.b16 %v2212
    %v2840 = vunpack.c.l.b16 %v2213
    %v2841 = vunpack.c.l.b16 %v2214
    %v2842 = vunpack.c.h.b16 %v2214
    %v2843 = vunpack.c.l.b16 %v2215
    %v2844 = vunpack.c.h.b16 %v2215
    %v2845 = vunpack.c.l.b16 %v2216
    %v2846 = vunpack.c.h.b16 %v2216
    %v2847 = vunpack.c.l.b16 %v2217
    %v2848 = vunpack.c.l.b16 %v2218
    %v2849 = vunpack.c.h.b16 %v2218
    %v2850 = vunpack.c.l.b16 %v2219
    %v2851 = vunpack.c.h.b16 %v2219
    %v2852 = vunpack.c.l.b16 %v2220
    %v2853 = vunpack.c.h.b16 %v2220
    %v2854 = vunpack.c.l.b16 %v2221
    %v2855 = vunpack.c.l.b16 %v2222
    %v2856 = vunpack.c.h.b16 %v2222
    %v2857 = vunpack.c.l.b16 %v2223
    %v2858 = vunpack.c.h.b16 %v2223
    %v2859 = vunpack.c.l.b16 %v2224
    %v2860 = vunpack.c.h.b16 %v2224
    %v2861 = vunpack.c.l.b16 %v2225
    %v2862 = vunpack.c.l.b16 %v2226
    %v2863 = vunpack.c.h.b16 %v2226
    %v2864 = vunpack.c.l.b16 %v2227
    %v2865 = vunpack.c.h.b16 %v2227
    %v2866 = vunpack.c.l.b16 %v2228
    %v2867 = vunpack.c.h.b16 %v2228
    %v2868 = vunpack.c.l.b16 %v2229
    %v2869 = vunpack.c.l.b16 %v2230
    %v2870 = vunpack.c.h.b16 %v2230
    %v2871 = vunpack.c.l.b16 %v2231
    %v2872 = vunpack.c.h.b16 %v2231
    %v2873 = vunpack.c.l.b16 %v2232
    %v2874 = vunpack.c.h.b16 %v2232
    %v2875 = vunpack.c.l.b16 %v2233
    %v2876 = vunpack.c.l.b16 %v2234
    %v2877 = vunpack.c.h.b16 %v2234
    %v2878 = vunpack.c.l.b16 %v2235
    %v2879 = vunpack.c.h.b16 %v2235
    %v2880 = vunpack.c.l.b16 %v2236
    %v2881 = vunpack.c.h.b16 %v2236
    %v2882 = vunpack.c.l.b16 %v2237
    %v2883 = vunpack.c.l.b16 %v2238
    %v2884 = vunpack.c.h.b16 %v2238
    %v2885 = vunpack.c.l.b16 %v2239
    %v2886 = vunpack.c.h.b16 %v2239
    %v2887 = vunpack.c.l.b16 %v2240
    %v2888 = vunpack.c.h.b16 %v2240
    %v2889 = vunpack.c.l.b16 %v2241
    %v2890 = vunpack.c.l.b16 %v2242
    %v2891 = vunpack.c.h.b16 %v2242
    %v2892 = vunpack.c.l.b16 %v2243
    %v2893 = vunpack.c.h.b16 %v2243
    %v2894 = vunpack.c.l.b16 %v2244
    %v2895 = vunpack.c.h.b16 %v2244
    %v2896 = vunpack.c.l.b16 %v2245
    %v2897 = vunpack.c.l.b16 %v2246
    %v2898 = vunpack.c.h.b16 %v2246
    %v2899 = vunpack.c.l.b16 %v2247
    %v2900 = vunpack.c.h.b16 %v2247
    %v2901 = vunpack.c.l.b16 %v2248
    %v2902 = vunpack.c.h.b16 %v2248
    %v2903 = vunpack.c.l.b16 %v2249
    %v2904 = vunpack.c.l.b16 %v2250
    %v2905 = vunpack.c.h.b16 %v2250
    %v2906 = vunpack.c.l.b16 %v2251
    %v2907 = vunpack.c.h.b16 %v2251
    %v2908 = vunpack.c.l.b16 %v2252
    %v2909 = vunpack.c.h.b16 %v2252
    %v2910 = vunpack.c.l.b16 %v2253
    %v2911 = vunpack.c.l.b16 %v2254
    %v2912 = vunpack.c.h.b16 %v2254
    %v2913 = vunpack.c.l.b16 %v2255
    %v2914 = vunpack.c.h.b16 %v2255
    %v2915 = vunpack.c.l.b16 %v2256
    %v2916 = vunpack.c.h.b16 %v2256
    %v2917 = vunpack.c.l.b16 %v2257
    %v2918 = vunpack.c.l.b16 %v2258
    %v2919 = vunpack.c.h.b16 %v2258
    %v2920 = vunpack.c.l.b16 %v2259
    %v2921 = vunpack.c.h.b16 %v2259
    %v2922 = vunpack.c.l.b16 %v2260
    %v2923 = vunpack.c.h.b16 %v2260
    %v2924 = vunpack.c.l.b16 %v2261
    %v2925 = vunpack.c.l.b16 %v2262
    %v2926 = vunpack.c.h.b16 %v2262
    %v2927 = vunpack.c.l.b16 %v2263
    %v2928 = vunpack.c.h.b16 %v2263
    %v2929 = vunpack.c.l.b16 %v2264
    %v2930 = vunpack.c.h.b16 %v2264
    %v2931 = vunpack.c.l.b16 %v2265
    %v2932 = vunpack.c.l.b16 %v2266
    %v2933 = vunpack.c.h.b16 %v2266
    %v2934 = vunpack.c.l.b16 %v2267
    %v2935 = vunpack.c.h.b16 %v2267
    %v2936 = vunpack.c.l.b16 %v2268
    %v2937 = vunpack.c.h.b16 %v2268
    %v2938 = vunpack.c.l.b16 %v2269
    %v2939 = vunpack.c.l.b16 %v2270
    %v2940 = vunpack.c.h.b16 %v2270
    %v2941 = vunpack.c.l.b16 %v2271
    %v2942 = vunpack.c.h.b16 %v2271
    %v2943 = vunpack.c.l.b16 %v2272
    %v2944 = vunpack.c.h.b16 %v2272
    %v2945 = vunpack.c.l.b16 %v2273
    %v2946 = vunpack.c.l.b16 %v2274
    %v2947 = vunpack.c.h.b16 %v2274
    %v2948 = vunpack.c.l.b16 %v2275
    %v2949 = vunpack.c.h.b16 %v2275
    %v2950 = vunpack.c.l.b16 %v2276
    %v2951 = vunpack.c.h.b16 %v2276
    %v2952 = vunpack.c.l.b16 %v2277
    %v2953 = vunpack.c.l.b16 %v2278
    %v2954 = vunpack.c.h.b16 %v2278
    %v2955 = vunpack.c.l.b16 %v2279
    %v2956 = vunpack.c.h.b16 %v2279
    %v2957 = vunpack.c.l.b16 %v2280
    %v2958 = vunpack.c.h.b16 %v2280
    %v2959 = vunpack.c.l.b16 %v2281
    %v2960 = vunpack.c.l.b16 %v2282
    %v2961 = vunpack.c.h.b16 %v2282
    %v2962 = vunpack.c.l.b16 %v2283
    %v2963 = vunpack.c.h.b16 %v2283
    %v2964 = vunpack.c.l.b16 %v2284
    %v2965 = vunpack.c.h.b16 %v2284
    %v2966 = vunpack.c.l.b16 %v2285
    %v2967 = vunpack.c.l.b16 %v2286
    %v2968 = vunpack.c.h.b16 %v2286
    %v2969 = vunpack.c.l.b16 %v2287
    %v2970 = vunpack.c.h.b16 %v2287
    %v2971 = vunpack.c.l.b16 %v2288
    %v2972 = vunpack.c.h.b16 %v2288
    %v2973 = vunpack.c.l.b16 %v2289
    %v2974 = vunpack.c.l.b16 %v2290
    %v2975 = vunpack.c.h.b16 %v2290
    %v2976 = vunpack.c.l.b16 %v2291
    %v2977 = vunpack.c.h.b16 %v2291
    %v2978 = vunpack.c.l.b16 %v2292
    %v2979 = vunpack.c.h.b16 %v2292
    %v2980 = vunpack.c.l.b16 %v2293
    %v2981 = vunpack.c.l.b16 %v2294
    %v2982 = vunpack.c.h.b16 %v2294
    %v2983 = vunpack.c.l.b16 %v2295
    %v2984 = vunpack.c.h.b16 %v2295
    %v2985 = vunpack.c.l.b16 %v2296
    %v2986 = vunpack.c.h.b16 %v2296
    %v2987 = vunpack.c.l.b16 %v2297
    %v2988 = vunpack.c.l.b16 %v2298
    %v2989 = vunpack.c.h.b16 %v2298
    %v2990 = vunpack.c.l.b16 %v2299
    %v2991 = vunpack.c.h.b16 %v2299
    %v2992 = vunpack.c.l.b16 %v2300
    %v2993 = vunpack.c.h.b16 %v2300
    %v2994 = vunpack.c.l.b16 %v2301
    %v2995 = vunpack.c.l.b16 %v2302
    %v2996 = vunpack.c.h.b16 %v2302
    %v2997 = vunpack.c.l.b16 %v2303
    %v2998 = vunpack.c.h.b16 %v2303
    %v2999 = vunpack.c.l.b16 %v2304
    %v3000 = vunpack.c.h.b16 %v2304
    %v3001 = vunpack.c.l.b16 %v2305
    %v3002 = vunpack.c.l.b16 %v2306
    %v3003 = vunpack.c.h.b16 %v2306
    %v3004 = vunpack.c.l.b16 %v2307
    %v3005 = vunpack.c.h.b16 %v2307
    %v3006 = vunpack.c.l.b16 %v2308
    %v3007 = vunpack.c.h.b16 %v2308
    %v3008 = vunpack.c.l.b16 %v2309
    %v3009 = vunpack.c.l.b16 %v2310
    %v3010 = vunpack.c.h.b16 %v2310
    %v3011 = vunpack.c.l.b16 %v2311
    %v3012 = vunpack.c.h.b16 %v2311
    %v3013 = vunpack.c.l.b16 %v2312
    %v3014 = vunpack.c.h.b16 %v2312
    %v3015 = vunpack.c.l.b16 %v2313
    %v3016 = vunpack.c.l.b16 %v2314
    %v3017 = vunpack.c.h.b16 %v2314
    %v3018 = vunpack.c.l.b16 %v2315
    %v3019 = vunpack.c.h.b16 %v2315
    %v3020 = vunpack.c.l.b16 %v2316
    %v3021 = vunpack.c.h.b16 %v2316
    %v3022 = vunpack.c.l.b16 %v2317
    %v3023 = vunpack.c.l.b16 %v2318
    %v3024 = vunpack.c.h.b16 %v2318
    %v3025 = vunpack.c.l.b16 %v2319
    %v3026 = vunpack.c.h.b16 %v2319
    %v3027 = vunpack.c.l.b16 %v2320
    %v3028 = vunpack.c.h.b16 %v2320
    %v3029 = vunpack.c.l.b16 %v2321
    %v3030 = vunpack.c.l.b16 %v2322
    %v3031 = vunpack.c.h.b16 %v2322
    %v3032 = vunpack.c.l.b16 %v2323
    %v3033 = vunpack.c.h.b16 %v2323
    %v3034 = vunpack.c.l.b16 %v2324
    %v3035 = vunpack.c.h.b16 %v2324
    %v3036 = vunpack.c.l.b16 %v2325
    %v3037 = vunpack.c.l.b16 %v2326
    %v3038 = vunpack.c.h.b16 %v2326
    %v3039 = vunpack.c.l.b16 %v2327
    %v3040 = vunpack.c.h.b16 %v2327
    %v3041 = vunpack.c.l.b16 %v2328
    %v3042 = vunpack.c.h.b16 %v2328
    %v3043 = vunpack.c.l.b16 %v2329
    %v3044 = vunpack.c.l.b16 %v2330
    %v3045 = vunpack.c.h.b16 %v2330
    %v3046 = vunpack.c.l.b16 %v2331
    %v3047 = vunpack.c.h.b16 %v2331
    %v3048 = vunpack.c.l.b16 %v2332
    %v3049 = vunpack.c.h.b16 %v2332
    %v3050 = vunpack.c.l.b16 %v2333
    %v3051 = vunpack.c.l.b16 %v2334
    %v3052 = vunpack.c.h.b16 %v2334
    %v3053 = vunpack.c.l.b16 %v2335
    %v3054 = vunpack.c.h.b16 %v2335
    %v3055 = vunpack.c.l.b16 %v2336
    %v3056 = vunpack.c.h.b16 %v2336
    %v3057 = vunpack.c.l.b16 %v2337
    %v3058 = vunpack.c.l.b16 %v2338
    %v3059 = vunpack.c.h.b16 %v2338
    %v3060 = vunpack.c.l.b16 %v2339
    %v3061 = vunpack.c.h.b16 %v2339
    %v3062 = vunpack.c.l.b16 %v2340
    %v3063 = vunpack.c.h.b16 %v2340
    %v3064 = vunpack.c.l.b16 %v2341
    %v3065 = vunpack.c.l.b16 %v2342
    %v3066 = vunpack.c.h.b16 %v2342
    %v3067 = vunpack.c.l.b16 %v2343
    %v3068 = vunpack.c.h.b16 %v2343
    %v3069 = vunpack.c.l.b16 %v2344
    %v3070 = vunpack.c.h.b16 %v2344
    %v3071 = vunpack.c.l.b16 %v2345
    %v3072 = vunpack.c.l.b16 %v2346
    %v3073 = vunpack.c.h.b16 %v2346
    %v3074 = vunpack.c.l.b16 %v2347
    %v3075 = vunpack.c.h.b16 %v2347
    %v3076 = vunpack.c.l.b16 %v2348
    %v3077 = vunpack.c.h.b16 %v2348
    %v3078 = vunpack.c.l.b16 %v2349
    %v3079 = vunpack.c.l.b16 %v2350
    %v3080 = vunpack.c.h.b16 %v2350
    %v3081 = vunpack.c.l.b16 %v2351
    %v3082 = vunpack.c.h.b16 %v2351
    %v3083 = vunpack.c.l.b16 %v2352
    %v3084 = vunpack.c.h.b16 %v2352
    %v3085 = vunpack.c.l.b16 %v2353
    %v3086 = vunpack.c.l.b16 %v2354
    %v3087 = vunpack.c.h.b16 %v2354
    %v3088 = vunpack.c.l.b16 %v2355
    %v3089 = vunpack.c.h.b16 %v2355
    %v3090 = vunpack.c.l.b16 %v2356
    %v3091 = vunpack.c.h.b16 %v2356
    %v3092 = vunpack.c.l.b16 %v2357
    %v3093 = vunpack.c.l.b16 %v2358
    %v3094 = vunpack.c.h.b16 %v2358
    %v3095 = vunpack.c.l.b16 %v2359
    %v3096 = vunpack.c.h.b16 %v2359
    %v3097 = vunpack.c.l.b16 %v2360
    %v3098 = vunpack.c.h.b16 %v2360
    %v3099 = vunpack.c.l.b16 %v2361
    %v3100 = vunpack.c.l.b16 %v2362
    %v3101 = vunpack.c.h.b16 %v2362
    %v3102 = vunpack.c.l.b16 %v2363
    %v3103 = vunpack.c.h.b16 %v2363
    %v3104 = vunpack.c.l.b16 %v2364
    %v3105 = vunpack.c.h.b16 %v2364
    %v3106 = vunpack.c.l.b16 %v2365
    %v3107 = vpack.c.b16 %v2666, %v2659
    %v3108 = vpack.c.b16 %v2667, %v2660
    %v3109 = vpack.c.b16 %v2668, %v2661
    %v3110 = vpack.c.b16 %v2669, %v2662
    %v3111 = vpack.c.b16 %v2670, %v2663
    %v3112 = vpack.c.b16 %v2671, %v2664
    %v3113 = vpack.c.b16 %v2672, %v2665
    %v3114 = vpack.c.b16 %v2680, %v2673
    %v3115 = vpack.c.b16 %v2681, %v2674
    %v3116 = vpack.c.b16 %v2682, %v2675
    %v3117 = vpack.c.b16 %v2683, %v2676
    %v3118 = vpack.c.b16 %v2684, %v2677
    %v3119 = vpack.c.b16 %v2685, %v2678
    %v3120 = vpack.c.b16 %v2686, %v2679
    %v3121 = vpack.c.b16 %v2694, %v2687
    %v3122 = vpack.c.b16 %v2695, %v2688
    %v3123 = vpack.c.b16 %v2696, %v2689
    %v3124 = vpack.c.b16 %v2697, %v2690
    %v3125 = vpack.c.b16 %v2698, %v2691
    %v3126 = vpack.c.b16 %v2699, %v2692
    %v3127 = vpack.c.b16 %v2700, %v2693
    %v3128 = vpack.c.b16 %v2708, %v2701
    %v3129 = vpack.c.b16 %v2709, %v2702
    %v3130 = vpack.c.b16 %v2710, %v2703
    %v3131 = vpack.c.b16 %v2711, %v2704
    %v3132 = vpack.c.b16 %v2712, %v2705
    %v3133 = vpack.c.b16 %v2713, %v2706
    %v3134 = vpack.c.b16 %v2714, %v2707
    %v3135 = vpack.c.b16 %v2722, %v2715
    %v3136 = vpack.c.b16 %v2723, %v2716
    %v3137 = vpack.c.b16 %v2724, %v2717
    %v3138 = vpack.c.b16 %v2725, %v2718
    %v3139 = vpack.c.b16 %v2726, %v2719
    %v3140 = vpack.c.b16 %v2727, %v2720
    %v3141 = vpack.c.b16 %v2728, %v2721
    %v3142 = vpack.c.b16 %v2736, %v2729
    %v3143 = vpack.c.b16 %v2737, %v2730
    %v3144 = vpack.c.b16 %v2738, %v2731
    %v3145 = vpack.c.b16 %v2739, %v2732
    %v3146 = vpack.c.b16 %v2740, %v2733
    %v3147 = vpack.c.b16 %v2741, %v2734
    %v3148 = vpack.c.b16 %v2742, %v2735
    %v3149 = vpack.c.b16 %v2750, %v2743
    %v3150 = vpack.c.b16 %v2751, %v2744
    %v3151 = vpack.c.b16 %v2752, %v2745
    %v3152 = vpack.c.b16 %v2753, %v2746
    %v3153 = vpack.c.b16 %v2754, %v2747
    %v3154 = vpack.c.b16 %v2755, %v2748
    %v3155 = vpack.c.b16 %v2756, %v2749
    %v3156 = vpack.c.b16 %v2764, %v2757
    %v3157 = vpack.c.b16 %v2765, %v2758
    %v3158 = vpack.c.b16 %v2766, %v2759
    %v3159 = vpack.c.b16 %v2767, %v2760
    %v3160 = vpack.c.b16 %v2768, %v2761
    %v3161 = vpack.c.b16 %v2769, %v2762
    %v3162 = vpack.c.b16 %v2770, %v2763
    %v3163 = vpack.c.b16 %v2778, %v2771
    %v3164 = vpack.c.b16 %v2779, %v2772
    %v3165 = vpack.c.b16 %v2780, %v2773
    %v3166 = vpack.c.b16 %v2781, %v2774
    %v3167 = vpack.c.b16 %v2782, %v2775
    %v3168 = vpack.c.b16 %v2783, %v2776
    %v3169 = vpack.c.b16 %v2784, %v2777
    %v3170 = vpack.c.b16 %v2792, %v2785
    %v3171 = vpack.c.b16 %v2793, %v2786
    %v3172 = vpack.c.b16 %v2794, %v2787
    %v3173 = vpack.c.b16 %v2795, %v2788
    %v3174 = vpack.c.b16 %v2796, %v2789
    %v3175 = vpack.c.b16 %v2797, %v2790
    %v3176 = vpack.c.b16 %v2798, %v2791
    %v3177 = vpack.c.b16 %v2806, %v2799
    %v3178 = vpack.c.b16 %v2807, %v2800
    %v3179 = vpack.c.b16 %v2808, %v2801
    %v3180 = vpack.c.b16 %v2809, %v2802
    %v3181 = vpack.c.b16 %v2810, %v2803
    %v3182 = vpack.c.b16 %v2811, %v2804
    %v3183 = vpack.c.b16 %v2812, %v2805
    %v3184 = vpack.c.b16 %v2820, %v2813
    %v3185 = vpack.c.b16 %v2821, %v2814
    %v3186 = vpack.c.b16 %v2822, %v2815
    %v3187 = vpack.c.b16 %v2823, %v2816
    %v3188 = vpack.c.b16 %v2824, %v2817
    %v3189 = vpack.c.b16 %v2825, %v2818
    %v3190 = vpack.c.b16 %v2826, %v2819
    %v3191 = vpack.c.b16 %v2834, %v2827
    %v3192 = vpack.c.b16 %v2835, %v2828
    %v3193 = vpack.c.b16 %v2836, %v2829
    %v3194 = vpack.c.b16 %v2837, %v2830
    %v3195 = vpack.c.b16 %v2838, %v2831
    %v3196 = vpack.c.b16 %v2839, %v2832
    %v3197 = vpack.c.b16 %v2840, %v2833
    %v3198 = vpack.c.b16 %v2848, %v2841
    %v3199 = vpack.c.b16 %v2849, %v2842
    %v3200 = vpack.c.b16 %v2850, %v2843
    %v3201 = vpack.c.b16 %v2851, %v2844
    %v3202 = vpack.c.b16 %v2852, %v2845
    %v3203 = vpack.c.b16 %v2853, %v2846
    %v3204 = vpack.c.b16 %v2854, %v2847
    %v3205 = vpack.c.b16 %v2862, %v2855
    %v3206 = vpack.c.b16 %v2863, %v2856
    %v3207 = vpack.c.b16 %v2864, %v2857
    %v3208 = vpack.c.b16 %v2865, %v2858
    %v3209 = vpack.c.b16 %v2866, %v2859
    %v3210 = vpack.c.b16 %v2867, %v2860
    %v3211 = vpack.c.b16 %v2868, %v2861
    %v3212 = vpack.c.b16 %v2876, %v2869
    %v3213 = vpack.c.b16 %v2877, %v2870
    %v3214 = vpack.c.b16 %v2878, %v2871
    %v3215 = vpack.c.b16 %v2879, %v2872
    %v3216 = vpack.c.b16 %v2880, %v2873
    %v3217 = vpack.c.b16 %v2881, %v2874
    %v3218 = vpack.c.b16 %v2882, %v2875
    %v3219 = vpack.c.b16 %v2890, %v2883
    %v3220 = vpack.c.b16 %v2891, %v2884
    %v3221 = vpack.c.b16 %v2892, %v2885
    %v3222 = vpack.c.b16 %v2893, %v2886
    %v3223 = vpack.c.b16 %v2894, %v2887
    %v3224 = vpack.c.b16 %v2895, %v2888
    %v3225 = vpack.c.b16 %v2896, %v2889
    %v3226 = vpack.c.b16 %v2904, %v2897
    %v3227 = vpack.c.b16 %v2905, %v2898
    %v3228 = vpack.c.b16 %v2906, %v2899
    %v3229 = vpack.c.b16 %v2907, %v2900
    %v3230 = vpack.c.b16 %v2908, %v2901
    %v3231 = vpack.c.b16 %v2909, %v2902
    %v3232 = vpack.c.b16 %v2910, %v2903
    %v3233 = vpack.c.b16 %v2918, %v2911
    %v3234 = vpack.c.b16 %v2919, %v2912
    %v3235 = vpack.c.b16 %v2920, %v2913
    %v3236 = vpack.c.b16 %v2921, %v2914
    %v3237 = vpack.c.b16 %v2922, %v2915
    %v3238 = vpack.c.b16 %v2923, %v2916
    %v3239 = vpack.c.b16 %v2924, %v2917
    %v3240 = vpack.c.b16 %v2932, %v2925
    %v3241 = vpack.c.b16 %v2933, %v2926
    %v3242 = vpack.c.b16 %v2934, %v2927
    %v3243 = vpack.c.b16 %v2935, %v2928
    %v3244 = vpack.c.b16 %v2936, %v2929
    %v3245 = vpack.c.b16 %v2937, %v2930
    %v3246 = vpack.c.b16 %v2938, %v2931
    %v3247 = vpack.c.b16 %v2946, %v2939
    %v3248 = vpack.c.b16 %v2947, %v2940
    %v3249 = vpack.c.b16 %v2948, %v2941
    %v3250 = vpack.c.b16 %v2949, %v2942
    %v3251 = vpack.c.b16 %v2950, %v2943
    %v3252 = vpack.c.b16 %v2951, %v2944
    %v3253 = vpack.c.b16 %v2952, %v2945
    %v3254 = vpack.c.b16 %v2960, %v2953
    %v3255 = vpack.c.b16 %v2961, %v2954
    %v3256 = vpack.c.b16 %v2962, %v2955
    %v3257 = vpack.c.b16 %v2963, %v2956
    %v3258 = vpack.c.b16 %v2964, %v2957
    %v3259 = vpack.c.b16 %v2965, %v2958
    %v3260 = vpack.c.b16 %v2966, %v2959
    %v3261 = vpack.c.b16 %v2974, %v2967
    %v3262 = vpack.c.b16 %v2975, %v2968
    %v3263 = vpack.c.b16 %v2976, %v2969
    %v3264 = vpack.c.b16 %v2977, %v2970
    %v3265 = vpack.c.b16 %v2978, %v2971
    %v3266 = vpack.c.b16 %v2979, %v2972
    %v3267 = vpack.c.b16 %v2980, %v2973
    %v3268 = vpack.c.b16 %v2988, %v2981
    %v3269 = vpack.c.b16 %v2989, %v2982
    %v3270 = vpack.c.b16 %v2990, %v2983
    %v3271 = vpack.c.b16 %v2991, %v2984
    %v3272 = vpack.c.b16 %v2992, %v2985
    %v3273 = vpack.c.b16 %v2993, %v2986
    %v3274 = vpack.c.b16 %v2994, %v2987
    %v3275 = vpack.c.b16 %v3002, %v2995
    %v3276 = vpack.c.b16 %v3003, %v2996
    %v3277 = vpack.c.b16 %v3004, %v2997
    %v3278 = vpack.c.b16 %v3005, %v2998
    %v3279 = vpack.c.b16 %v3006, %v2999
    %v3280 = vpack.c.b16 %v3007, %v3000
    %v3281 = vpack.c.b16 %v3008, %v3001
    %v3282 = vpack.c.b16 %v3016, %v3009
    %v3283 = vpack.c.b16 %v3017, %v3010
    %v3284 = vpack.c.b16 %v3018, %v3011
    %v3285 = vpack.c.b16 %v3019, %v3012
    %v3286 = vpack.c.b16 %v3020, %v3013
    %v3287 = vpack.c.b16 %v3021, %v3014
    %v3288 = vpack.c.b16 %v3022, %v3015
    %v3289 = vpack.c.b16 %v3030, %v3023
    %v3290 = vpack.c.b16 %v3031, %v3024
    %v3291 = vpack.c.b16 %v3032, %v3025
    %v3292 = vpack.c.b16 %v3033, %v3026
    %v3293 = vpack.c.b16 %v3034, %v3027
    %v3294 = vpack.c.b16 %v3035, %v3028
    %v3295 = vpack.c.b16 %v3036, %v3029
    %v3296 = vpack.c.b16 %v3044, %v3037
    %v3297 = vpack.c.b16 %v3045, %v3038
    %v3298 = vpack.c.b16 %v3046, %v3039
    %v3299 = vpack.c.b16 %v3047, %v3040
    %v3300 = vpack.c.b16 %v3048, %v3041
    %v3301 = vpack.c.b16 %v3049, %v3042
    %v3302 = vpack.c.b16 %v3050, %v3043
    %v3303 = vpack.c.b16 %v3058, %v3051
    %v3304 = vpack.c.b16 %v3059, %v3052
    %v3305 = vpack.c.b16 %v3060, %v3053
    %v3306 = vpack.c.b16 %v3061, %v3054
    %v3307 = vpack.c.b16 %v3062, %v3055
    %v3308 = vpack.c.b16 %v3063, %v3056
    %v3309 = vpack.c.b16 %v3064, %v3057
    %v3310 = vpack.c.b16 %v3072, %v3065
    %v3311 = vpack.c.b16 %v3073, %v3066
    %v3312 = vpack.c.b16 %v3074, %v3067
    %v3313 = vpack.c.b16 %v3075, %v3068
    %v3314 = vpack.c.b16 %v3076, %v3069
    %v3315 = vpack.c.b16 %v3077, %v3070
    %v3316 = vpack.c.b16 %v3078, %v3071
    %v3317 = vpack.c.b16 %v3086, %v3079
    %v3318 = vpack.c.b16 %v3087, %v3080
    %v3319 = vpack.c.b16 %v3088, %v3081
    %v3320 = vpack.c.b16 %v3089, %v3082
    %v3321 = vpack.c.b16 %v3090, %v3083
    %v3322 = vpack.c.b16 %v3091, %v3084
    %v3323 = vpack.c.b16 %v3092, %v3085
    %v3324 = vpack.c.b16 %v3100, %v3093
    %v3325 = vpack.c.b16 %v3101, %v3094
    %v3326 = vpack.c.b16 %v3102, %v3095
    %v3327 = vpack.c.b16 %v3103, %v3096
    %v3328 = vpack.c.b16 %v3104, %v3097
    %v3329 = vpack.c.b16 %v3105, %v3098
    %v3330 = vpack.c.b16 %v3106, %v3099
    %3555 = vmatprep.subr.bf16.mxu0 %v3157
    %3556 = vmatpush1.bf16.msra.mxu0 %v3156
    %3557 = vmatprep.subr.bf16.mxu0 %v3150
    %3558 = vmatpush1.bf16.msra.mxu0 %v3149
    %3559 = vmatprep.subr.bf16.mxu0 %v3143
    %3560 = vmatpush1.bf16.msra.mxu0 %v3142
    %3561 = vmatprep.subr.bf16.mxu0 %v3136
    %3562 = vmatpush1.bf16.msra.mxu0 %v3135
    %3563 = vmatprep.subr.bf16.mxu0 %v3129
    %3564 = vmatpush1.bf16.msra.mxu0 %v3128
    %3565 = vmatprep.subr.bf16.mxu0 %v3122
    %3566 = vmatpush1.bf16.msra.mxu0 %v3121
    %3567 = vmatprep.subr.bf16.mxu0 %v3115
    %3568 = vmatpush1.bf16.msra.mxu0 %v3114
    %3569 = vmatprep.subr.bf16.mxu0 %v3108
    %3570 = vmatpush1.bf16.msra.mxu0 %v3107
    %3571 = vmatprep.subr.bf16.mxu0 %v3213
    %3572 = vmatpush2.bf16.msra.mxu0 %v3212
    %3573 = vmatprep.subr.bf16.mxu0 %v3206
    %3574 = vmatpush2.bf16.msra.mxu0 %v3205
    %3575 = vmatprep.subr.bf16.mxu0 %v3199
    %3576 = vmatpush2.bf16.msra.mxu0 %v3198
    %3577 = vmatprep.subr.bf16.mxu0 %v3192
    %3578 = vmatpush2.bf16.msra.mxu0 %v3191
    %3579 = vmatprep.subr.bf16.mxu0 %v3185
    %3580 = vmatpush2.bf16.msra.mxu0 %v3184
    %3581 = vmatprep.subr.bf16.mxu0 %v3178
    %3582 = vmatpush2.bf16.msra.mxu0 %v3177
    %3583 = vmatprep.subr.bf16.mxu0 %v3171
    %3584 = vmatpush2.bf16.msra.mxu0 %v3170
    %3585 = vmatprep.subr.bf16.mxu0 %v3164
    %3586 = vmatpush2.bf16.msra.mxu0 %v3163
    %3587 = vmatprep.mubr.bf16.mxu0 %v2107
    %3588 = vmatmul.mubr.bf16.gmra.mxu0 %v2106
    %v3589 = vpop.f32.mrf.mxu0
    %v3590 = vadd.f32 %v2371, %v3589
    %v3591 = vpop.f32.mrf.mxu0
    %v3592 = vadd.f32 %v2375, %v3591
    %v3593 = vpop.f32.mrf.mxu0
    %v3594 = vpop.f32.mrf.mxu0
    %3595 = vdwg.mxu0
    %3596 = vmatprep.subr.bf16.mxu0 %v3269
    %3597 = vmatpush1.bf16.msra.mxu0 %v3268
    %3598 = vmatprep.subr.bf16.mxu0 %v3262
    %3599 = vmatpush1.bf16.msra.mxu0 %v3261
    %3600 = vmatprep.subr.bf16.mxu0 %v3255
    %3601 = vmatpush1.bf16.msra.mxu0 %v3254
    %3602 = vmatprep.subr.bf16.mxu0 %v3248
    %3603 = vmatpush1.bf16.msra.mxu0 %v3247
    %3604 = vmatprep.subr.bf16.mxu0 %v3241
    %3605 = vmatpush1.bf16.msra.mxu0 %v3240
    %3606 = vmatprep.subr.bf16.mxu0 %v3234
    %3607 = vmatpush1.bf16.msra.mxu0 %v3233
    %3608 = vmatprep.subr.bf16.mxu0 %v3227
    %3609 = vmatpush1.bf16.msra.mxu0 %v3226
    %3610 = vmatprep.subr.bf16.mxu0 %v3220
    %3611 = vmatpush1.bf16.msra.mxu0 %v3219
    %3612 = vmatprep.subr.bf16.mxu0 %v3325
    %3613 = vmatpush2.bf16.msra.mxu0 %v3324
    %3614 = vmatprep.subr.bf16.mxu0 %v3318
    %3615 = vmatpush2.bf16.msra.mxu0 %v3317
    %3616 = vmatprep.subr.bf16.mxu0 %v3311
    %3617 = vmatpush2.bf16.msra.mxu0 %v3310
    %3618 = vmatprep.subr.bf16.mxu0 %v3304
    %3619 = vmatpush2.bf16.msra.mxu0 %v3303
    %3620 = vmatprep.subr.bf16.mxu0 %v3297
    %3621 = vmatpush2.bf16.msra.mxu0 %v3296
    %3622 = vmatprep.subr.bf16.mxu0 %v3290
    %3623 = vmatpush2.bf16.msra.mxu0 %v3289
    %3624 = vmatprep.subr.bf16.mxu0 %v3283
    %3625 = vmatpush2.bf16.msra.mxu0 %v3282
    %3626 = vmatprep.subr.bf16.mxu0 %v3276
    %3627 = vmatpush2.bf16.msra.mxu0 %v3275
    %3628 = vmatprep.mubr.bf16.mxu0 %v2109
    %3629 = vmatmul.mubr.bf16.gmra.mxu0 %v2108
    %v3630 = vpop.f32.mrf.mxu0
    %v3631 = vadd.f32 %v3590, %v3630
    %v3632 = vpop.f32.mrf.mxu0
    %v3633 = vadd.f32 %v3592, %v3632
    %v3634 = vpop.f32.mrf.mxu0
    %v3635 = vpop.f32.mrf.mxu0
    %3636 = vdwg.mxu0
    %3637 = vmatprep.subr.bf16.mxu0 %v3159
    %3638 = vmatpush1.bf16.msra.mxu0 %v3158
    %3639 = vmatprep.subr.bf16.mxu0 %v3152
    %3640 = vmatpush1.bf16.msra.mxu0 %v3151
    %3641 = vmatprep.subr.bf16.mxu0 %v3145
    %3642 = vmatpush1.bf16.msra.mxu0 %v3144
    %3643 = vmatprep.subr.bf16.mxu0 %v3138
    %3644 = vmatpush1.bf16.msra.mxu0 %v3137
    %3645 = vmatprep.subr.bf16.mxu0 %v3131
    %3646 = vmatpush1.bf16.msra.mxu0 %v3130
    %3647 = vmatprep.subr.bf16.mxu0 %v3124
    %3648 = vmatpush1.bf16.msra.mxu0 %v3123
    %3649 = vmatprep.subr.bf16.mxu0 %v3117
    %3650 = vmatpush1.bf16.msra.mxu0 %v3116
    %3651 = vmatprep.subr.bf16.mxu0 %v3110
    %3652 = vmatpush1.bf16.msra.mxu0 %v3109
    %3653 = vmatprep.subr.bf16.mxu0 %v3215
    %3654 = vmatpush2.bf16.msra.mxu0 %v3214
    %3655 = vmatprep.subr.bf16.mxu0 %v3208
    %3656 = vmatpush2.bf16.msra.mxu0 %v3207
    %3657 = vmatprep.subr.bf16.mxu0 %v3201
    %3658 = vmatpush2.bf16.msra.mxu0 %v3200
    %3659 = vmatprep.subr.bf16.mxu0 %v3194
    %3660 = vmatpush2.bf16.msra.mxu0 %v3193
    %3661 = vmatprep.subr.bf16.mxu0 %v3187
    %3662 = vmatpush2.bf16.msra.mxu0 %v3186
    %3663 = vmatprep.subr.bf16.mxu0 %v3180
    %3664 = vmatpush2.bf16.msra.mxu0 %v3179
    %3665 = vmatprep.subr.bf16.mxu0 %v3173
    %3666 = vmatpush2.bf16.msra.mxu0 %v3172
    %3667 = vmatprep.subr.bf16.mxu0 %v3166
    %3668 = vmatpush2.bf16.msra.mxu0 %v3165
    %3669 = vmatprep.mubr.bf16.mxu0 %v2107
    %3670 = vmatmul.mubr.bf16.gmra.mxu0 %v2106
    %v3671 = vpop.f32.mrf.mxu0
    %v3672 = vadd.f32 %v2379, %v3671
    %v3673 = vpop.f32.mrf.mxu0
    %v3674 = vadd.f32 %v2383, %v3673
    %v3675 = vpop.f32.mrf.mxu0
    %v3676 = vpop.f32.mrf.mxu0
    %3677 = vdwg.mxu0
    %3678 = vmatprep.subr.bf16.mxu0 %v3271
    %3679 = vmatpush1.bf16.msra.mxu0 %v3270
    %3680 = vmatprep.subr.bf16.mxu0 %v3264
    %3681 = vmatpush1.bf16.msra.mxu0 %v3263
    %3682 = vmatprep.subr.bf16.mxu0 %v3257
    %3683 = vmatpush1.bf16.msra.mxu0 %v3256
    %3684 = vmatprep.subr.bf16.mxu0 %v3250
    %3685 = vmatpush1.bf16.msra.mxu0 %v3249
    %3686 = vmatprep.subr.bf16.mxu0 %v3243
    %3687 = vmatpush1.bf16.msra.mxu0 %v3242
    %3688 = vmatprep.subr.bf16.mxu0 %v3236
    %3689 = vmatpush1.bf16.msra.mxu0 %v3235
    %3690 = vmatprep.subr.bf16.mxu0 %v3229
    %3691 = vmatpush1.bf16.msra.mxu0 %v3228
    %3692 = vmatprep.subr.bf16.mxu0 %v3222
    %3693 = vmatpush1.bf16.msra.mxu0 %v3221
    %3694 = vmatprep.subr.bf16.mxu0 %v3327
    %3695 = vmatpush2.bf16.msra.mxu0 %v3326
    %3696 = vmatprep.subr.bf16.mxu0 %v3320
    %3697 = vmatpush2.bf16.msra.mxu0 %v3319
    %3698 = vmatprep.subr.bf16.mxu0 %v3313
    %3699 = vmatpush2.bf16.msra.mxu0 %v3312
    %3700 = vmatprep.subr.bf16.mxu0 %v3306
    %3701 = vmatpush2.bf16.msra.mxu0 %v3305
    %3702 = vmatprep.subr.bf16.mxu0 %v3299
    %3703 = vmatpush2.bf16.msra.mxu0 %v3298
    %3704 = vmatprep.subr.bf16.mxu0 %v3292
    %3705 = vmatpush2.bf16.msra.mxu0 %v3291
    %3706 = vmatprep.subr.bf16.mxu0 %v3285
    %3707 = vmatpush2.bf16.msra.mxu0 %v3284
    %3708 = vmatprep.subr.bf16.mxu0 %v3278
    %3709 = vmatpush2.bf16.msra.mxu0 %v3277
    %3710 = vmatprep.mubr.bf16.mxu0 %v2109
    %3711 = vmatmul.mubr.bf16.gmra.mxu0 %v2108
    %v3712 = vpop.f32.mrf.mxu0
    %v3713 = vadd.f32 %v3672, %v3712
    %v3714 = vpop.f32.mrf.mxu0
    %v3715 = vadd.f32 %v3674, %v3714
    %v3716 = vpop.f32.mrf.mxu0
    %v3717 = vpop.f32.mrf.mxu0
    %3718 = vdwg.mxu0
    %3719 = vmatprep.subr.bf16.mxu0 %v3161
    %3720 = vmatpush1.bf16.msra.mxu0 %v3160
    %3721 = vmatprep.subr.bf16.mxu0 %v3154
    %3722 = vmatpush1.bf16.msra.mxu0 %v3153
    %3723 = vmatprep.subr.bf16.mxu0 %v3147
    %3724 = vmatpush1.bf16.msra.mxu0 %v3146
    %3725 = vmatprep.subr.bf16.mxu0 %v3140
    %3726 = vmatpush1.bf16.msra.mxu0 %v3139
    %3727 = vmatprep.subr.bf16.mxu0 %v3133
    %3728 = vmatpush1.bf16.msra.mxu0 %v3132
    %3729 = vmatprep.subr.bf16.mxu0 %v3126
    %3730 = vmatpush1.bf16.msra.mxu0 %v3125
    %3731 = vmatprep.subr.bf16.mxu0 %v3119
    %3732 = vmatpush1.bf16.msra.mxu0 %v3118
    %3733 = vmatprep.subr.bf16.mxu0 %v3112
    %3734 = vmatpush1.bf16.msra.mxu0 %v3111
    %3735 = vmatprep.subr.bf16.mxu0 %v3217
    %3736 = vmatpush2.bf16.msra.mxu0 %v3216
    %3737 = vmatprep.subr.bf16.mxu0 %v3210
    %3738 = vmatpush2.bf16.msra.mxu0 %v3209
    %3739 = vmatprep.subr.bf16.mxu0 %v3203
    %3740 = vmatpush2.bf16.msra.mxu0 %v3202
    %3741 = vmatprep.subr.bf16.mxu0 %v3196
    %3742 = vmatpush2.bf16.msra.mxu0 %v3195
    %3743 = vmatprep.subr.bf16.mxu0 %v3189
    %3744 = vmatpush2.bf16.msra.mxu0 %v3188
    %3745 = vmatprep.subr.bf16.mxu0 %v3182
    %3746 = vmatpush2.bf16.msra.mxu0 %v3181
    %3747 = vmatprep.subr.bf16.mxu0 %v3175
    %3748 = vmatpush2.bf16.msra.mxu0 %v3174
    %3749 = vmatprep.subr.bf16.mxu0 %v3168
    %3750 = vmatpush2.bf16.msra.mxu0 %v3167
    %3751 = vmatprep.mubr.bf16.mxu0 %v2107
    %3752 = vmatmul.mubr.bf16.gmra.mxu0 %v2106
    %v3753 = vpop.f32.mrf.mxu0
    %v3754 = vadd.f32 %v2387, %v3753
    %v3755 = vpop.f32.mrf.mxu0
    %v3756 = vadd.f32 %v2391, %v3755
    %v3757 = vpop.f32.mrf.mxu0
    %v3758 = vpop.f32.mrf.mxu0
    %3759 = vdwg.mxu0
    %3760 = vmatprep.subr.bf16.mxu0 %v3273
    %3761 = vmatpush1.bf16.msra.mxu0 %v3272
    %3762 = vmatprep.subr.bf16.mxu0 %v3266
    %3763 = vmatpush1.bf16.msra.mxu0 %v3265
    %3764 = vmatprep.subr.bf16.mxu0 %v3259
    %3765 = vmatpush1.bf16.msra.mxu0 %v3258
    %3766 = vmatprep.subr.bf16.mxu0 %v3252
    %3767 = vmatpush1.bf16.msra.mxu0 %v3251
    %3768 = vmatprep.subr.bf16.mxu0 %v3245
    %3769 = vmatpush1.bf16.msra.mxu0 %v3244
    %3770 = vmatprep.subr.bf16.mxu0 %v3238
    %3771 = vmatpush1.bf16.msra.mxu0 %v3237
    %3772 = vmatprep.subr.bf16.mxu0 %v3231
    %3773 = vmatpush1.bf16.msra.mxu0 %v3230
    %3774 = vmatprep.subr.bf16.mxu0 %v3224
    %3775 = vmatpush1.bf16.msra.mxu0 %v3223
    %3776 = vmatprep.subr.bf16.mxu0 %v3329
    %3777 = vmatpush2.bf16.msra.mxu0 %v3328
    %3778 = vmatprep.subr.bf16.mxu0 %v3322
    %3779 = vmatpush2.bf16.msra.mxu0 %v3321
    %3780 = vmatprep.subr.bf16.mxu0 %v3315
    %3781 = vmatpush2.bf16.msra.mxu0 %v3314
    %3782 = vmatprep.subr.bf16.mxu0 %v3308
    %3783 = vmatpush2.bf16.msra.mxu0 %v3307
    %3784 = vmatprep.subr.bf16.mxu0 %v3301
    %3785 = vmatpush2.bf16.msra.mxu0 %v3300
    %3786 = vmatprep.subr.bf16.mxu0 %v3294
    %3787 = vmatpush2.bf16.msra.mxu0 %v3293
    %3788 = vmatprep.subr.bf16.mxu0 %v3287
    %3789 = vmatpush2.bf16.msra.mxu0 %v3286
    %3790 = vmatprep.subr.bf16.mxu0 %v3280
    %3791 = vmatpush2.bf16.msra.mxu0 %v3279
    %3792 = vmatprep.mubr.bf16.mxu0 %v2109
    %3793 = vmatmul.mubr.bf16.gmra.mxu0 %v2108
    %v3794 = vpop.f32.mrf.mxu0
    %v3795 = vadd.f32 %v3754, %v3794
    %v3796 = vpop.f32.mrf.mxu0
    %v3797 = vadd.f32 %v3756, %v3796
    %v3798 = vpop.f32.mrf.mxu0
    %v3799 = vpop.f32.mrf.mxu0
    %3800 = vdwg.mxu0
    %3801 = vmatprep.subr.bf16.mxu0 0
    %3802 = vmatpush1.bf16.msra.mxu0 %v3162
    %3803 = vmatprep.subr.bf16.mxu0 0
    %3804 = vmatpush1.bf16.msra.mxu0 %v3155
    %3805 = vmatprep.subr.bf16.mxu0 0
    %3806 = vmatpush1.bf16.msra.mxu0 %v3148
    %3807 = vmatprep.subr.bf16.mxu0 0
    %3808 = vmatpush1.bf16.msra.mxu0 %v3141
    %3809 = vmatprep.subr.bf16.mxu0 0
    %3810 = vmatpush1.bf16.msra.mxu0 %v3134
    %3811 = vmatprep.subr.bf16.mxu0 0
    %3812 = vmatpush1.bf16.msra.mxu0 %v3127
    %3813 = vmatprep.subr.bf16.mxu0 0
    %3814 = vmatpush1.bf16.msra.mxu0 %v3120
    %3815 = vmatprep.subr.bf16.mxu0 0
    %3816 = vmatpush1.bf16.msra.mxu0 %v3113
    %3817 = vmatprep.subr.bf16.mxu0 0
    %3818 = vmatpush2.bf16.msra.mxu0 %v3218
    %3819 = vmatprep.subr.bf16.mxu0 0
    %3820 = vmatpush2.bf16.msra.mxu0 %v3211
    %3821 = vmatprep.subr.bf16.mxu0 0
    %3822 = vmatpush2.bf16.msra.mxu0 %v3204
    %3823 = vmatprep.subr.bf16.mxu0 0
    %3824 = vmatpush2.bf16.msra.mxu0 %v3197
    %3825 = vmatprep.subr.bf16.mxu0 0
    %3826 = vmatpush2.bf16.msra.mxu0 %v3190
    %3827 = vmatprep.subr.bf16.mxu0 0
    %3828 = vmatpush2.bf16.msra.mxu0 %v3183
    %3829 = vmatprep.subr.bf16.mxu0 0
    %3830 = vmatpush2.bf16.msra.mxu0 %v3176
    %3831 = vmatprep.subr.bf16.mxu0 0
    %3832 = vmatpush2.bf16.msra.mxu0 %v3169
    %3833 = vmatprep.mubr.bf16.mxu0 %v2107
    %3834 = vmatmul.mubr.bf16.gmra.mxu0 %v2106
    %v3835 = vpop.f32.mrf.mxu0
    %v3836 = vadd.f32 %v2395, %v3835
    %v3837 = vpop.f32.mrf.mxu0
    %v3838 = vpop.f32.mrf.mxu0
    %v3839 = vpop.f32.mrf.mxu0
    %3840 = vdwg.mxu0
    %3841 = vmatprep.subr.bf16.mxu0 0
    %3842 = vmatpush1.bf16.msra.mxu0 %v3274
    %3843 = vmatprep.subr.bf16.mxu0 0
    %3844 = vmatpush1.bf16.msra.mxu0 %v3267
    %3845 = vmatprep.subr.bf16.mxu0 0
    %3846 = vmatpush1.bf16.msra.mxu0 %v3260
    %3847 = vmatprep.subr.bf16.mxu0 0
    %3848 = vmatpush1.bf16.msra.mxu0 %v3253
    %3849 = vmatprep.subr.bf16.mxu0 0
    %3850 = vmatpush1.bf16.msra.mxu0 %v3246
    %3851 = vmatprep.subr.bf16.mxu0 0
    %3852 = vmatpush1.bf16.msra.mxu0 %v3239
    %3853 = vmatprep.subr.bf16.mxu0 0
    %3854 = vmatpush1.bf16.msra.mxu0 %v3232
    %3855 = vmatprep.subr.bf16.mxu0 0
    %3856 = vmatpush1.bf16.msra.mxu0 %v3225
    %3857 = vmatprep.subr.bf16.mxu0 0
    %3858 = vmatpush2.bf16.msra.mxu0 %v3330
    %3859 = vmatprep.subr.bf16.mxu0 0
    %3860 = vmatpush2.bf16.msra.mxu0 %v3323
    %3861 = vmatprep.subr.bf16.mxu0 0
    %3862 = vmatpush2.bf16.msra.mxu0 %v3316
    %3863 = vmatprep.subr.bf16.mxu0 0
    %3864 = vmatpush2.bf16.msra.mxu0 %v3309
    %3865 = vmatprep.subr.bf16.mxu0 0
    %3866 = vmatpush2.bf16.msra.mxu0 %v3302
    %3867 = vmatprep.subr.bf16.mxu0 0
    %3868 = vmatpush2.bf16.msra.mxu0 %v3295
    %3869 = vmatprep.subr.bf16.mxu0 0
    %3870 = vmatpush2.bf16.msra.mxu0 %v3288
    %3871 = vmatprep.subr.bf16.mxu0 0
    %3872 = vmatpush2.bf16.msra.mxu0 %v3281
    %3873 = vmatprep.mubr.bf16.mxu0 %v2109
    %3874 = vmatmul.mubr.bf16.gmra.mxu0 %v2108
    %v3875 = vpop.f32.mrf.mxu0
    %v3876 = vadd.f32 %v3836, %v3875
    %v3877 = vpop.f32.mrf.mxu0
    %v3878 = vpop.f32.mrf.mxu0
    %v3879 = vpop.f32.mrf.mxu0
    %3880 = vdwg.mxu0
    %v3881 = vmul.f32 %v3631, 0.5
    %v3882 = vmul.f32 %v3633, 0.5
    %v3883 = vmul.f32 %v3713, 0.5
    %v3884 = vmul.f32 %v3715, 0.5
    %v3885 = vmul.f32 %v3795, 0.5
    %v3886 = vmul.f32 %v3797, 0.5
    %v3887 = vmul.f32 %v3876, 0.5
    %v3888 = vtanh.pop %v3881
    %v3889 = vtanh.pop %v3882
    %v3890 = vtanh.pop %v3883
    %v3891 = vtanh.pop %v3884
    %v3892 = vtanh.pop %v3885
    %v3893 = vtanh.pop %v3886
    %v3894 = vtanh.pop %v3887
    %v3895 = vmul.f32 %v3888, 0.5
    %v3896 = vmul.f32 %v3889, 0.5
    %v3897 = vmul.f32 %v3890, 0.5
    %v3898 = vmul.f32 %v3891, 0.5
    %v3899 = vmul.f32 %v3892, 0.5
    %v3900 = vmul.f32 %v3893, 0.5
    %v3901 = vmul.f32 %v3894, 0.5
    %v3902 = vadd.f32 %v3895, 0.5
    %v3903 = vadd.f32 %v3896, 0.5
    %v3904 = vadd.f32 %v3897, 0.5
    %v3905 = vadd.f32 %v3898, 0.5
    %v3906 = vadd.f32 %v3899, 0.5
    %v3907 = vadd.f32 %v3900, 0.5
    %v3908 = vadd.f32 %v3901, 0.5
    %v3909 = vpack.c.bf16 %v3902, %v3902
    %v3910 = vpack.c.bf16 %v3903, %v3903
    %v3911 = vpack.c.bf16 %v3904, %v3904
    %v3912 = vpack.c.bf16 %v3905, %v3905
    %v3913 = vpack.c.bf16 %v3906, %v3906
    %v3914 = vpack.c.bf16 %v3907, %v3907
    %v3915 = vpack.c.bf16 %v3908, %v3908
    %v3923 = vunpack.c.l.b16 %v3909
    %v3924 = vunpack.c.l.b16 %v3910
    %v3925 = vunpack.c.l.b16 %v3911
    %v3926 = vunpack.c.l.b16 %v3912
    %v3927 = vunpack.c.l.b16 %v3913
    %v3928 = vunpack.c.l.b16 %v3914
    %v3929 = vunpack.c.l.b16 %v3915
    %v3930 = vpack.c.b16 %v3924, %v3923
    %v3931 = vpack.c.b16 %v3926, %v3925
    %v3932 = vpack.c.b16 %v3928, %v3927
    %v3933 = vpack.c.b16 %v3929, %v3929
    %3938 = vst [vmem:[#allocation2] sm:$0xff] %v3930
    %3939 = vst [vmem:[#allocation2 + $0x8] sm:$0xff] %v3931
    %3940 = vst [vmem:[#allocation2 + $0x10] sm:$0xff] %v3932
    %vm3941 = vcmask 125952
    %3942 = vst.msk [vmem:[#allocation2 + $0x18] sm:$0xf] %vm3941, %v3933
    %vm3943 = vcmask 523264
    %3944 = vst.msk [vmem:[#allocation4] sm:$0xff] %vm3943, %v1930
    // Predicated region
    $region42: #{tpu_custom_call.1} parent=1 // pred_check
      _
    $region43: #{tpu_custom_call.1} parent=1 // pred_check_branch
      %3946 = sbr.rel (0) target = $region45
    $region44: #{tpu_custom_call.1} parent=1 // pred_region
      %s3948 = ssub.s32 448, 448
      %3949 = vsyncadd [#allocation3], %s3948
      %s3951 = sshll.u32 [#allocation2], 4
      %s3952 = int_to_ptr.vmem [resolvable:$true] %s3951
      %3954 = dma.vmem_to_hbm [thread:$0]  %s3952, 448, %s10, [#allocation3]
    $region45: #{tpu_custom_call.1} parent=1 // pred_fallthru
      _
    // Predicated region
    $region46: #{tpu_custom_call.1} parent=1 // pred_check
      _
    $region47: #{tpu_custom_call.1} parent=1 // pred_check_branch
      %3956 = sbr.rel (0) target = $region49
    $region48: #{tpu_custom_call.1} parent=1 // pred_region
      %s3958 = ssub.s32 128, 128
      %3959 = vsyncadd [#allocation5], %s3958
      %s3961 = sshll.u32 [#allocation4], 4
      %s3962 = int_to_ptr.vmem [resolvable:$true] %s3961
      %3964 = dma.vmem_to_hbm [thread:$0]  %s3962, 128, %s11, [#allocation5]
    $region49: #{tpu_custom_call.1} parent=1 // pred_fallthru
      _
    // Predicated region
    $region50: #{tpu_custom_call.1} parent=1 // pred_check
      _
    $region51: #{tpu_custom_call.1} parent=1 // pred_check_branch
      %3966 = sbr.rel (0) target = $region53
    $region52: #{tpu_custom_call.1} parent=1 // pred_region
      %3967 = dma.done [#allocation3], 448
    $region53: #{tpu_custom_call.1} parent=1 // pred_fallthru
      _
    // Predicated region
    $region54: #{tpu_custom_call.1} parent=1 // pred_check
      _
    $region55: #{tpu_custom_call.1} parent=1 // pred_check_branch
      %3969 = sbr.rel (0) target = $region57
    $region56: #{tpu_custom_call.1} parent=1 // pred_region
      %3970 = dma.done [#allocation5], 128
    $region57: #{tpu_custom_call.1} parent=1 // pred_fallthru
      _
    %3971 = vsyncpa [#allocation3], 1
    %3972 = vsyncpa [#allocation5], 1

</llo_original>
